<compile_context>
chip_gen: v7x
topology: tpu7x:2x2x1
jax: 0.10.0
libtpu: 0.0.40
codegen_flags: <defaults>
</compile_context>

<pallas_src>
import math
from functools import partial

import jax
import jax.numpy as jnp
from jax import lax
from jax.experimental import pallas as pl
from jax.experimental.pallas import tpu as pltpu


def _gelu_tanh(x):
    # tanh-approximate GELU: one EUP tanh instead of the erf polynomial.
    c = 0.7978845608028654  # sqrt(2/pi)
    return 0.5 * x * (1.0 + jnp.tanh(c * (x + 0.044715 * x * x * x)))


# ---------------------------------------------------------------------------
# Fused kernel: entire BasicTransformerBlock for one batch element per grid step
# ---------------------------------------------------------------------------
def _block_kernel(x_ref, ctx_ref, vec_ref, bcol_ref,
                  wq1_ref, wk1_ref, wv1_ref, wo1_ref,
                  wq2_ref, wk2_ref, wv2_ref, wo2_ref,
                  wf1_ref, wf2_ref,
                  o_ref, *, heads, d_head, dim):
    f32 = jnp.float32
    x = x_ref[0].astype(f32)      # (dim, dim)  — query_dim == LayerNorm dim == dim
    ctx = ctx_ref[0].astype(f32)  # (context_dim, Lc)

    # Packed vector params (static slices of a VMEM-resident ref are free views).
    g1, be1 = vec_ref[0:1, 0:dim], vec_ref[1:2, 0:dim]
    g2, be2 = vec_ref[2:3, 0:dim], vec_ref[3:4, 0:dim]
    g3, be3 = vec_ref[4:5, 0:dim], vec_ref[5:6, 0:dim]
    bf2 = vec_ref[6:7, 0:dim]       # (1, dim)
    bf1 = vec_ref[7:8, :]           # (1, 4*dim)
    bo1 = bcol_ref[:, 0:1]          # (dim, 1) — column bias (output permute folded away)
    bo2 = bcol_ref[:, 1:2]

    def layernorm(z, g, b, eps=1e-5):
        m = jnp.mean(z, axis=-1, keepdims=True)
        zc = z - m
        v = jnp.mean(zc * zc, axis=-1, keepdims=True)
        return zc * lax.rsqrt(v + eps) * g + b

    # dimension_numbers that fold every permute/transpose into the MXU op itself:
    dn_in = (((0,), (0,)), ((), ()))   # contract dim0 x dim0 : x.permute(0,2,1) @ W
    dn_qk = (((1,), (1,)), ((), ()))   # contract last dims   : q @ k^T (no k.T materialized)
    dn_out = (((0,), (1,)), ((), ()))  # W_out^T @ O^T        : to_out + output permute fused

    def attention(y, cond, wq_ref, wk_ref, wv_ref, wo_ref, bo_col):
        # q[n,j] = sum_a y[a,n] * Wq[a,j]  (input permute folded); scale already in Wq.
        q = lax.dot_general(y, wq_ref[...], dn_in, preferred_element_type=f32)
        k = lax.dot_general(cond, wk_ref[...], dn_in, preferred_element_type=f32)
        v = lax.dot_general(cond, wv_ref[...], dn_in, preferred_element_type=f32)
        # TODO(synk): switch to lax.fori_loop(unroll=True) if head count grows (vreg live ranges).
        outs = []
        for h in range(heads):
            s = h * d_head
            sim = lax.dot_general(q[:, s:s + d_head], k[:, s:s + d_head], dn_qk,
                                  preferred_element_type=f32)       # (N_q, N_k)
            sim = sim - jnp.max(sim, axis=-1, keepdims=True)
            p = jnp.exp(sim)
            p = p / jnp.sum(p, axis=-1, keepdims=True)
            outs.append(jnp.dot(p, v[:, s:s + d_head], preferred_element_type=f32))
        o_all = jnp.concatenate(outs, axis=-1)                       # (N_q, inner)
        # Single K=inner output projection with the final permute folded in:
        # att[a,n] = sum_j Wo[j,a] * O[n,j]  (+ column bias)
        att = lax.dot_general(wo_ref[...], o_all, dn_out, preferred_element_type=f32)
        return att + bo_col

    # ---- x = attn1(norm1(x)) + x   (self-attention; condition = normed x) ----
    y = layernorm(x, g1, be1)
    x = attention(y, y, wq1_ref, wk1_ref, wv1_ref, wo1_ref, bo1) + x

    # ---- x = attn2(norm2(x), context) + x   (cross-attention) ----
    y = layernorm(x, g2, be2)
    x = attention(y, ctx, wq2_ref, wk2_ref, wv2_ref, wo2_ref, bo2) + x

    # ---- x = ff(norm3(x)) + x   (Linear -> GELU -> Dropout(no-op) -> Linear) ----
    y = layernorm(x, g3, be3)
    h = jnp.dot(y, wf1_ref[...], preferred_element_type=f32) + bf1
    h = _gelu_tanh(h)
    h = jnp.dot(h, wf2_ref[...], preferred_element_type=f32) + bf2
    x = h + x

    o_ref[0] = x.astype(o_ref.dtype)


_W_ORDER = ("w_q1", "w_k1", "w_v1", "w_o1",
            "w_q2", "w_k2", "w_v2", "w_o2",
            "w_f1", "w_f2")


def basic_transformer_block(params, x, context, *, n_heads, d_head):
    """BasicTransformerBlock.forward.

    x:       (B, dim, dim) — LayerNorm(dim) needs `dim` on the last axis while
             CrossAttention's permute(0,2,1) + to_q needs query_dim on the middle axis,
             so both non-batch axes must equal `dim`.
    context: (B, context_dim, Lc)
    """
    B, A, D = x.shape
    assert A == D, "module is only shape-consistent for x of shape (B, dim, dim)"
    _, Cc, Lc = context.shape

    vec, bcol = params["vec"], params["bcol"]
    weights = [params[k] for k in _W_ORDER]
    kernel = partial(_block_kernel, heads=n_heads, d_head=d_head, dim=D)

    in_specs = [
        pl.BlockSpec((1, A, D), lambda b: (b, 0, 0)),
        pl.BlockSpec((1, Cc, Lc), lambda b: (b, 0, 0)),
        pl.BlockSpec(vec.shape, lambda b: (0, 0)),
        pl.BlockSpec(bcol.shape, lambda b: (0, 0)),
    ]
    # Whole-array weight blocks with constant index_maps -> DMA'd once, VMEM-resident
    # across the (parallel) batch grid.
    in_specs += [pl.BlockSpec(w.shape, lambda b: (0, 0)) for w in weights]

    # TODO(synk): out last dim is `dim` (<128 at demo size) -> masked stores; at production
    # dims >=128 the output is naturally lane-dense.
    return pl.pallas_call(
        kernel,
        out_shape=jax.ShapeDtypeStruct((B, A, D), jnp.float32),
        grid=(B,),
        in_specs=in_specs,
        out_specs=pl.BlockSpec((1, A, D), lambda b: (b, 0, 0)),
        compiler_params=pltpu.CompilerParams(dimension_semantics=("parallel",)),
    )(x, context, vec, bcol, *weights)


# ---------------------------------------------------------------------------
# Deterministic synthetic parameters (matmul layout (in, out); f32)
# ---------------------------------------------------------------------------
def init_params(key, dim, n_heads, d_head, context_dim):
    inner = n_heads * d_head
    scale = d_head ** (-0.5)
    keys = iter(jax.random.split(key, 20))

    def w(shape, s=1.0):
        return s * jax.random.normal(next(keys), shape, jnp.float32) / math.sqrt(shape[0])

    def bvec(n, s=0.02):
        return s * jax.random.normal(next(keys), (n,), jnp.float32)

    p = {}
    p["w_q1"] = w((dim, inner), scale)          # attn1 to_q (bias=False), 1/sqrt(d_head) folded in
    p["w_k1"] = w((dim, inner))                 # attn1 to_k
    p["w_v1"] = w((dim, inner))                 # attn1 to_v
    p["w_o1"] = w((inner, dim))                 # attn1 to_out weight
    p["w_q2"] = w((dim, inner), scale)          # attn2 to_q, scale folded in
    p["w_k2"] = w((context_dim, inner))         # attn2 to_k
    p["w_v2"] = w((context_dim, inner))         # attn2 to_v
    p["w_o2"] = w((inner, dim))                 # attn2 to_out weight
    p["w_f1"] = w((dim, 4 * dim))               # FeedForward (mult=4) + GELU
    p["w_f2"] = w((4 * dim, dim))

    # Packed small vectors: rows 0..5 = LN1/2/3 gamma,beta ; row 6 = b_f2 ; row 7 = b_f1.
    vec = jnp.zeros((8, 4 * dim), jnp.float32)
    vec = vec.at[0, :dim].set(1.0)   # n1 gamma
    vec = vec.at[2, :dim].set(1.0)   # n2 gamma
    vec = vec.at[4, :dim].set(1.0)   # n3 gamma
    vec = vec.at[6, :dim].set(bvec(dim))        # b_f2
    vec = vec.at[7, :].set(bvec(4 * dim))       # b_f1
    p["vec"] = vec

    # to_out biases pre-shaped as columns (dim, 2): [:,0]=b_o1, [:,1]=b_o2
    # (output permute is folded into the projection, so the bias adds along sublanes).
    p["bcol"] = jnp.stack([bvec(dim), bvec(dim)], axis=1)
    return p


if __name__ == "__main__":
    dim, n_heads, d_head = 64, 4, 16        # inner_dim = 64
    context_dim, ctx_len = 32, 32
    B = 2

    key = jax.random.PRNGKey(0)
    kp, kx, kc = jax.random.split(key, 3)
    params = init_params(kp, dim, n_heads, d_head, context_dim)

    # x must be (B, dim, dim) for the module's LayerNorm + CrossAttention-permute combo
    # to be shape-consistent (see docstring of basic_transformer_block).
    x = jax.random.normal(kx, (B, dim, dim), jnp.float32)
    context = jax.random.normal(kc, (B, context_dim, ctx_len), jnp.float32)

    fwd = jax.jit(partial(basic_transformer_block, n_heads=n_heads, d_head=d_head))
    out = fwd(params, x, context)
    jax.block_until_ready(out)

    assert out.shape == (B, dim, dim)
    assert bool(jnp.all(jnp.isfinite(out)))
    print("KERNEL_OK")
</pallas_src>

<mosaic_0001>
module attributes {stable_mosaic.version = 11 : i64} {
  func.func @_block_kernel(%arg0: i32, %arg1: memref<1x64x64xf32, #tpu.memory_space<vmem>>, %arg2: memref<1x32x32xf32, #tpu.memory_space<vmem>>, %arg3: memref<8x256xf32, #tpu.memory_space<vmem>>, %arg4: memref<64x2xf32, #tpu.memory_space<vmem>>, %arg5: memref<64x64xf32, #tpu.memory_space<vmem>>, %arg6: memref<64x64xf32, #tpu.memory_space<vmem>>, %arg7: memref<64x64xf32, #tpu.memory_space<vmem>>, %arg8: memref<64x64xf32, #tpu.memory_space<vmem>>, %arg9: memref<64x64xf32, #tpu.memory_space<vmem>>, %arg10: memref<32x64xf32, #tpu.memory_space<vmem>>, %arg11: memref<32x64xf32, #tpu.memory_space<vmem>>, %arg12: memref<64x64xf32, #tpu.memory_space<vmem>>, %arg13: memref<64x256xf32, #tpu.memory_space<vmem>>, %arg14: memref<256x64xf32, #tpu.memory_space<vmem>>, %arg15: memref<1x64x64xf32, #tpu.memory_space<vmem>>) attributes {dimension_semantics = [#tpu.dimension_semantics<parallel>], iteration_bounds = array<i64: 2>, scalar_prefetch = 0 : i64, scratch_operands = 0 : i64, tpu.core_type = #tpu.core_type<tc>, window_params = [{transform_indices = @transform_0, window_bounds = array<i64: 1, 64, 64>}, {transform_indices = @transform_1, window_bounds = array<i64: 1, 32, 32>}, {pipeline_mode = #tpu.pipeline_mode<synchronous>, transform_indices = @transform_2, window_bounds = array<i64: 8, 256>}, {pipeline_mode = #tpu.pipeline_mode<synchronous>, transform_indices = @transform_3, window_bounds = array<i64: 64, 2>}, {pipeline_mode = #tpu.pipeline_mode<synchronous>, transform_indices = @transform_4, window_bounds = array<i64: 64, 64>}, {pipeline_mode = #tpu.pipeline_mode<synchronous>, transform_indices = @transform_5, window_bounds = array<i64: 64, 64>}, {pipeline_mode = #tpu.pipeline_mode<synchronous>, transform_indices = @transform_6, window_bounds = array<i64: 64, 64>}, {pipeline_mode = #tpu.pipeline_mode<synchronous>, transform_indices = @transform_7, window_bounds = array<i64: 64, 64>}, {pipeline_mode = #tpu.pipeline_mode<synchronous>, transform_indices = @transform_8, window_bounds = array<i64: 64, 64>}, {pipeline_mode = #tpu.pipeline_mode<synchronous>, transform_indices = @transform_9, window_bounds = array<i64: 32, 64>}, {pipeline_mode = #tpu.pipeline_mode<synchronous>, transform_indices = @transform_10, window_bounds = array<i64: 32, 64>}, {pipeline_mode = #tpu.pipeline_mode<synchronous>, transform_indices = @transform_11, window_bounds = array<i64: 64, 64>}, {pipeline_mode = #tpu.pipeline_mode<synchronous>, transform_indices = @transform_12, window_bounds = array<i64: 64, 256>}, {pipeline_mode = #tpu.pipeline_mode<synchronous>, transform_indices = @transform_13, window_bounds = array<i64: 256, 64>}, {transform_indices = @transform_14, window_bounds = array<i64: 1, 64, 64>}]} {
    %c0 = arith.constant 0 : index
    %c0_0 = arith.constant 0 : index
    %c0_1 = arith.constant 0 : index
    %0 = vector.load %arg1[%c0, %c0_0, %c0_1] : memref<1x64x64xf32, #tpu.memory_space<vmem>>, vector<1x64x64xf32>
    %1 = vector.shape_cast %0 : vector<1x64x64xf32> to vector<64x64xf32>
    %c0_2 = arith.constant 0 : index
    %c0_3 = arith.constant 0 : index
    %c0_4 = arith.constant 0 : index
    %2 = vector.load %arg2[%c0_2, %c0_3, %c0_4] : memref<1x32x32xf32, #tpu.memory_space<vmem>>, vector<1x32x32xf32>
    %3 = vector.shape_cast %2 : vector<1x32x32xf32> to vector<32x32xf32>
    %c0_5 = arith.constant 0 : index
    %c0_6 = arith.constant 0 : index
    %4 = vector.load %arg3[%c0_5, %c0_6] : memref<8x256xf32, #tpu.memory_space<vmem>>, vector<1x64xf32>
    %c1 = arith.constant 1 : index
    %c0_7 = arith.constant 0 : index
    %5 = vector.load %arg3[%c1, %c0_7] : memref<8x256xf32, #tpu.memory_space<vmem>>, vector<1x64xf32>
    %c2 = arith.constant 2 : index
    %c0_8 = arith.constant 0 : index
    %6 = vector.load %arg3[%c2, %c0_8] : memref<8x256xf32, #tpu.memory_space<vmem>>, vector<1x64xf32>
    %c3 = arith.constant 3 : index
    %c0_9 = arith.constant 0 : index
    %7 = vector.load %arg3[%c3, %c0_9] : memref<8x256xf32, #tpu.memory_space<vmem>>, vector<1x64xf32>
    %c4 = arith.constant 4 : index
    %c0_10 = arith.constant 0 : index
    %8 = vector.load %arg3[%c4, %c0_10] : memref<8x256xf32, #tpu.memory_space<vmem>>, vector<1x64xf32>
    %c5 = arith.constant 5 : index
    %c0_11 = arith.constant 0 : index
    %9 = vector.load %arg3[%c5, %c0_11] : memref<8x256xf32, #tpu.memory_space<vmem>>, vector<1x64xf32>
    %c6 = arith.constant 6 : index
    %c0_12 = arith.constant 0 : index
    %10 = vector.load %arg3[%c6, %c0_12] : memref<8x256xf32, #tpu.memory_space<vmem>>, vector<1x64xf32>
    %c7 = arith.constant 7 : index
    %c0_13 = arith.constant 0 : index
    %11 = vector.load %arg3[%c7, %c0_13] : memref<8x256xf32, #tpu.memory_space<vmem>>, vector<1x256xf32>
    %c0_14 = arith.constant 0 : index
    %c0_15 = arith.constant 0 : index
    %12 = vector.load %arg4[%c0_14, %c0_15] : memref<64x2xf32, #tpu.memory_space<vmem>>, vector<64x1xf32>
    %c0_16 = arith.constant 0 : index
    %c1_17 = arith.constant 1 : index
    %13 = vector.load %arg4[%c0_16, %c1_17] : memref<64x2xf32, #tpu.memory_space<vmem>>, vector<64x1xf32>
    %cst = arith.constant dense<0.000000e+00> : vector<64xf32>
    %14 = vector.multi_reduction <add>, %1, %cst [1] : vector<64x64xf32> to vector<64xf32>
    %15 = vector.shape_cast %14 : vector<64xf32> to vector<64x1xf32>
    %cst_18 = arith.constant 6.400000e+01 : f32
    %16 = vector.broadcast %cst_18 : f32 to vector<64x1xf32>
    %17 = arith.divf %15, %16 : vector<64x1xf32>
    %18 = vector.broadcast %17 : vector<64x1xf32> to vector<64x64xf32>
    %19 = arith.subf %1, %18 : vector<64x64xf32>
    %20 = arith.mulf %19, %19 : vector<64x64xf32>
    %cst_19 = arith.constant dense<0.000000e+00> : vector<64xf32>
    %21 = vector.multi_reduction <add>, %20, %cst_19 [1] : vector<64x64xf32> to vector<64xf32>
    %22 = vector.shape_cast %21 : vector<64xf32> to vector<64x1xf32>
    %cst_20 = arith.constant 6.400000e+01 : f32
    %23 = vector.broadcast %cst_20 : f32 to vector<64x1xf32>
    %24 = arith.divf %22, %23 : vector<64x1xf32>
    %cst_21 = arith.constant 9.99999974E-6 : f32
    %25 = vector.broadcast %cst_21 : f32 to vector<64x1xf32>
    %26 = arith.addf %24, %25 : vector<64x1xf32>
    %27 = math.rsqrt %26 : vector<64x1xf32>
    %28 = vector.broadcast %27 : vector<64x1xf32> to vector<64x64xf32>
    %29 = arith.mulf %19, %28 : vector<64x64xf32>
    %30 = vector.broadcast %4 : vector<1x64xf32> to vector<64x64xf32>
    %31 = arith.mulf %29, %30 : vector<64x64xf32>
    %32 = vector.broadcast %5 : vector<1x64xf32> to vector<64x64xf32>
    %33 = arith.addf %31, %32 : vector<64x64xf32>
    %c0_22 = arith.constant 0 : index
    %c0_23 = arith.constant 0 : index
    %34 = vector.load %arg5[%c0_22, %c0_23] : memref<64x64xf32, #tpu.memory_space<vmem>>, vector<64x64xf32>
    %cst_24 = arith.constant dense<0.000000e+00> : vector<64x64xf32>
    %35 = tpu.matmul %33, %34, %cst_24 {dimension_numbers = #tpu.dot_dimension_numbers<[0], [0], [1], [1], [0, 1, 1, 1], [], []>} : vector<64x64xf32>, vector<64x64xf32>, vector<64x64xf32> -> vector<64x64xf32>
    %c0_25 = arith.constant 0 : index
    %c0_26 = arith.constant 0 : index
    %36 = vector.load %arg6[%c0_25, %c0_26] : memref<64x64xf32, #tpu.memory_space<vmem>>, vector<64x64xf32>
    %cst_27 = arith.constant dense<0.000000e+00> : vector<64x64xf32>
    %37 = tpu.matmul %33, %36, %cst_27 {dimension_numbers = #tpu.dot_dimension_numbers<[0], [0], [1], [1], [0, 1, 1, 1], [], []>} : vector<64x64xf32>, vector<64x64xf32>, vector<64x64xf32> -> vector<64x64xf32>
    %c0_28 = arith.constant 0 : index
    %c0_29 = arith.constant 0 : index
    %38 = vector.load %arg7[%c0_28, %c0_29] : memref<64x64xf32, #tpu.memory_space<vmem>>, vector<64x64xf32>
    %cst_30 = arith.constant dense<0.000000e+00> : vector<64x64xf32>
    %39 = tpu.matmul %33, %38, %cst_30 {dimension_numbers = #tpu.dot_dimension_numbers<[0], [0], [1], [1], [0, 1, 1, 1], [], []>} : vector<64x64xf32>, vector<64x64xf32>, vector<64x64xf32> -> vector<64x64xf32>
    %40 = vector.extract_strided_slice %35 {offsets = [0, 0], sizes = [64, 16], strides = [1, 1]} : vector<64x64xf32> to vector<64x16xf32>
    %41 = vector.extract_strided_slice %37 {offsets = [0, 0], sizes = [64, 16], strides = [1, 1]} : vector<64x64xf32> to vector<64x16xf32>
    %cst_31 = arith.constant dense<0.000000e+00> : vector<64x64xf32>
    %42 = tpu.matmul %40, %41, %cst_31 {dimension_numbers = #tpu.dot_dimension_numbers<[1], [1], [0], [0], [0, 0, 1, 0], [], []>} : vector<64x16xf32>, vector<64x16xf32>, vector<64x64xf32> -> vector<64x64xf32>
    %cst_32 = arith.constant dense<0xFF800000> : vector<64xf32>
    %43 = vector.multi_reduction <maximumf>, %42, %cst_32 [1] : vector<64x64xf32> to vector<64xf32>
    %44 = vector.shape_cast %43 : vector<64xf32> to vector<64x1xf32>
    %45 = vector.broadcast %44 : vector<64x1xf32> to vector<64x64xf32>
    %46 = arith.subf %42, %45 : vector<64x64xf32>
    %47 = math.exp %46 : vector<64x64xf32>
    %cst_33 = arith.constant dense<0.000000e+00> : vector<64xf32>
    %48 = vector.multi_reduction <add>, %47, %cst_33 [1] : vector<64x64xf32> to vector<64xf32>
    %49 = vector.shape_cast %48 : vector<64xf32> to vector<64x1xf32>
    %50 = vector.broadcast %49 : vector<64x1xf32> to vector<64x64xf32>
    %51 = arith.divf %47, %50 : vector<64x64xf32>
    %52 = vector.extract_strided_slice %39 {offsets = [0, 0], sizes = [64, 16], strides = [1, 1]} : vector<64x64xf32> to vector<64x16xf32>
    %cst_34 = arith.constant dense<0.000000e+00> : vector<64x16xf32>
    %53 = tpu.matmul %51, %52, %cst_34 {dimension_numbers = #tpu.dot_dimension_numbers<[1], [0], [0], [1], [0, 0, 1, 1], [], []>} : vector<64x64xf32>, vector<64x16xf32>, vector<64x16xf32> -> vector<64x16xf32>
    %54 = vector.extract_strided_slice %35 {offsets = [0, 16], sizes = [64, 16], strides = [1, 1]} : vector<64x64xf32> to vector<64x16xf32>
    %55 = vector.extract_strided_slice %37 {offsets = [0, 16], sizes = [64, 16], strides = [1, 1]} : vector<64x64xf32> to vector<64x16xf32>
    %cst_35 = arith.constant dense<0.000000e+00> : vector<64x64xf32>
    %56 = tpu.matmul %54, %55, %cst_35 {dimension_numbers = #tpu.dot_dimension_numbers<[1], [1], [0], [0], [0, 0, 1, 0], [], []>} : vector<64x16xf32>, vector<64x16xf32>, vector<64x64xf32> -> vector<64x64xf32>
    %cst_36 = arith.constant dense<0xFF800000> : vector<64xf32>
    %57 = vector.multi_reduction <maximumf>, %56, %cst_36 [1] : vector<64x64xf32> to vector<64xf32>
    %58 = vector.shape_cast %57 : vector<64xf32> to vector<64x1xf32>
    %59 = vector.broadcast %58 : vector<64x1xf32> to vector<64x64xf32>
    %60 = arith.subf %56, %59 : vector<64x64xf32>
    %61 = math.exp %60 : vector<64x64xf32>
    %cst_37 = arith.constant dense<0.000000e+00> : vector<64xf32>
    %62 = vector.multi_reduction <add>, %61, %cst_37 [1] : vector<64x64xf32> to vector<64xf32>
    %63 = vector.shape_cast %62 : vector<64xf32> to vector<64x1xf32>
    %64 = vector.broadcast %63 : vector<64x1xf32> to vector<64x64xf32>
    %65 = arith.divf %61, %64 : vector<64x64xf32>
    %66 = vector.extract_strided_slice %39 {offsets = [0, 16], sizes = [64, 16], strides = [1, 1]} : vector<64x64xf32> to vector<64x16xf32>
    %cst_38 = arith.constant dense<0.000000e+00> : vector<64x16xf32>
    %67 = tpu.matmul %65, %66, %cst_38 {dimension_numbers = #tpu.dot_dimension_numbers<[1], [0], [0], [1], [0, 0, 1, 1], [], []>} : vector<64x64xf32>, vector<64x16xf32>, vector<64x16xf32> -> vector<64x16xf32>
    %68 = vector.extract_strided_slice %35 {offsets = [0, 32], sizes = [64, 16], strides = [1, 1]} : vector<64x64xf32> to vector<64x16xf32>
    %69 = vector.extract_strided_slice %37 {offsets = [0, 32], sizes = [64, 16], strides = [1, 1]} : vector<64x64xf32> to vector<64x16xf32>
    %cst_39 = arith.constant dense<0.000000e+00> : vector<64x64xf32>
    %70 = tpu.matmul %68, %69, %cst_39 {dimension_numbers = #tpu.dot_dimension_numbers<[1], [1], [0], [0], [0, 0, 1, 0], [], []>} : vector<64x16xf32>, vector<64x16xf32>, vector<64x64xf32> -> vector<64x64xf32>
    %cst_40 = arith.constant dense<0xFF800000> : vector<64xf32>
    %71 = vector.multi_reduction <maximumf>, %70, %cst_40 [1] : vector<64x64xf32> to vector<64xf32>
    %72 = vector.shape_cast %71 : vector<64xf32> to vector<64x1xf32>
    %73 = vector.broadcast %72 : vector<64x1xf32> to vector<64x64xf32>
    %74 = arith.subf %70, %73 : vector<64x64xf32>
    %75 = math.exp %74 : vector<64x64xf32>
    %cst_41 = arith.constant dense<0.000000e+00> : vector<64xf32>
    %76 = vector.multi_reduction <add>, %75, %cst_41 [1] : vector<64x64xf32> to vector<64xf32>
    %77 = vector.shape_cast %76 : vector<64xf32> to vector<64x1xf32>
    %78 = vector.broadcast %77 : vector<64x1xf32> to vector<64x64xf32>
    %79 = arith.divf %75, %78 : vector<64x64xf32>
    %80 = vector.extract_strided_slice %39 {offsets = [0, 32], sizes = [64, 16], strides = [1, 1]} : vector<64x64xf32> to vector<64x16xf32>
    %cst_42 = arith.constant dense<0.000000e+00> : vector<64x16xf32>
    %81 = tpu.matmul %79, %80, %cst_42 {dimension_numbers = #tpu.dot_dimension_numbers<[1], [0], [0], [1], [0, 0, 1, 1], [], []>} : vector<64x64xf32>, vector<64x16xf32>, vector<64x16xf32> -> vector<64x16xf32>
    %82 = vector.extract_strided_slice %35 {offsets = [0, 48], sizes = [64, 16], strides = [1, 1]} : vector<64x64xf32> to vector<64x16xf32>
    %83 = vector.extract_strided_slice %37 {offsets = [0, 48], sizes = [64, 16], strides = [1, 1]} : vector<64x64xf32> to vector<64x16xf32>
    %cst_43 = arith.constant dense<0.000000e+00> : vector<64x64xf32>
    %84 = tpu.matmul %82, %83, %cst_43 {dimension_numbers = #tpu.dot_dimension_numbers<[1], [1], [0], [0], [0, 0, 1, 0], [], []>} : vector<64x16xf32>, vector<64x16xf32>, vector<64x64xf32> -> vector<64x64xf32>
    %cst_44 = arith.constant dense<0xFF800000> : vector<64xf32>
    %85 = vector.multi_reduction <maximumf>, %84, %cst_44 [1] : vector<64x64xf32> to vector<64xf32>
    %86 = vector.shape_cast %85 : vector<64xf32> to vector<64x1xf32>
    %87 = vector.broadcast %86 : vector<64x1xf32> to vector<64x64xf32>
    %88 = arith.subf %84, %87 : vector<64x64xf32>
    %89 = math.exp %88 : vector<64x64xf32>
    %cst_45 = arith.constant dense<0.000000e+00> : vector<64xf32>
    %90 = vector.multi_reduction <add>, %89, %cst_45 [1] : vector<64x64xf32> to vector<64xf32>
    %91 = vector.shape_cast %90 : vector<64xf32> to vector<64x1xf32>
    %92 = vector.broadcast %91 : vector<64x1xf32> to vector<64x64xf32>
    %93 = arith.divf %89, %92 : vector<64x64xf32>
    %94 = vector.extract_strided_slice %39 {offsets = [0, 48], sizes = [64, 16], strides = [1, 1]} : vector<64x64xf32> to vector<64x16xf32>
    %cst_46 = arith.constant dense<0.000000e+00> : vector<64x16xf32>
    %95 = tpu.matmul %93, %94, %cst_46 {dimension_numbers = #tpu.dot_dimension_numbers<[1], [0], [0], [1], [0, 0, 1, 1], [], []>} : vector<64x64xf32>, vector<64x16xf32>, vector<64x16xf32> -> vector<64x16xf32>
    %96 = tpu.concatenate %53, %67, %81, %95 in 1 : vector<64x16xf32>, vector<64x16xf32>, vector<64x16xf32>, vector<64x16xf32> -> vector<64x64xf32>
    %c0_47 = arith.constant 0 : index
    %c0_48 = arith.constant 0 : index
    %97 = vector.load %arg8[%c0_47, %c0_48] : memref<64x64xf32, #tpu.memory_space<vmem>>, vector<64x64xf32>
    %cst_49 = arith.constant dense<0.000000e+00> : vector<64x64xf32>
    %98 = tpu.matmul %97, %96, %cst_49 {dimension_numbers = #tpu.dot_dimension_numbers<[0], [1], [1], [0], [0, 1, 1, 0], [], []>} : vector<64x64xf32>, vector<64x64xf32>, vector<64x64xf32> -> vector<64x64xf32>
    %99 = vector.broadcast %12 : vector<64x1xf32> to vector<64x64xf32>
    %100 = arith.addf %98, %99 : vector<64x64xf32>
    %101 = arith.addf %100, %1 : vector<64x64xf32>
    %cst_50 = arith.constant dense<0.000000e+00> : vector<64xf32>
    %102 = vector.multi_reduction <add>, %101, %cst_50 [1] : vector<64x64xf32> to vector<64xf32>
    %103 = vector.shape_cast %102 : vector<64xf32> to vector<64x1xf32>
    %cst_51 = arith.constant 6.400000e+01 : f32
    %104 = vector.broadcast %cst_51 : f32 to vector<64x1xf32>
    %105 = arith.divf %103, %104 : vector<64x1xf32>
    %106 = vector.broadcast %105 : vector<64x1xf32> to vector<64x64xf32>
    %107 = arith.subf %101, %106 : vector<64x64xf32>
    %108 = arith.mulf %107, %107 : vector<64x64xf32>
    %cst_52 = arith.constant dense<0.000000e+00> : vector<64xf32>
    %109 = vector.multi_reduction <add>, %108, %cst_52 [1] : vector<64x64xf32> to vector<64xf32>
    %110 = vector.shape_cast %109 : vector<64xf32> to vector<64x1xf32>
    %cst_53 = arith.constant 6.400000e+01 : f32
    %111 = vector.broadcast %cst_53 : f32 to vector<64x1xf32>
    %112 = arith.divf %110, %111 : vector<64x1xf32>
    %cst_54 = arith.constant 9.99999974E-6 : f32
    %113 = vector.broadcast %cst_54 : f32 to vector<64x1xf32>
    %114 = arith.addf %112, %113 : vector<64x1xf32>
    %115 = math.rsqrt %114 : vector<64x1xf32>
    %116 = vector.broadcast %115 : vector<64x1xf32> to vector<64x64xf32>
    %117 = arith.mulf %107, %116 : vector<64x64xf32>
    %118 = vector.broadcast %6 : vector<1x64xf32> to vector<64x64xf32>
    %119 = arith.mulf %117, %118 : vector<64x64xf32>
    %120 = vector.broadcast %7 : vector<1x64xf32> to vector<64x64xf32>
    %121 = arith.addf %119, %120 : vector<64x64xf32>
    %c0_55 = arith.constant 0 : index
    %c0_56 = arith.constant 0 : index
    %122 = vector.load %arg9[%c0_55, %c0_56] : memref<64x64xf32, #tpu.memory_space<vmem>>, vector<64x64xf32>
    %cst_57 = arith.constant dense<0.000000e+00> : vector<64x64xf32>
    %123 = tpu.matmul %121, %122, %cst_57 {dimension_numbers = #tpu.dot_dimension_numbers<[0], [0], [1], [1], [0, 1, 1, 1], [], []>} : vector<64x64xf32>, vector<64x64xf32>, vector<64x64xf32> -> vector<64x64xf32>
    %c0_58 = arith.constant 0 : index
    %c0_59 = arith.constant 0 : index
    %124 = vector.load %arg10[%c0_58, %c0_59] : memref<32x64xf32, #tpu.memory_space<vmem>>, vector<32x64xf32>
    %cst_60 = arith.constant dense<0.000000e+00> : vector<32x64xf32>
    %125 = tpu.matmul %3, %124, %cst_60 {dimension_numbers = #tpu.dot_dimension_numbers<[0], [0], [1], [1], [0, 1, 1, 1], [], []>} : vector<32x32xf32>, vector<32x64xf32>, vector<32x64xf32> -> vector<32x64xf32>
    %c0_61 = arith.constant 0 : index
    %c0_62 = arith.constant 0 : index
    %126 = vector.load %arg11[%c0_61, %c0_62] : memref<32x64xf32, #tpu.memory_space<vmem>>, vector<32x64xf32>
    %cst_63 = arith.constant dense<0.000000e+00> : vector<32x64xf32>
    %127 = tpu.matmul %3, %126, %cst_63 {dimension_numbers = #tpu.dot_dimension_numbers<[0], [0], [1], [1], [0, 1, 1, 1], [], []>} : vector<32x32xf32>, vector<32x64xf32>, vector<32x64xf32> -> vector<32x64xf32>
    %128 = vector.extract_strided_slice %123 {offsets = [0, 0], sizes = [64, 16], strides = [1, 1]} : vector<64x64xf32> to vector<64x16xf32>
    %129 = vector.extract_strided_slice %125 {offsets = [0, 0], sizes = [32, 16], strides = [1, 1]} : vector<32x64xf32> to vector<32x16xf32>
    %cst_64 = arith.constant dense<0.000000e+00> : vector<64x32xf32>
    %130 = tpu.matmul %128, %129, %cst_64 {dimension_numbers = #tpu.dot_dimension_numbers<[1], [1], [0], [0], [0, 0, 1, 0], [], []>} : vector<64x16xf32>, vector<32x16xf32>, vector<64x32xf32> -> vector<64x32xf32>
    %cst_65 = arith.constant dense<0xFF800000> : vector<64xf32>
    %131 = vector.multi_reduction <maximumf>, %130, %cst_65 [1] : vector<64x32xf32> to vector<64xf32>
    %132 = vector.shape_cast %131 : vector<64xf32> to vector<64x1xf32>
    %133 = vector.broadcast %132 : vector<64x1xf32> to vector<64x32xf32>
    %134 = arith.subf %130, %133 : vector<64x32xf32>
    %135 = math.exp %134 : vector<64x32xf32>
    %cst_66 = arith.constant dense<0.000000e+00> : vector<64xf32>
    %136 = vector.multi_reduction <add>, %135, %cst_66 [1] : vector<64x32xf32> to vector<64xf32>
    %137 = vector.shape_cast %136 : vector<64xf32> to vector<64x1xf32>
    %138 = vector.broadcast %137 : vector<64x1xf32> to vector<64x32xf32>
    %139 = arith.divf %135, %138 : vector<64x32xf32>
    %140 = vector.extract_strided_slice %127 {offsets = [0, 0], sizes = [32, 16], strides = [1, 1]} : vector<32x64xf32> to vector<32x16xf32>
    %cst_67 = arith.constant dense<0.000000e+00> : vector<64x16xf32>
    %141 = tpu.matmul %139, %140, %cst_67 {dimension_numbers = #tpu.dot_dimension_numbers<[1], [0], [0], [1], [0, 0, 1, 1], [], []>} : vector<64x32xf32>, vector<32x16xf32>, vector<64x16xf32> -> vector<64x16xf32>
    %142 = vector.extract_strided_slice %123 {offsets = [0, 16], sizes = [64, 16], strides = [1, 1]} : vector<64x64xf32> to vector<64x16xf32>
    %143 = vector.extract_strided_slice %125 {offsets = [0, 16], sizes = [32, 16], strides = [1, 1]} : vector<32x64xf32> to vector<32x16xf32>
    %cst_68 = arith.constant dense<0.000000e+00> : vector<64x32xf32>
    %144 = tpu.matmul %142, %143, %cst_68 {dimension_numbers = #tpu.dot_dimension_numbers<[1], [1], [0], [0], [0, 0, 1, 0], [], []>} : vector<64x16xf32>, vector<32x16xf32>, vector<64x32xf32> -> vector<64x32xf32>
    %cst_69 = arith.constant dense<0xFF800000> : vector<64xf32>
    %145 = vector.multi_reduction <maximumf>, %144, %cst_69 [1] : vector<64x32xf32> to vector<64xf32>
    %146 = vector.shape_cast %145 : vector<64xf32> to vector<64x1xf32>
    %147 = vector.broadcast %146 : vector<64x1xf32> to vector<64x32xf32>
    %148 = arith.subf %144, %147 : vector<64x32xf32>
    %149 = math.exp %148 : vector<64x32xf32>
    %cst_70 = arith.constant dense<0.000000e+00> : vector<64xf32>
    %150 = vector.multi_reduction <add>, %149, %cst_70 [1] : vector<64x32xf32> to vector<64xf32>
    %151 = vector.shape_cast %150 : vector<64xf32> to vector<64x1xf32>
    %152 = vector.broadcast %151 : vector<64x1xf32> to vector<64x32xf32>
    %153 = arith.divf %149, %152 : vector<64x32xf32>
    %154 = vector.extract_strided_slice %127 {offsets = [0, 16], sizes = [32, 16], strides = [1, 1]} : vector<32x64xf32> to vector<32x16xf32>
    %cst_71 = arith.constant dense<0.000000e+00> : vector<64x16xf32>
    %155 = tpu.matmul %153, %154, %cst_71 {dimension_numbers = #tpu.dot_dimension_numbers<[1], [0], [0], [1], [0, 0, 1, 1], [], []>} : vector<64x32xf32>, vector<32x16xf32>, vector<64x16xf32> -> vector<64x16xf32>
    %156 = vector.extract_strided_slice %123 {offsets = [0, 32], sizes = [64, 16], strides = [1, 1]} : vector<64x64xf32> to vector<64x16xf32>
    %157 = vector.extract_strided_slice %125 {offsets = [0, 32], sizes = [32, 16], strides = [1, 1]} : vector<32x64xf32> to vector<32x16xf32>
    %cst_72 = arith.constant dense<0.000000e+00> : vector<64x32xf32>
    %158 = tpu.matmul %156, %157, %cst_72 {dimension_numbers = #tpu.dot_dimension_numbers<[1], [1], [0], [0], [0, 0, 1, 0], [], []>} : vector<64x16xf32>, vector<32x16xf32>, vector<64x32xf32> -> vector<64x32xf32>
    %cst_73 = arith.constant dense<0xFF800000> : vector<64xf32>
    %159 = vector.multi_reduction <maximumf>, %158, %cst_73 [1] : vector<64x32xf32> to vector<64xf32>
    %160 = vector.shape_cast %159 : vector<64xf32> to vector<64x1xf32>
    %161 = vector.broadcast %160 : vector<64x1xf32> to vector<64x32xf32>
    %162 = arith.subf %158, %161 : vector<64x32xf32>
    %163 = math.exp %162 : vector<64x32xf32>
    %cst_74 = arith.constant dense<0.000000e+00> : vector<64xf32>
    %164 = vector.multi_reduction <add>, %163, %cst_74 [1] : vector<64x32xf32> to vector<64xf32>
    %165 = vector.shape_cast %164 : vector<64xf32> to vector<64x1xf32>
    %166 = vector.broadcast %165 : vector<64x1xf32> to vector<64x32xf32>
    %167 = arith.divf %163, %166 : vector<64x32xf32>
    %168 = vector.extract_strided_slice %127 {offsets = [0, 32], sizes = [32, 16], strides = [1, 1]} : vector<32x64xf32> to vector<32x16xf32>
    %cst_75 = arith.constant dense<0.000000e+00> : vector<64x16xf32>
    %169 = tpu.matmul %167, %168, %cst_75 {dimension_numbers = #tpu.dot_dimension_numbers<[1], [0], [0], [1], [0, 0, 1, 1], [], []>} : vector<64x32xf32>, vector<32x16xf32>, vector<64x16xf32> -> vector<64x16xf32>
    %170 = vector.extract_strided_slice %123 {offsets = [0, 48], sizes = [64, 16], strides = [1, 1]} : vector<64x64xf32> to vector<64x16xf32>
    %171 = vector.extract_strided_slice %125 {offsets = [0, 48], sizes = [32, 16], strides = [1, 1]} : vector<32x64xf32> to vector<32x16xf32>
    %cst_76 = arith.constant dense<0.000000e+00> : vector<64x32xf32>
    %172 = tpu.matmul %170, %171, %cst_76 {dimension_numbers = #tpu.dot_dimension_numbers<[1], [1], [0], [0], [0, 0, 1, 0], [], []>} : vector<64x16xf32>, vector<32x16xf32>, vector<64x32xf32> -> vector<64x32xf32>
    %cst_77 = arith.constant dense<0xFF800000> : vector<64xf32>
    %173 = vector.multi_reduction <maximumf>, %172, %cst_77 [1] : vector<64x32xf32> to vector<64xf32>
    %174 = vector.shape_cast %173 : vector<64xf32> to vector<64x1xf32>
    %175 = vector.broadcast %174 : vector<64x1xf32> to vector<64x32xf32>
    %176 = arith.subf %172, %175 : vector<64x32xf32>
    %177 = math.exp %176 : vector<64x32xf32>
    %cst_78 = arith.constant dense<0.000000e+00> : vector<64xf32>
    %178 = vector.multi_reduction <add>, %177, %cst_78 [1] : vector<64x32xf32> to vector<64xf32>
    %179 = vector.shape_cast %178 : vector<64xf32> to vector<64x1xf32>
    %180 = vector.broadcast %179 : vector<64x1xf32> to vector<64x32xf32>
    %181 = arith.divf %177, %180 : vector<64x32xf32>
    %182 = vector.extract_strided_slice %127 {offsets = [0, 48], sizes = [32, 16], strides = [1, 1]} : vector<32x64xf32> to vector<32x16xf32>
    %cst_79 = arith.constant dense<0.000000e+00> : vector<64x16xf32>
    %183 = tpu.matmul %181, %182, %cst_79 {dimension_numbers = #tpu.dot_dimension_numbers<[1], [0], [0], [1], [0, 0, 1, 1], [], []>} : vector<64x32xf32>, vector<32x16xf32>, vector<64x16xf32> -> vector<64x16xf32>
    %184 = tpu.concatenate %141, %155, %169, %183 in 1 : vector<64x16xf32>, vector<64x16xf32>, vector<64x16xf32>, vector<64x16xf32> -> vector<64x64xf32>
    %c0_80 = arith.constant 0 : index
    %c0_81 = arith.constant 0 : index
    %185 = vector.load %arg12[%c0_80, %c0_81] : memref<64x64xf32, #tpu.memory_space<vmem>>, vector<64x64xf32>
    %cst_82 = arith.constant dense<0.000000e+00> : vector<64x64xf32>
    %186 = tpu.matmul %185, %184, %cst_82 {dimension_numbers = #tpu.dot_dimension_numbers<[0], [1], [1], [0], [0, 1, 1, 0], [], []>} : vector<64x64xf32>, vector<64x64xf32>, vector<64x64xf32> -> vector<64x64xf32>
    %187 = vector.broadcast %13 : vector<64x1xf32> to vector<64x64xf32>
    %188 = arith.addf %186, %187 : vector<64x64xf32>
    %189 = arith.addf %188, %101 : vector<64x64xf32>
    %cst_83 = arith.constant dense<0.000000e+00> : vector<64xf32>
    %190 = vector.multi_reduction <add>, %189, %cst_83 [1] : vector<64x64xf32> to vector<64xf32>
    %191 = vector.shape_cast %190 : vector<64xf32> to vector<64x1xf32>
    %cst_84 = arith.constant 6.400000e+01 : f32
    %192 = vector.broadcast %cst_84 : f32 to vector<64x1xf32>
    %193 = arith.divf %191, %192 : vector<64x1xf32>
    %194 = vector.broadcast %193 : vector<64x1xf32> to vector<64x64xf32>
    %195 = arith.subf %189, %194 : vector<64x64xf32>
    %196 = arith.mulf %195, %195 : vector<64x64xf32>
    %cst_85 = arith.constant dense<0.000000e+00> : vector<64xf32>
    %197 = vector.multi_reduction <add>, %196, %cst_85 [1] : vector<64x64xf32> to vector<64xf32>
    %198 = vector.shape_cast %197 : vector<64xf32> to vector<64x1xf32>
    %cst_86 = arith.constant 6.400000e+01 : f32
    %199 = vector.broadcast %cst_86 : f32 to vector<64x1xf32>
    %200 = arith.divf %198, %199 : vector<64x1xf32>
    %cst_87 = arith.constant 9.99999974E-6 : f32
    %201 = vector.broadcast %cst_87 : f32 to vector<64x1xf32>
    %202 = arith.addf %200, %201 : vector<64x1xf32>
    %203 = math.rsqrt %202 : vector<64x1xf32>
    %204 = vector.broadcast %203 : vector<64x1xf32> to vector<64x64xf32>
    %205 = arith.mulf %195, %204 : vector<64x64xf32>
    %206 = vector.broadcast %8 : vector<1x64xf32> to vector<64x64xf32>
    %207 = arith.mulf %205, %206 : vector<64x64xf32>
    %208 = vector.broadcast %9 : vector<1x64xf32> to vector<64x64xf32>
    %209 = arith.addf %207, %208 : vector<64x64xf32>
    %c0_88 = arith.constant 0 : index
    %c0_89 = arith.constant 0 : index
    %210 = vector.load %arg13[%c0_88, %c0_89] : memref<64x256xf32, #tpu.memory_space<vmem>>, vector<64x256xf32>
    %cst_90 = arith.constant dense<0.000000e+00> : vector<64x256xf32>
    %211 = tpu.matmul %209, %210, %cst_90 {dimension_numbers = #tpu.dot_dimension_numbers<[1], [0], [0], [1], [0, 0, 1, 1], [], []>} : vector<64x64xf32>, vector<64x256xf32>, vector<64x256xf32> -> vector<64x256xf32>
    %212 = vector.broadcast %11 : vector<1x256xf32> to vector<64x256xf32>
    %213 = arith.addf %211, %212 : vector<64x256xf32>
    %cst_91 = arith.constant 5.000000e-01 : f32
    %214 = vector.broadcast %cst_91 : f32 to vector<64x256xf32>
    %215 = arith.mulf %214, %213 : vector<64x256xf32>
    %cst_92 = arith.constant 4.471500e-02 : f32
    %216 = vector.broadcast %cst_92 : f32 to vector<64x256xf32>
    %217 = arith.mulf %216, %213 : vector<64x256xf32>
    %218 = arith.mulf %217, %213 : vector<64x256xf32>
    %219 = arith.mulf %218, %213 : vector<64x256xf32>
    %220 = arith.addf %213, %219 : vector<64x256xf32>
    %cst_93 = arith.constant 0.797884583 : f32
    %221 = vector.broadcast %cst_93 : f32 to vector<64x256xf32>
    %222 = arith.mulf %221, %220 : vector<64x256xf32>
    %223 = math.tanh %222 : vector<64x256xf32>
    %cst_94 = arith.constant 1.000000e+00 : f32
    %224 = vector.broadcast %cst_94 : f32 to vector<64x256xf32>
    %225 = arith.addf %224, %223 : vector<64x256xf32>
    %226 = arith.mulf %215, %225 : vector<64x256xf32>
    %c0_95 = arith.constant 0 : index
    %c0_96 = arith.constant 0 : index
    %227 = vector.load %arg14[%c0_95, %c0_96] : memref<256x64xf32, #tpu.memory_space<vmem>>, vector<256x64xf32>
    %cst_97 = arith.constant dense<0.000000e+00> : vector<64x64xf32>
    %228 = tpu.matmul %226, %227, %cst_97 {dimension_numbers = #tpu.dot_dimension_numbers<[1], [0], [0], [1], [0, 0, 1, 1], [], []>} : vector<64x256xf32>, vector<256x64xf32>, vector<64x64xf32> -> vector<64x64xf32>
    %229 = vector.broadcast %10 : vector<1x64xf32> to vector<64x64xf32>
    %230 = arith.addf %228, %229 : vector<64x64xf32>
    %231 = arith.addf %230, %189 : vector<64x64xf32>
    %c0_98 = arith.constant 0 : index
    %c0_99 = arith.constant 0 : index
    %c0_100 = arith.constant 0 : index
    %232 = vector.load %arg15[%c0_98, %c0_99, %c0_100] : memref<1x64x64xf32, #tpu.memory_space<vmem>>, vector<1x64x64xf32>
    %233 = vector.shape_cast %232 : vector<1x64x64xf32> to vector<64x64xf32>
    %234 = vector.shape_cast %231 : vector<64x64xf32> to vector<1x64x64xf32>
    tpu.vector_store %arg15[%c0_98, %c0_99, %c0_100], %234 {strides = array<i32>} : memref<1x64x64xf32, #tpu.memory_space<vmem>>, vector<1x64x64xf32>,
    return
  }
  func.func @transform_0(%arg0: i32) -> (i32, i32, i32) {
    %c0_i32 = arith.constant 0 : i32
    %c0_i32_0 = arith.constant 0 : i32
    %c0_i32_1 = arith.constant 0 : i32
    return %arg0, %c0_i32, %c0_i32_0 : i32, i32, i32
  }
  func.func @transform_1(%arg0: i32) -> (i32, i32, i32) {
    %c0_i32 = arith.constant 0 : i32
    %c0_i32_0 = arith.constant 0 : i32
    %c0_i32_1 = arith.constant 0 : i32
    return %arg0, %c0_i32, %c0_i32_0 : i32, i32, i32
  }
  func.func @transform_2(%arg0: i32) -> (i32, i32) {
    %c0_i32 = arith.constant 0 : i32
    %c0_i32_0 = arith.constant 0 : i32
    %c0_i32_1 = arith.constant 0 : i32
    return %c0_i32, %c0_i32_0 : i32, i32
  }
  func.func @transform_3(%arg0: i32) -> (i32, i32) {
    %c0_i32 = arith.constant 0 : i32
    %c0_i32_0 = arith.constant 0 : i32
    %c0_i32_1 = arith.constant 0 : i32
    return %c0_i32, %c0_i32_0 : i32, i32
  }
  func.func @transform_4(%arg0: i32) -> (i32, i32) {
    %c0_i32 = arith.constant 0 : i32
    %c0_i32_0 = arith.constant 0 : i32
    %c0_i32_1 = arith.constant 0 : i32
    return %c0_i32, %c0_i32_0 : i32, i32
  }
  func.func @transform_5(%arg0: i32) -> (i32, i32) {
    %c0_i32 = arith.constant 0 : i32
    %c0_i32_0 = arith.constant 0 : i32
    %c0_i32_1 = arith.constant 0 : i32
    return %c0_i32, %c0_i32_0 : i32, i32
  }
  func.func @transform_6(%arg0: i32) -> (i32, i32) {
    %c0_i32 = arith.constant 0 : i32
    %c0_i32_0 = arith.constant 0 : i32
    %c0_i32_1 = arith.constant 0 : i32
    return %c0_i32, %c0_i32_0 : i32, i32
  }
  func.func @transform_7(%arg0: i32) -> (i32, i32) {
    %c0_i32 = arith.constant 0 : i32
    %c0_i32_0 = arith.constant 0 : i32
    %c0_i32_1 = arith.constant 0 : i32
    return %c0_i32, %c0_i32_0 : i32, i32
  }
  func.func @transform_8(%arg0: i32) -> (i32, i32) {
    %c0_i32 = arith.constant 0 : i32
    %c0_i32_0 = arith.constant 0 : i32
    %c0_i32_1 = arith.constant 0 : i32
    return %c0_i32, %c0_i32_0 : i32, i32
  }
  func.func @transform_9(%arg0: i32) -> (i32, i32) {
    %c0_i32 = arith.constant 0 : i32
    %c0_i32_0 = arith.constant 0 : i32
    %c0_i32_1 = arith.constant 0 : i32
    return %c0_i32, %c0_i32_0 : i32, i32
  }
  func.func @transform_10(%arg0: i32) -> (i32, i32) {
    %c0_i32 = arith.constant 0 : i32
    %c0_i32_0 = arith.constant 0 : i32
    %c0_i32_1 = arith.constant 0 : i32
    return %c0_i32, %c0_i32_0 : i32, i32
  }
  func.func @transform_11(%arg0: i32) -> (i32, i32) {
    %c0_i32 = arith.constant 0 : i32
    %c0_i32_0 = arith.constant 0 : i32
    %c0_i32_1 = arith.constant 0 : i32
    return %c0_i32, %c0_i32_0 : i32, i32
  }
  func.func @transform_12(%arg0: i32) -> (i32, i32) {
    %c0_i32 = arith.constant 0 : i32
    %c0_i32_0 = arith.constant 0 : i32
    %c0_i32_1 = arith.constant 0 : i32
    return %c0_i32, %c0_i32_0 : i32, i32
  }
  func.func @transform_13(%arg0: i32) -> (i32, i32) {
    %c0_i32 = arith.constant 0 : i32
    %c0_i32_0 = arith.constant 0 : i32
    %c0_i32_1 = arith.constant 0 : i32
    return %c0_i32, %c0_i32_0 : i32, i32
  }
  func.func @transform_14(%arg0: i32) -> (i32, i32, i32) {
    %c0_i32 = arith.constant 0 : i32
    %c0_i32_0 = arith.constant 0 : i32
    %c0_i32_1 = arith.constant 0 : i32
    return %arg0, %c0_i32, %c0_i32_0 : i32, i32, i32
  }
}

</mosaic_0001>

<llo_original>
// kernel: basic_transformer_block.1
$region0: #{basic_transformer_block.1}
  #allocation0 [shape = 'u32[]', space=smem, size = 0x4, offset = 0x4, fixed_abs, tag = 'smem constant byte address 0x4 - core index']
  #allocation1 [shape = 'u32[144,128]{1,0:T(1,128)}', space=vmem, size = 0x12000, scoped, tag = 'internal scratch']
  %s0 = inlined_call_operand.vmem [shape: f32[2,64,64], index: 0, kind: input, shape index: {}]
  %s1 = inlined_call_operand.vmem [shape: f32[2,32,32], index: 1, kind: input, shape index: {}]
  %s2 = inlined_call_operand.hbm [shape: f32[8,256], index: 2, kind: input, shape index: {}]
  %s3 = inlined_call_operand.vmem [shape: f32[64,2], index: 3, kind: input, shape index: {}]
  %s4 = inlined_call_operand.vmem [shape: f32[64,64], index: 4, kind: input, shape index: {}]
  %s5 = inlined_call_operand.vmem [shape: f32[64,64], index: 5, kind: input, shape index: {}]
  %s6 = inlined_call_operand.hbm [shape: f32[64,64], index: 6, kind: input, shape index: {}]
  %s7 = inlined_call_operand.hbm [shape: f32[64,64], index: 7, kind: input, shape index: {}]
  %s8 = inlined_call_operand.hbm [shape: f32[64,64], index: 8, kind: input, shape index: {}]
  %s9 = inlined_call_operand.hbm [shape: f32[32,64], index: 9, kind: input, shape index: {}]
  %s10 = inlined_call_operand.vmem [shape: f32[32,64], index: 10, kind: input, shape index: {}]
  %s11 = inlined_call_operand.hbm [shape: f32[64,64], index: 11, kind: input, shape index: {}]
  %s12 = inlined_call_operand.vmem [shape: f32[64,256], index: 12, kind: input, shape index: {}]
  %s13 = inlined_call_operand.vmem [shape: f32[256,64], index: 13, kind: input, shape index: {}]
  %s14 = inlined_call_operand.hbm [shape: f32[2,64,64], index: 14, kind: output, shape index: {}]
  %s15 = sld [smem:[#allocation0]]
  $region113: #{basic_transformer_block.1} parent=0
    _
  %s17 = ssub.s32 1, %s15
  %s18 = scalar_select 0, %s17, %s15
  $region1: #{basic_transformer_block.1} parent=0
    #allocation2 [shape = 'u8[8192]{0}', space=vmem, size = 0x2000, scoped, tag = 'input window, operand 2, single buffered']
    #allocation3 [shape = 's32[2]{0}', space=sflag, size = 0x8, scoped, tag = 'scoped memory for basic_transformer_block.1']
    #allocation4 [shape = 's32[2]{0}', space=sflag, size = 0x8, scoped, tag = 'scoped memory for basic_transformer_block.1']
    #allocation5 [shape = 'u8[32768]{0}', space=vmem, size = 0x8000, scoped, tag = 'input window, operand 6, single buffered']
    #allocation6 [shape = 's32[1]{0}', space=sflag, size = 0x4, scoped, tag = 'scoped memory for basic_transformer_block.1']
    #allocation7 [shape = 'u8[32768]{0}', space=vmem, size = 0x8000, scoped, tag = 'input window, operand 7, single buffered']
    #allocation8 [shape = 'u8[32768]{0}', space=vmem, size = 0x8000, scoped, tag = 'input window, operand 8, single buffered']
    #allocation9 [shape = 's32[1]{0}', space=sflag, size = 0x4, scoped, tag = 'scoped memory for basic_transformer_block.1']
    #allocation10 [shape = 'u8[16384]{0}', space=vmem, size = 0x4000, scoped, tag = 'input window, operand 9, single buffered']
    #allocation11 [shape = 'u8[32768]{0}', space=vmem, size = 0x8000, scoped, tag = 'input window, operand 11, single buffered']
    #allocation12 [shape = 's32[1]{0}', space=sflag, size = 0x4, scoped, tag = 'scoped memory for basic_transformer_block.1']
    #allocation13 [shape = 'u8[65536]{0}', space=vmem, size = 0x10000, scoped, tag = 'output window, operand 0']
    %19 = vsyncpa [#allocation3], 0
    %20 = vsyncpa [#allocation6], 0
    %21 = vsyncpa [#allocation9], 0
    %22 = vsyncpa [#allocation12], 0
    %23 = vsyncpa [#allocation4], 0
    %s24 = scalar_lea.sflag [#allocation4], 1
    %25 = vsyncpa %s24, 0
    loop: start=0, step=1, limit=4
    $region2: #{basic_transformer_block.1} parent=1 // loop_pre_header
      _
    $region3: #{basic_transformer_block.1} parent=1 // loop_header
      %s27 = sphi 0, %s31
      %p28 = scmp.ge.s32.totalorder %s27, 4
      %s37 = sphi 0, %s39
      %s40 = sphi 0, %s37
      %s41 = sphi 0, %s40
      %s57 = sphi 0, %s41
      %s63 = sphi 0, %s65
      %s66 = sphi 0, %s63
      %s67 = sphi 0, %s66
      %s83 = sphi 0, %s67
      %s87 = sphi 0, %s87
      %s89 = sphi 0, %s87
      %s90 = sphi 0, %s89
      %s104 = sphi 0, %s90
      %s108 = sphi 0, %s108
      %s110 = sphi 0, %s108
      %s111 = sphi 0, %s110
      %s125 = sphi 0, %s111
      %s129 = sphi 0, %s129
      %s131 = sphi 0, %s129
      %s132 = sphi 0, %s131
      %s146 = sphi 0, %s132
      %s150 = sphi 0, %s150
      %s152 = sphi 0, %s150
      %s153 = sphi 0, %s152
      %s167 = sphi 0, %s153
      %s171 = sphi 0, %s171
      %s173 = sphi 0, %s171
      %s174 = sphi 0, %s173
      %s188 = sphi 0, %s174
      %s192 = sphi 0, %s192
      %s194 = sphi 0, %s192
      %s195 = sphi 0, %s194
      %s209 = sphi 0, %s195
      %s213 = sphi 0, %s213
      %s215 = sphi 0, %s213
      %s216 = sphi 0, %s215
      %s230 = sphi 0, %s216
      %s234 = sphi 0, %s234
      %s236 = sphi 0, %s234
      %s237 = sphi 0, %s236
      %s251 = sphi 0, %s237
      %s255 = sphi 0, %s255
      %s257 = sphi 0, %s255
      %s258 = sphi 0, %s257
      %s272 = sphi 0, %s258
      %s276 = sphi 0, %s276
      %s278 = sphi 0, %s276
      %s279 = sphi 0, %s278
      %s293 = sphi 0, %s279
      %s297 = sphi 0, %s297
      %s299 = sphi 0, %s297
      %s300 = sphi 0, %s299
      %s314 = sphi 0, %s300
      %s318 = sphi 0, %s318
      %s320 = sphi 0, %s318
      %s321 = sphi 0, %s320
      %s335 = sphi 0, %s321
      %s341 = sphi 0, %s343
      %s344 = sphi 0, %s341
      %s345 = sphi 0, %s344
      %s361 = sphi 0, %s345
    $region4: #{basic_transformer_block.1} parent=1 // loop_header_branch
      %30 = sbr.rel (%p28) target = $region8
    $region5: #{basic_transformer_block.1} parent=1 // loop_body
      %s32 = ssub.s32 %s27, 1
      %s33 = ssub.s32 %s27, 2
      %s34 = sadd.s32 %s27, 1
      %s35 = ssub.s32 %s27, %s34
      %p36 = scmp.eq.s32.totalorder %s35, 0
      %s38 = sadd.s32 %s37, 1
      %s39 = scalar_select %p36, %s37, %s38
      %p42 = pneg %p36
      %p43 = scmp.eq.s32.totalorder %s27, 1
      %p44 = por %p42, %p43
      %p45 = scmp.ne.s32.totalorder %s37, %s40
      %p46 = scmp.eq.s32.totalorder %s27, 0
      %p47 = por %p45, %p46
      %p48 = scmp.ne.s32.totalorder %s37, %s40
      %p49 = scmp.eq.s32.totalorder %s32, 1
      %p50 = por %p48, %p49
      %p51 = scmp.ne.s32.totalorder %s40, %s41
      %p52 = scmp.eq.s32.totalorder %s32, 0
      %p53 = por %p51, %p52
      %p54 = scmp.ne.s32.totalorder %s40, %s41
      %p55 = scmp.eq.s32.totalorder %s33, 1
      %p56 = por %p54, %p55
      %p58 = scmp.ne.s32.totalorder %s41, %s57
      %p59 = scmp.eq.s32.totalorder %s33, 0
      %p60 = por %p58, %p59
      %s61 = ssub.s32 %s27, %s34
      %p62 = scmp.eq.s32.totalorder %s61, 0
      %s64 = sadd.s32 %s63, 1
      %s65 = scalar_select %p62, %s63, %s64
      %p68 = pneg %p62
      %p69 = scmp.eq.s32.totalorder %s27, 1
      %p70 = por %p68, %p69
      %p71 = scmp.ne.s32.totalorder %s63, %s66
      %p72 = scmp.eq.s32.totalorder %s27, 0
      %p73 = por %p71, %p72
      %p74 = scmp.ne.s32.totalorder %s63, %s66
      %p75 = scmp.eq.s32.totalorder %s32, 1
      %p76 = por %p74, %p75
      %p77 = scmp.ne.s32.totalorder %s66, %s67
      %p78 = scmp.eq.s32.totalorder %s32, 0
      %p79 = por %p77, %p78
      %p80 = scmp.ne.s32.totalorder %s66, %s67
      %p81 = scmp.eq.s32.totalorder %s33, 1
      %p82 = por %p80, %p81
      %p84 = scmp.ne.s32.totalorder %s67, %s83
      %p85 = scmp.eq.s32.totalorder %s33, 0
      %p86 = por %p84, %p85
      %s88 = sadd.s32 %s87, 1
      %p91 = scmp.eq.s32.totalorder %s27, 1
      %p92 = scmp.ne.s32.totalorder %s87, %s89
      %p93 = scmp.eq.s32.totalorder %s27, 0
      %p94 = por %p92, %p93
      %p95 = scmp.ne.s32.totalorder %s87, %s89
      %p96 = scmp.eq.s32.totalorder %s32, 1
      %p97 = por %p95, %p96
      %p98 = scmp.ne.s32.totalorder %s89, %s90
      %p99 = scmp.eq.s32.totalorder %s32, 0
      %p100 = por %p98, %p99
      %p101 = scmp.ne.s32.totalorder %s89, %s90
      %p102 = scmp.eq.s32.totalorder %s33, 1
      %p103 = por %p101, %p102
      %p105 = scmp.ne.s32.totalorder %s90, %s104
      %p106 = scmp.eq.s32.totalorder %s33, 0
      %p107 = por %p105, %p106
      %s109 = sadd.s32 %s108, 1
      %p112 = scmp.eq.s32.totalorder %s27, 1
      %p113 = scmp.ne.s32.totalorder %s108, %s110
      %p114 = scmp.eq.s32.totalorder %s27, 0
      %p115 = por %p113, %p114
      %p116 = scmp.ne.s32.totalorder %s108, %s110
      %p117 = scmp.eq.s32.totalorder %s32, 1
      %p118 = por %p116, %p117
      %p119 = scmp.ne.s32.totalorder %s110, %s111
      %p120 = scmp.eq.s32.totalorder %s32, 0
      %p121 = por %p119, %p120
      %p122 = scmp.ne.s32.totalorder %s110, %s111
      %p123 = scmp.eq.s32.totalorder %s33, 1
      %p124 = por %p122, %p123
      %p126 = scmp.ne.s32.totalorder %s111, %s125
      %p127 = scmp.eq.s32.totalorder %s33, 0
      %p128 = por %p126, %p127
      %s130 = sadd.s32 %s129, 1
      %p133 = scmp.eq.s32.totalorder %s27, 1
      %p134 = scmp.ne.s32.totalorder %s129, %s131
      %p135 = scmp.eq.s32.totalorder %s27, 0
      %p136 = por %p134, %p135
      %p137 = scmp.ne.s32.totalorder %s129, %s131
      %p138 = scmp.eq.s32.totalorder %s32, 1
      %p139 = por %p137, %p138
      %p140 = scmp.ne.s32.totalorder %s131, %s132
      %p141 = scmp.eq.s32.totalorder %s32, 0
      %p142 = por %p140, %p141
      %p143 = scmp.ne.s32.totalorder %s131, %s132
      %p144 = scmp.eq.s32.totalorder %s33, 1
      %p145 = por %p143, %p144
      %p147 = scmp.ne.s32.totalorder %s132, %s146
      %p148 = scmp.eq.s32.totalorder %s33, 0
      %p149 = por %p147, %p148
      %s151 = sadd.s32 %s150, 1
      %p154 = scmp.eq.s32.totalorder %s27, 1
      %p155 = scmp.ne.s32.totalorder %s150, %s152
      %p156 = scmp.eq.s32.totalorder %s27, 0
      %p157 = por %p155, %p156
      %p158 = scmp.ne.s32.totalorder %s150, %s152
      %p159 = scmp.eq.s32.totalorder %s32, 1
      %p160 = por %p158, %p159
      %p161 = scmp.ne.s32.totalorder %s152, %s153
      %p162 = scmp.eq.s32.totalorder %s32, 0
      %p163 = por %p161, %p162
      %p164 = scmp.ne.s32.totalorder %s152, %s153
      %p165 = scmp.eq.s32.totalorder %s33, 1
      %p166 = por %p164, %p165
      %p168 = scmp.ne.s32.totalorder %s153, %s167
      %p169 = scmp.eq.s32.totalorder %s33, 0
      %p170 = por %p168, %p169
      %s172 = sadd.s32 %s171, 1
      %p175 = scmp.eq.s32.totalorder %s27, 1
      %p176 = scmp.ne.s32.totalorder %s171, %s173
      %p177 = scmp.eq.s32.totalorder %s27, 0
      %p178 = por %p176, %p177
      %p179 = scmp.ne.s32.totalorder %s171, %s173
      %p180 = scmp.eq.s32.totalorder %s32, 1
      %p181 = por %p179, %p180
      %p182 = scmp.ne.s32.totalorder %s173, %s174
      %p183 = scmp.eq.s32.totalorder %s32, 0
      %p184 = por %p182, %p183
      %p185 = scmp.ne.s32.totalorder %s173, %s174
      %p186 = scmp.eq.s32.totalorder %s33, 1
      %p187 = por %p185, %p186
      %p189 = scmp.ne.s32.totalorder %s174, %s188
      %p190 = scmp.eq.s32.totalorder %s33, 0
      %p191 = por %p189, %p190
      %s193 = sadd.s32 %s192, 1
      %p196 = scmp.eq.s32.totalorder %s27, 1
      %p197 = scmp.ne.s32.totalorder %s192, %s194
      %p198 = scmp.eq.s32.totalorder %s27, 0
      %p199 = por %p197, %p198
      %p200 = scmp.ne.s32.totalorder %s192, %s194
      %p201 = scmp.eq.s32.totalorder %s32, 1
      %p202 = por %p200, %p201
      %p203 = scmp.ne.s32.totalorder %s194, %s195
      %p204 = scmp.eq.s32.totalorder %s32, 0
      %p205 = por %p203, %p204
      %p206 = scmp.ne.s32.totalorder %s194, %s195
      %p207 = scmp.eq.s32.totalorder %s33, 1
      %p208 = por %p206, %p207
      %p210 = scmp.ne.s32.totalorder %s195, %s209
      %p211 = scmp.eq.s32.totalorder %s33, 0
      %p212 = por %p210, %p211
      %s214 = sadd.s32 %s213, 1
      %p217 = scmp.eq.s32.totalorder %s27, 1
      %p218 = scmp.ne.s32.totalorder %s213, %s215
      %p219 = scmp.eq.s32.totalorder %s27, 0
      %p220 = por %p218, %p219
      %p221 = scmp.ne.s32.totalorder %s213, %s215
      %p222 = scmp.eq.s32.totalorder %s32, 1
      %p223 = por %p221, %p222
      %p224 = scmp.ne.s32.totalorder %s215, %s216
      %p225 = scmp.eq.s32.totalorder %s32, 0
      %p226 = por %p224, %p225
      %p227 = scmp.ne.s32.totalorder %s215, %s216
      %p228 = scmp.eq.s32.totalorder %s33, 1
      %p229 = por %p227, %p228
      %p231 = scmp.ne.s32.totalorder %s216, %s230
      %p232 = scmp.eq.s32.totalorder %s33, 0
      %p233 = por %p231, %p232
      %s235 = sadd.s32 %s234, 1
      %p238 = scmp.eq.s32.totalorder %s27, 1
      %p239 = scmp.ne.s32.totalorder %s234, %s236
      %p240 = scmp.eq.s32.totalorder %s27, 0
      %p241 = por %p239, %p240
      %p242 = scmp.ne.s32.totalorder %s234, %s236
      %p243 = scmp.eq.s32.totalorder %s32, 1
      %p244 = por %p242, %p243
      %p245 = scmp.ne.s32.totalorder %s236, %s237
      %p246 = scmp.eq.s32.totalorder %s32, 0
      %p247 = por %p245, %p246
      %p248 = scmp.ne.s32.totalorder %s236, %s237
      %p249 = scmp.eq.s32.totalorder %s33, 1
      %p250 = por %p248, %p249
      %p252 = scmp.ne.s32.totalorder %s237, %s251
      %p253 = scmp.eq.s32.totalorder %s33, 0
      %p254 = por %p252, %p253
      %s256 = sadd.s32 %s255, 1
      %p259 = scmp.eq.s32.totalorder %s27, 1
      %p260 = scmp.ne.s32.totalorder %s255, %s257
      %p261 = scmp.eq.s32.totalorder %s27, 0
      %p262 = por %p260, %p261
      %p263 = scmp.ne.s32.totalorder %s255, %s257
      %p264 = scmp.eq.s32.totalorder %s32, 1
      %p265 = por %p263, %p264
      %p266 = scmp.ne.s32.totalorder %s257, %s258
      %p267 = scmp.eq.s32.totalorder %s32, 0
      %p268 = por %p266, %p267
      %p269 = scmp.ne.s32.totalorder %s257, %s258
      %p270 = scmp.eq.s32.totalorder %s33, 1
      %p271 = por %p269, %p270
      %p273 = scmp.ne.s32.totalorder %s258, %s272
      %p274 = scmp.eq.s32.totalorder %s33, 0
      %p275 = por %p273, %p274
      %s277 = sadd.s32 %s276, 1
      %p280 = scmp.eq.s32.totalorder %s27, 1
      %p281 = scmp.ne.s32.totalorder %s276, %s278
      %p282 = scmp.eq.s32.totalorder %s27, 0
      %p283 = por %p281, %p282
      %p284 = scmp.ne.s32.totalorder %s276, %s278
      %p285 = scmp.eq.s32.totalorder %s32, 1
      %p286 = por %p284, %p285
      %p287 = scmp.ne.s32.totalorder %s278, %s279
      %p288 = scmp.eq.s32.totalorder %s32, 0
      %p289 = por %p287, %p288
      %p290 = scmp.ne.s32.totalorder %s278, %s279
      %p291 = scmp.eq.s32.totalorder %s33, 1
      %p292 = por %p290, %p291
      %p294 = scmp.ne.s32.totalorder %s279, %s293
      %p295 = scmp.eq.s32.totalorder %s33, 0
      %p296 = por %p294, %p295
      %s298 = sadd.s32 %s297, 1
      %p301 = scmp.eq.s32.totalorder %s27, 1
      %p302 = scmp.ne.s32.totalorder %s297, %s299
      %p303 = scmp.eq.s32.totalorder %s27, 0
      %p304 = por %p302, %p303
      %p305 = scmp.ne.s32.totalorder %s297, %s299
      %p306 = scmp.eq.s32.totalorder %s32, 1
      %p307 = por %p305, %p306
      %p308 = scmp.ne.s32.totalorder %s299, %s300
      %p309 = scmp.eq.s32.totalorder %s32, 0
      %p310 = por %p308, %p309
      %p311 = scmp.ne.s32.totalorder %s299, %s300
      %p312 = scmp.eq.s32.totalorder %s33, 1
      %p313 = por %p311, %p312
      %p315 = scmp.ne.s32.totalorder %s300, %s314
      %p316 = scmp.eq.s32.totalorder %s33, 0
      %p317 = por %p315, %p316
      %s319 = sadd.s32 %s318, 1
      %p322 = scmp.eq.s32.totalorder %s27, 1
      %p323 = scmp.ne.s32.totalorder %s318, %s320
      %p324 = scmp.eq.s32.totalorder %s27, 0
      %p325 = por %p323, %p324
      %p326 = scmp.ne.s32.totalorder %s318, %s320
      %p327 = scmp.eq.s32.totalorder %s32, 1
      %p328 = por %p326, %p327
      %p329 = scmp.ne.s32.totalorder %s320, %s321
      %p330 = scmp.eq.s32.totalorder %s32, 0
      %p331 = por %p329, %p330
      %p332 = scmp.ne.s32.totalorder %s320, %s321
      %p333 = scmp.eq.s32.totalorder %s33, 1
      %p334 = por %p332, %p333
      %p336 = scmp.ne.s32.totalorder %s321, %s335
      %p337 = scmp.eq.s32.totalorder %s33, 0
      %p338 = por %p336, %p337
      %s339 = ssub.s32 %s27, %s34
      %p340 = scmp.eq.s32.totalorder %s339, 0
      %s342 = sadd.s32 %s341, 1
      %s343 = scalar_select %p340, %s341, %s342
      %p346 = pneg %p340
      %p347 = scmp.eq.s32.totalorder %s27, 1
      %p348 = por %p346, %p347
      %p349 = scmp.ne.s32.totalorder %s341, %s344
      %p350 = scmp.eq.s32.totalorder %s27, 0
      %p351 = por %p349, %p350
      %p352 = scmp.ne.s32.totalorder %s341, %s344
      %p353 = scmp.eq.s32.totalorder %s32, 1
      %p354 = por %p352, %p353
      %p355 = scmp.ne.s32.totalorder %s344, %s345
      %p356 = scmp.eq.s32.totalorder %s32, 0
      %p357 = por %p355, %p356
      %p358 = scmp.ne.s32.totalorder %s344, %s345
      %p359 = scmp.eq.s32.totalorder %s33, 1
      %p360 = por %p358, %p359
      %p362 = scmp.ne.s32.totalorder %s345, %s361
      %p363 = scmp.eq.s32.totalorder %s33, 0
      %p364 = por %p362, %p363
      %p365 = scmp.le.s32.totalorder 1, %s27
      %p366 = scmp.lt.s32.totalorder %s27, 3
      %p367 = pnand %p365, %p366
      %p368 = pneg %p367
      // Predicated region
      $region9: #{basic_transformer_block.1} parent=5 // pred_check
        _
      $region10: #{basic_transformer_block.1} parent=5 // pred_check_branch
        %370 = sbr.rel (%p367) target = $region12
      $region11: #{basic_transformer_block.1} parent=5 // pred_region
        %s371 = ssub.s32 %s27, 1
        // Predicated region
        $region13: #{basic_transformer_block.1} parent=11 // pred_check
          %p372 = pneg %p100
        $region14: #{basic_transformer_block.1} parent=11 // pred_check_branch
          %374 = sbr.rel (%p372) target = $region16
        $region15: #{basic_transformer_block.1} parent=11 // pred_region
          %s376 = ssub.s32 256, 256
          %377 = vsyncadd [#allocation3], %s376
          %s379 = sshll.u32 [#allocation2], 4
          %s380 = int_to_ptr.vmem [resolvable:$true] %s379
          %382 = dma.hbm_to_vmem [thread:$0]  %s2, 256, %s380, [#allocation3]
        $region16: #{basic_transformer_block.1} parent=11 // pred_fallthru
          _
        // Predicated region
        $region17: #{basic_transformer_block.1} parent=11 // pred_check
          %p383 = pneg %p121
        $region18: #{basic_transformer_block.1} parent=11 // pred_check_branch
          %385 = sbr.rel (%p383) target = $region20
        $region19: #{basic_transformer_block.1} parent=11 // pred_region
          _
        $region20: #{basic_transformer_block.1} parent=11 // pred_fallthru
          _
        // Predicated region
        $region21: #{basic_transformer_block.1} parent=11 // pred_check
          %p386 = pneg %p142
        $region22: #{basic_transformer_block.1} parent=11 // pred_check_branch
          %388 = sbr.rel (%p386) target = $region24
        $region23: #{basic_transformer_block.1} parent=11 // pred_region
          _
        $region24: #{basic_transformer_block.1} parent=11 // pred_fallthru
          _
        // Predicated region
        $region25: #{basic_transformer_block.1} parent=11 // pred_check
          %p389 = pneg %p163
        $region26: #{basic_transformer_block.1} parent=11 // pred_check_branch
          %391 = sbr.rel (%p389) target = $region28
        $region27: #{basic_transformer_block.1} parent=11 // pred_region
          _
        $region28: #{basic_transformer_block.1} parent=11 // pred_fallthru
          _
        // Predicated region
        $region29: #{basic_transformer_block.1} parent=11 // pred_check
          %p392 = pneg %p184
        $region30: #{basic_transformer_block.1} parent=11 // pred_check_branch
          %394 = sbr.rel (%p392) target = $region32
        $region31: #{basic_transformer_block.1} parent=11 // pred_region
          %s396 = ssub.s32 1024, 1024
          %397 = vsyncadd [#allocation6], %s396
          %s398 = sshll.u32 [#allocation5], 4
          %s399 = int_to_ptr.vmem [resolvable:$true] %s398
          %404 = dma.hbm_to_vmem [thread:$0]  %s6, 1024, %s399, [#allocation6], 128, 128, 8
        $region32: #{basic_transformer_block.1} parent=11 // pred_fallthru
          _
        // Predicated region
        $region33: #{basic_transformer_block.1} parent=11 // pred_check
          %p405 = pneg %p205
        $region34: #{basic_transformer_block.1} parent=11 // pred_check_branch
          %407 = sbr.rel (%p405) target = $region36
        $region35: #{basic_transformer_block.1} parent=11 // pred_region
          %s409 = ssub.s32 1024, 1024
          %410 = vsyncadd [#allocation6], %s409
          %s411 = sshll.u32 [#allocation7], 4
          %s412 = int_to_ptr.vmem [resolvable:$true] %s411
          %417 = dma.hbm_to_vmem [thread:$0]  %s7, 1024, %s412, [#allocation6], 128, 128, 8
        $region36: #{basic_transformer_block.1} parent=11 // pred_fallthru
          _
        // Predicated region
        $region37: #{basic_transformer_block.1} parent=11 // pred_check
          %p418 = pneg %p226
        $region38: #{basic_transformer_block.1} parent=11 // pred_check_branch
          %420 = sbr.rel (%p418) target = $region40
        $region39: #{basic_transformer_block.1} parent=11 // pred_region
          %s422 = ssub.s32 1024, 1024
          %423 = vsyncadd [#allocation9], %s422
          %s424 = sshll.u32 [#allocation8], 4
          %s425 = int_to_ptr.vmem [resolvable:$true] %s424
          %430 = dma.hbm_to_vmem [thread:$0]  %s8, 1024, %s425, [#allocation9], 128, 128, 8
        $region40: #{basic_transformer_block.1} parent=11 // pred_fallthru
          _
        // Predicated region
        $region41: #{basic_transformer_block.1} parent=11 // pred_check
          %p431 = pneg %p247
        $region42: #{basic_transformer_block.1} parent=11 // pred_check_branch
          %433 = sbr.rel (%p431) target = $region44
        $region43: #{basic_transformer_block.1} parent=11 // pred_region
          %s435 = ssub.s32 512, 512
          %436 = vsyncadd [#allocation9], %s435
          %s437 = sshll.u32 [#allocation10], 4
          %s438 = int_to_ptr.vmem [resolvable:$true] %s437
          %443 = dma.hbm_to_vmem [thread:$0]  %s9, 512, %s438, [#allocation9], 128, 128, 8
        $region44: #{basic_transformer_block.1} parent=11 // pred_fallthru
          _
        // Predicated region
        $region45: #{basic_transformer_block.1} parent=11 // pred_check
          %p444 = pneg %p268
        $region46: #{basic_transformer_block.1} parent=11 // pred_check_branch
          %446 = sbr.rel (%p444) target = $region48
        $region47: #{basic_transformer_block.1} parent=11 // pred_region
          _
        $region48: #{basic_transformer_block.1} parent=11 // pred_fallthru
          _
        // Predicated region
        $region49: #{basic_transformer_block.1} parent=11 // pred_check
          %p447 = pneg %p289
        $region50: #{basic_transformer_block.1} parent=11 // pred_check_branch
          %449 = sbr.rel (%p447) target = $region52
        $region51: #{basic_transformer_block.1} parent=11 // pred_region
          %s451 = ssub.s32 1024, 1024
          %452 = vsyncadd [#allocation12], %s451
          %s453 = sshll.u32 [#allocation11], 4
          %s454 = int_to_ptr.vmem [resolvable:$true] %s453
          %459 = dma.hbm_to_vmem [thread:$0]  %s11, 1024, %s454, [#allocation12], 128, 128, 8
        $region52: #{basic_transformer_block.1} parent=11 // pred_fallthru
          _
        // Predicated region
        $region53: #{basic_transformer_block.1} parent=11 // pred_check
          %p460 = pneg %p310
        $region54: #{basic_transformer_block.1} parent=11 // pred_check_branch
          %462 = sbr.rel (%p460) target = $region56
        $region55: #{basic_transformer_block.1} parent=11 // pred_region
          _
        $region56: #{basic_transformer_block.1} parent=11 // pred_fallthru
          _
        // Predicated region
        $region57: #{basic_transformer_block.1} parent=11 // pred_check
          %p463 = pneg %p331
        $region58: #{basic_transformer_block.1} parent=11 // pred_check_branch
          %465 = sbr.rel (%p463) target = $region60
        $region59: #{basic_transformer_block.1} parent=11 // pred_region
          _
        $region60: #{basic_transformer_block.1} parent=11 // pred_fallthru
          _
      $region12: #{basic_transformer_block.1} parent=5 // pred_fallthru
        _
      %p466 = scmp.lt.s32.totalorder %s27, 2
      // Predicated region
      $region61: #{basic_transformer_block.1} parent=5 // pred_check
        %p467 = pneg %p466
      $region62: #{basic_transformer_block.1} parent=5 // pred_check_branch
        %469 = sbr.rel (%p467) target = $region64
      $region63: #{basic_transformer_block.1} parent=5 // pred_region
        // Predicated region
        $region65: #{basic_transformer_block.1} parent=63 // pred_check
          %p470 = pneg %p47
        $region66: #{basic_transformer_block.1} parent=63 // pred_check_branch
          %472 = sbr.rel (%p470) target = $region68
        $region67: #{basic_transformer_block.1} parent=63 // pred_region
          %p473 = scmp.lt.s32.totalorder %s27, 1
          %s474 = scalar_select %p473, %s27, 1
          %s475 = smul.addr %s474, 8
          %s476 = smul.addr %s475, 8
          %s477 = scalar_lea.vmem %s0, %s476
        $region68: #{basic_transformer_block.1} parent=63 // pred_fallthru
          _
        // Predicated region
        $region69: #{basic_transformer_block.1} parent=63 // pred_check
          %p478 = pneg %p73
        $region70: #{basic_transformer_block.1} parent=63 // pred_check_branch
          %480 = sbr.rel (%p478) target = $region72
        $region71: #{basic_transformer_block.1} parent=63 // pred_region
          %p481 = scmp.lt.s32.totalorder %s27, 1
          %s482 = scalar_select %p481, %s27, 1
          %s483 = smul.addr %s482, 4
          %s484 = smul.addr %s483, 8
          %s485 = scalar_lea.vmem %s1, %s484
        $region72: #{basic_transformer_block.1} parent=63 // pred_fallthru
          _
      $region64: #{basic_transformer_block.1} parent=5 // pred_fallthru
        _
      %p486 = scmp.le.s32.totalorder 1, %s27
      %p487 = scmp.lt.s32.totalorder %s27, 3
      %p488 = pnand %p486, %p487
      %p489 = pneg %p488
      // Predicated region
      $region73: #{basic_transformer_block.1} parent=5 // pred_check
        _
      $region74: #{basic_transformer_block.1} parent=5 // pred_check_branch
        %491 = sbr.rel (%p488) target = $region76
      $region75: #{basic_transformer_block.1} parent=5 // pred_region
        %s492 = ssub.s32 %s27, 1
        // Predicated region
        $region77: #{basic_transformer_block.1} parent=75 // pred_check
          %p493 = pneg %p100
        $region78: #{basic_transformer_block.1} parent=75 // pred_check_branch
          %495 = sbr.rel (%p493) target = $region80
        $region79: #{basic_transformer_block.1} parent=75 // pred_region
          %496 = dma.done [#allocation3], 256
        $region80: #{basic_transformer_block.1} parent=75 // pred_fallthru
          _
        // Predicated region
        $region81: #{basic_transformer_block.1} parent=75 // pred_check
          %p497 = pneg %p184
        $region82: #{basic_transformer_block.1} parent=75 // pred_check_branch
          %499 = sbr.rel (%p497) target = $region84
        $region83: #{basic_transformer_block.1} parent=75 // pred_region
          %500 = dma.done [#allocation6], 1024
        $region84: #{basic_transformer_block.1} parent=75 // pred_fallthru
          _
        // Predicated region
        $region85: #{basic_transformer_block.1} parent=75 // pred_check
          %p501 = pneg %p205
        $region86: #{basic_transformer_block.1} parent=75 // pred_check_branch
          %503 = sbr.rel (%p501) target = $region88
        $region87: #{basic_transformer_block.1} parent=75 // pred_region
          %504 = dma.done [#allocation6], 1024
        $region88: #{basic_transformer_block.1} parent=75 // pred_fallthru
          _
        // Predicated region
        $region89: #{basic_transformer_block.1} parent=75 // pred_check
          %p505 = pneg %p226
        $region90: #{basic_transformer_block.1} parent=75 // pred_check_branch
          %507 = sbr.rel (%p505) target = $region92
        $region91: #{basic_transformer_block.1} parent=75 // pred_region
          %508 = dma.done [#allocation9], 1024
        $region92: #{basic_transformer_block.1} parent=75 // pred_fallthru
          _
        // Predicated region
        $region93: #{basic_transformer_block.1} parent=75 // pred_check
          %p509 = pneg %p247
        $region94: #{basic_transformer_block.1} parent=75 // pred_check_branch
          %511 = sbr.rel (%p509) target = $region96
        $region95: #{basic_transformer_block.1} parent=75 // pred_region
          %512 = dma.done [#allocation9], 512
        $region96: #{basic_transformer_block.1} parent=75 // pred_fallthru
          _
        // Predicated region
        $region97: #{basic_transformer_block.1} parent=75 // pred_check
          %p513 = pneg %p289
        $region98: #{basic_transformer_block.1} parent=75 // pred_check_branch
          %515 = sbr.rel (%p513) target = $region100
        $region99: #{basic_transformer_block.1} parent=75 // pred_region
          %516 = dma.done [#allocation12], 1024
        $region100: #{basic_transformer_block.1} parent=75 // pred_fallthru
          _
        %p517 = scmp.lt.s32.totalorder %s32, 1
        %s518 = scalar_select %p517, %s32, 1
        %s519 = smul.addr %s518, 8
        %s520 = smul.addr %s519, 8
        %s521 = scalar_lea.vmem %s0, %s520
        %p522 = pneg %p53
        %p523 = pneg %p50
        %p524 = scmp.lt.s32.totalorder %s32, 1
        %s525 = scalar_select %p524, %s32, 1
        %s526 = smul.addr %s525, 4
        %s527 = smul.addr %s526, 8
        %s528 = scalar_lea.vmem %s1, %s527
        %p529 = pneg %p79
        %p530 = pneg %p76
        %p531 = pneg %p100
        %p532 = pneg %p97
        %p533 = pneg %p121
        %p534 = pneg %p118
        %p535 = pneg %p142
        %p536 = pneg %p139
        %p537 = pneg %p163
        %p538 = pneg %p160
        %p539 = pneg %p184
        %p540 = pneg %p181
        %p541 = pneg %p205
        %p542 = pneg %p202
        %p543 = pneg %p226
        %p544 = pneg %p223
        %p545 = pneg %p247
        %p546 = pneg %p244
        %p547 = pneg %p268
        %p548 = pneg %p265
        %p549 = pneg %p289
        %p550 = pneg %p286
        %p551 = pneg %p310
        %p552 = pneg %p307
        %p553 = pneg %p331
        %p554 = pneg %p328
        %p555 = pneg %p357
        %p556 = pneg %p354
        %s557 = sand.u32 %s344, 1
        %s558 = scalar_lea.sflag [#allocation4], %s557
        %s559 = sand.u32 %s344, 1
        %s560 = smul.addr %s559, 64
        %s561 = scalar_lea.vmem [#allocation13], %s560
        %p562 = scmp.lt.s32.totalorder %s32, 1
        %s563 = scalar_select %p562, %s32, 1
        %s564 = smul.addr %s563, 8
        %s565 = smul.addr %s564, 8
        %s566 = scalar_lea.vmem %s0, %s565
        %p567 = scmp.lt.s32.totalorder %s32, 1
        %s568 = scalar_select %p567, %s32, 1
        %s569 = smul.addr %s568, 4
        %s570 = smul.addr %s569, 8
        %s571 = scalar_lea.vmem %s1, %s570
        %v572 = vld [vmem:[%s566] sm:$0xff]
        %v573 = vld [vmem:[%s566 + $0x8] sm:$0xff]
        %v574 = vld [vmem:[%s566 + $0x10] sm:$0xff]
        %v575 = vld [vmem:[%s566 + $0x18] sm:$0xff]
        %v576 = vld [vmem:[%s566 + $0x20] sm:$0xff]
        %v577 = vld [vmem:[%s566 + $0x28] sm:$0xff]
        %v578 = vld [vmem:[%s566 + $0x30] sm:$0xff]
        %v579 = vld [vmem:[%s566 + $0x38] sm:$0xff]
        %v580 = vld [vmem:[%s571] sm:$0xff]
        %v581 = vld [vmem:[%s571 + $0x8] sm:$0xff]
        %v582 = vld [vmem:[%s571 + $0x10] sm:$0xff]
        %v583 = vld [vmem:[%s571 + $0x18] sm:$0xff]
        %v584 = vld [vmem:[#allocation2] ss:$0 sm:$0xff]
        %v585 = vld [vmem:[#allocation2 + $0x1] ss:$0 sm:$0xff]
        %v586 = vld [vmem:[#allocation2 + $0x2] ss:$0 sm:$0xff]
        %v587 = vld [vmem:[#allocation2 + $0x3] ss:$0 sm:$0xff]
        %v588 = vld [vmem:[#allocation2 + $0x4] ss:$0 sm:$0xff]
        %v589 = vld [vmem:[#allocation2 + $0x5] ss:$0 sm:$0xff]
        %v590 = vld [vmem:[#allocation2 + $0x6] ss:$0 sm:$0xff]
        %s591 = scalar_lea.vmem [#allocation2], 7
        %v592 = vld [vmem:[%s591] ss:$8 sm:$0x3]
        %v593 = vld [vmem:[%s3] sm:$0xff]
        %v594 = vld [vmem:[%s3 + $0x8] sm:$0xff]
        %v595 = vld [vmem:[%s3 + $0x10] sm:$0xff]
        %v596 = vld [vmem:[%s3 + $0x18] sm:$0xff]
        %v597 = vld [vmem:[%s3 + $0x20] sm:$0xff]
        %v598 = vld [vmem:[%s3 + $0x28] sm:$0xff]
        %v599 = vld [vmem:[%s3 + $0x30] sm:$0xff]
        %v600 = vld [vmem:[%s3 + $0x38] sm:$0xff]
        %vm601 = vcmask 523264
        %v602 = vsel %vm601, %v572, 0.0
        %603 = vadd.xlane.f32.xlu0 %v602
        %v604 = vpop.xlane.xlu0 %603
        %v605 = vsel %vm601, %v573, 0.0
        %606 = vadd.xlane.f32.xlu0 %v605
        %v607 = vpop.xlane.xlu0 %606
        %v608 = vsel %vm601, %v574, 0.0
        %609 = vadd.xlane.f32.xlu0 %v608
        %v610 = vpop.xlane.xlu0 %609
        %v611 = vsel %vm601, %v575, 0.0
        %612 = vadd.xlane.f32.xlu0 %v611
        %v613 = vpop.xlane.xlu0 %612
        %v614 = vsel %vm601, %v576, 0.0
        %615 = vadd.xlane.f32.xlu0 %v614
        %v616 = vpop.xlane.xlu0 %615
        %v617 = vsel %vm601, %v577, 0.0
        %618 = vadd.xlane.f32.xlu0 %v617
        %v619 = vpop.xlane.xlu0 %618
        %v620 = vsel %vm601, %v578, 0.0
        %621 = vadd.xlane.f32.xlu0 %v620
        %v622 = vpop.xlane.xlu0 %621
        %v623 = vsel %vm601, %v579, 0.0
        %624 = vadd.xlane.f32.xlu0 %v623
        %v625 = vpop.xlane.xlu0 %624
        %v626 = vrcp.pop 64.0
        %v627 = vmul.f32 %v604, %v626
        %v628 = vmul.f32 %v607, %v626
        %v629 = vmul.f32 %v610, %v626
        %v630 = vmul.f32 %v613, %v626
        %v631 = vmul.f32 %v616, %v626
        %v632 = vmul.f32 %v619, %v626
        %v633 = vmul.f32 %v622, %v626
        %v634 = vmul.f32 %v625, %v626
        %v635 = vsub.f32 %v572, %v627
        %v636 = vsub.f32 %v573, %v628
        %v637 = vsub.f32 %v574, %v629
        %v638 = vsub.f32 %v575, %v630
        %v639 = vsub.f32 %v576, %v631
        %v640 = vsub.f32 %v577, %v632
        %v641 = vsub.f32 %v578, %v633
        %v642 = vsub.f32 %v579, %v634
        %v643 = vmul.f32 %v635, %v635
        %v644 = vmul.f32 %v636, %v636
        %v645 = vmul.f32 %v637, %v637
        %v646 = vmul.f32 %v638, %v638
        %v647 = vmul.f32 %v639, %v639
        %v648 = vmul.f32 %v640, %v640
        %v649 = vmul.f32 %v641, %v641
        %v650 = vmul.f32 %v642, %v642
        %v651 = vsel %vm601, %v643, 0.0
        %652 = vadd.xlane.f32.xlu0 %v651
        %v653 = vpop.xlane.xlu0 %652
        %v654 = vsel %vm601, %v644, 0.0
        %655 = vadd.xlane.f32.xlu0 %v654
        %v656 = vpop.xlane.xlu0 %655
        %v657 = vsel %vm601, %v645, 0.0
        %658 = vadd.xlane.f32.xlu0 %v657
        %v659 = vpop.xlane.xlu0 %658
        %v660 = vsel %vm601, %v646, 0.0
        %661 = vadd.xlane.f32.xlu0 %v660
        %v662 = vpop.xlane.xlu0 %661
        %v663 = vsel %vm601, %v647, 0.0
        %664 = vadd.xlane.f32.xlu0 %v663
        %v665 = vpop.xlane.xlu0 %664
        %v666 = vsel %vm601, %v648, 0.0
        %667 = vadd.xlane.f32.xlu0 %v666
        %v668 = vpop.xlane.xlu0 %667
        %v669 = vsel %vm601, %v649, 0.0
        %670 = vadd.xlane.f32.xlu0 %v669
        %v671 = vpop.xlane.xlu0 %670
        %v672 = vsel %vm601, %v650, 0.0
        %673 = vadd.xlane.f32.xlu0 %v672
        %v674 = vpop.xlane.xlu0 %673
        %v675 = vmul.f32 %v653, %v626
        %v676 = vmul.f32 %v656, %v626
        %v677 = vmul.f32 %v659, %v626
        %v678 = vmul.f32 %v662, %v626
        %v679 = vmul.f32 %v665, %v626
        %v680 = vmul.f32 %v668, %v626
        %v681 = vmul.f32 %v671, %v626
        %v682 = vmul.f32 %v674, %v626
        %v683 = vadd.f32 %v675, 1e-05
        %v684 = vadd.f32 %v676, 1e-05
        %v685 = vadd.f32 %v677, 1e-05
        %v686 = vadd.f32 %v678, 1e-05
        %v687 = vadd.f32 %v679, 1e-05
        %v688 = vadd.f32 %v680, 1e-05
        %v689 = vadd.f32 %v681, 1e-05
        %v690 = vadd.f32 %v682, 1e-05
        %v691 = vrsqrt.pop %v683
        %v692 = vrsqrt.pop %v684
        %v693 = vrsqrt.pop %v685
        %v694 = vrsqrt.pop %v686
        %v695 = vrsqrt.pop %v687
        %v696 = vrsqrt.pop %v688
        %v697 = vrsqrt.pop %v689
        %v698 = vrsqrt.pop %v690
        %v699 = vmul.f32 %v635, %v691
        %v700 = vmul.f32 %v636, %v692
        %v701 = vmul.f32 %v637, %v693
        %v702 = vmul.f32 %v638, %v694
        %v703 = vmul.f32 %v639, %v695
        %v704 = vmul.f32 %v640, %v696
        %v705 = vmul.f32 %v641, %v697
        %v706 = vmul.f32 %v642, %v698
        %v707 = vmul.f32 %v699, %v584
        %v708 = vmul.f32 %v700, %v584
        %v709 = vmul.f32 %v701, %v584
        %v710 = vmul.f32 %v702, %v584
        %v711 = vmul.f32 %v703, %v584
        %v712 = vmul.f32 %v704, %v584
        %v713 = vmul.f32 %v705, %v584
        %v714 = vmul.f32 %v706, %v584
        %v715 = vadd.f32 %v707, %v585
        %v716 = vadd.f32 %v708, %v585
        %v717 = vadd.f32 %v709, %v585
        %v718 = vadd.f32 %v710, %v585
        %v719 = vadd.f32 %v711, %v585
        %v720 = vadd.f32 %v712, %v585
        %v721 = vadd.f32 %v713, %v585
        %v722 = vadd.f32 %v714, %v585
        %v723 = vld [vmem:[%s4] sm:$0xff]
        %v724 = vld [vmem:[%s4 + $0x8] sm:$0xff]
        %v725 = vld [vmem:[%s4 + $0x10] sm:$0xff]
        %v726 = vld [vmem:[%s4 + $0x18] sm:$0xff]
        %v727 = vld [vmem:[%s4 + $0x20] sm:$0xff]
        %v728 = vld [vmem:[%s4 + $0x28] sm:$0xff]
        %v729 = vld [vmem:[%s4 + $0x30] sm:$0xff]
        %v730 = vld [vmem:[%s4 + $0x38] sm:$0xff]
        %731 = vxpose.xlu0.b32.start [1/16] %v715, 128
        %732 = vxpose.xlu0.b32.cont [2/16] %v716, 128
        %733 = vxpose.xlu0.b32.cont [3/16] %v717, 128
        %734 = vxpose.xlu0.b32.cont [4/16] %v718, 128
        %735 = vxpose.xlu0.b32.cont [5/16] %v719, 128
        %736 = vxpose.xlu0.b32.cont [6/16] %v720, 128
        %737 = vxpose.xlu0.b32.cont [7/16] %v721, 128
        %738 = vxpose.xlu0.b32.cont [8/16] %v722, 128
        %739 = vxpose.xlu0.b32.cont [9/16] 0.0, 128
        %740 = vxpose.xlu0.b32.cont [10/16] 0.0, 128
        %741 = vxpose.xlu0.b32.cont [11/16] 0.0, 128
        %742 = vxpose.xlu0.b32.cont [12/16] 0.0, 128
        %743 = vxpose.xlu0.b32.cont [13/16] 0.0, 128
        %744 = vxpose.xlu0.b32.cont [14/16] 0.0, 128
        %745 = vxpose.xlu0.b32.cont [15/16] 0.0, 128
        %746 = vxpose.xlu0.b32.end [16/16] 0.0, 128
        %v747 = vpop.trf.xlu0
        %v748 = vpop.trf.xlu0
        %v749 = vpop.trf.xlu0
        %v750 = vpop.trf.xlu0
        %v751 = vpop.trf.xlu0
        %v752 = vpop.trf.xlu0
        %v753 = vpop.trf.xlu0
        %v754 = vpop.trf.xlu0
        %v755 = vpop.trf.xlu0
        %v756 = vpop.trf.xlu0
        %v757 = vpop.trf.xlu0
        %v758 = vpop.trf.xlu0
        %v759 = vpop.trf.xlu0
        %v760 = vpop.trf.xlu0
        %v761 = vpop.trf.xlu0
        %v762 = vpop.trf.xlu0
        %v764 = vsel %vm601, %v747, 0
        %v767 = vsel %vm601, %v748, 0
        %v770 = vsel %vm601, %v749, 0
        %v773 = vsel %vm601, %v750, 0
        %v776 = vsel %vm601, %v751, 0
        %v779 = vsel %vm601, %v752, 0
        %v782 = vsel %vm601, %v753, 0
        %v785 = vsel %vm601, %v754, 0
        %787 = vmatprep.subr.mxu0 0.0
        %788 = vmatpush1.msra.mxu0 %v723
        %789 = vmatprep.subr.mxu0 0.0
        %790 = vmatpush1.msra.mxu0 %v724
        %791 = vmatprep.subr.mxu0 0.0
        %792 = vmatpush1.msra.mxu0 %v725
        %793 = vmatprep.subr.mxu0 0.0
        %794 = vmatpush1.msra.mxu0 %v726
        %795 = vmatprep.subr.mxu0 0.0
        %796 = vmatpush1.msra.mxu0 %v727
        %797 = vmatprep.subr.mxu0 0.0
        %798 = vmatpush1.msra.mxu0 %v728
        %799 = vmatprep.subr.mxu0 0.0
        %800 = vmatpush1.msra.mxu0 %v729
        %801 = vmatprep.subr.mxu0 0.0
        %802 = vmatpush1.msra.mxu0 %v730
        %803 = vmatprep.subr.mxu0 0.0
        %804 = vmatpush1.msra.mxu0 0.0
        %805 = vmatprep.subr.mxu0 0.0
        %806 = vmatpush1.msra.mxu0 0.0
        %807 = vmatprep.subr.mxu0 0.0
        %808 = vmatpush1.msra.mxu0 0.0
        %809 = vmatprep.subr.mxu0 0.0
        %810 = vmatpush1.msra.mxu0 0.0
        %811 = vmatprep.subr.mxu0 0.0
        %812 = vmatpush1.msra.mxu0 0.0
        %813 = vmatprep.subr.mxu0 0.0
        %814 = vmatpush1.msra.mxu0 0.0
        %815 = vmatprep.subr.mxu0 0.0
        %816 = vmatpush1.msra.mxu0 0.0
        %817 = vmatprep.subr.mxu0 0.0
        %818 = vmatpush1.msra.mxu0 0.0
        %819 = vmatprep.subr.mxu0 0.0
        %820 = vmatpush1.msra.mxu0 0.0
        %821 = vmatprep.subr.mxu0 0.0
        %822 = vmatpush1.msra.mxu0 0.0
        %823 = vmatprep.subr.mxu0 0.0
        %824 = vmatpush1.msra.mxu0 0.0
        %825 = vmatprep.subr.mxu0 0.0
        %826 = vmatpush1.msra.mxu0 0.0
        %827 = vmatprep.subr.mxu0 0.0
        %828 = vmatpush1.msra.mxu0 0.0
        %829 = vmatprep.subr.mxu0 0.0
        %830 = vmatpush1.msra.mxu0 0.0
        %831 = vmatprep.subr.mxu0 0.0
        %832 = vmatpush1.msra.mxu0 0.0
        %833 = vmatprep.subr.mxu0 0.0
        %834 = vmatpush1.msra.mxu0 0.0
        %835 = vmatprep.subr.mxu0 0.0
        %836 = vmatpush1.msra.mxu0 0.0
        %837 = vmatprep.subr.mxu0 0.0
        %838 = vmatpush1.msra.mxu0 0.0
        %839 = vmatprep.subr.mxu0 0.0
        %840 = vmatpush1.msra.mxu0 0.0
        %841 = vmatprep.subr.mxu0 0.0
        %842 = vmatpush1.msra.mxu0 0.0
        %843 = vmatprep.subr.mxu0 0.0
        %844 = vmatpush1.msra.mxu0 0.0
        %845 = vmatprep.subr.mxu0 0.0
        %846 = vmatpush1.msra.mxu0 0.0
        %847 = vmatprep.subr.mxu0 0.0
        %848 = vmatpush1.msra.mxu0 0.0
        %849 = vmatprep.subr.mxu0 0.0
        %850 = vmatpush1.msra.mxu0 0.0
        %851 = vmatprep.mubr.f32.mxu0 0.0
        %852 = vmatmul.mubr.f32.gmra.mrb[0].mxu0 %v764
        %v853 = vpop.f32.mrb[0].mxu0
        %v854 = vadd.f32 0.0, %v853
        %v855 = vpop.f32.mrb[0].mxu0
        %856 = vmatprep.mubr.f32.mxu0 0.0
        %857 = vmatmul.mubr.f32.gmra.mrb[0].mxu0 %v767
        %v858 = vpop.f32.mrb[0].mxu0
        %v859 = vadd.f32 0.0, %v858
        %v860 = vpop.f32.mrb[0].mxu0
        %861 = vmatprep.mubr.f32.mxu0 0.0
        %862 = vmatmul.mubr.f32.gmra.mrb[0].mxu0 %v770
        %v863 = vpop.f32.mrb[0].mxu0
        %v864 = vadd.f32 0.0, %v863
        %v865 = vpop.f32.mrb[0].mxu0
        %866 = vmatprep.mubr.f32.mxu0 0.0
        %867 = vmatmul.mubr.f32.gmra.mrb[0].mxu0 %v773
        %v868 = vpop.f32.mrb[0].mxu0
        %v869 = vadd.f32 0.0, %v868
        %v870 = vpop.f32.mrb[0].mxu0
        %871 = vmatprep.mubr.f32.mxu0 0.0
        %872 = vmatmul.mubr.f32.gmra.mrb[0].mxu0 %v776
        %v873 = vpop.f32.mrb[0].mxu0
        %v874 = vadd.f32 0.0, %v873
        %v875 = vpop.f32.mrb[0].mxu0
        %876 = vmatprep.mubr.f32.mxu0 0.0
        %877 = vmatmul.mubr.f32.gmra.mrb[0].mxu0 %v779
        %v878 = vpop.f32.mrb[0].mxu0
        %v879 = vadd.f32 0.0, %v878
        %v880 = vpop.f32.mrb[0].mxu0
        %881 = vmatprep.mubr.f32.mxu0 0.0
        %882 = vmatmul.mubr.f32.gmra.mrb[0].mxu0 %v782
        %v883 = vpop.f32.mrb[0].mxu0
        %v884 = vadd.f32 0.0, %v883
        %v885 = vpop.f32.mrb[0].mxu0
        %886 = vmatprep.mubr.f32.mxu0 0.0
        %887 = vmatmul.mubr.f32.gmra.mrb[0].mxu0 %v785
        %v888 = vpop.f32.mrb[0].mxu0
        %v889 = vadd.f32 0.0, %v888
        %v890 = vpop.f32.mrb[0].mxu0
        %891 = vdwg.mxu0
        %v892 = vld [vmem:[%s5] sm:$0xff]
        %v893 = vld [vmem:[%s5 + $0x8] sm:$0xff]
        %v894 = vld [vmem:[%s5 + $0x10] sm:$0xff]
        %v895 = vld [vmem:[%s5 + $0x18] sm:$0xff]
        %v896 = vld [vmem:[%s5 + $0x20] sm:$0xff]
        %v897 = vld [vmem:[%s5 + $0x28] sm:$0xff]
        %v898 = vld [vmem:[%s5 + $0x30] sm:$0xff]
        %v899 = vld [vmem:[%s5 + $0x38] sm:$0xff]
        %900 = vmatprep.subr.mxu0 0.0
        %901 = vmatpush1.msra.mxu0 %v892
        %902 = vmatprep.subr.mxu0 0.0
        %903 = vmatpush1.msra.mxu0 %v893
        %904 = vmatprep.subr.mxu0 0.0
        %905 = vmatpush1.msra.mxu0 %v894
        %906 = vmatprep.subr.mxu0 0.0
        %907 = vmatpush1.msra.mxu0 %v895
        %908 = vmatprep.subr.mxu0 0.0
        %909 = vmatpush1.msra.mxu0 %v896
        %910 = vmatprep.subr.mxu0 0.0
        %911 = vmatpush1.msra.mxu0 %v897
        %912 = vmatprep.subr.mxu0 0.0
        %913 = vmatpush1.msra.mxu0 %v898
        %914 = vmatprep.subr.mxu0 0.0
        %915 = vmatpush1.msra.mxu0 %v899
        %916 = vmatprep.subr.mxu0 0.0
        %917 = vmatpush1.msra.mxu0 0.0
        %918 = vmatprep.subr.mxu0 0.0
        %919 = vmatpush1.msra.mxu0 0.0
        %920 = vmatprep.subr.mxu0 0.0
        %921 = vmatpush1.msra.mxu0 0.0
        %922 = vmatprep.subr.mxu0 0.0
        %923 = vmatpush1.msra.mxu0 0.0
        %924 = vmatprep.subr.mxu0 0.0
        %925 = vmatpush1.msra.mxu0 0.0
        %926 = vmatprep.subr.mxu0 0.0
        %927 = vmatpush1.msra.mxu0 0.0
        %928 = vmatprep.subr.mxu0 0.0
        %929 = vmatpush1.msra.mxu0 0.0
        %930 = vmatprep.subr.mxu0 0.0
        %931 = vmatpush1.msra.mxu0 0.0
        %932 = vmatprep.subr.mxu0 0.0
        %933 = vmatpush1.msra.mxu0 0.0
        %934 = vmatprep.subr.mxu0 0.0
        %935 = vmatpush1.msra.mxu0 0.0
        %936 = vmatprep.subr.mxu0 0.0
        %937 = vmatpush1.msra.mxu0 0.0
        %938 = vmatprep.subr.mxu0 0.0
        %939 = vmatpush1.msra.mxu0 0.0
        %940 = vmatprep.subr.mxu0 0.0
        %941 = vmatpush1.msra.mxu0 0.0
        %942 = vmatprep.subr.mxu0 0.0
        %943 = vmatpush1.msra.mxu0 0.0
        %944 = vmatprep.subr.mxu0 0.0
        %945 = vmatpush1.msra.mxu0 0.0
        %946 = vmatprep.subr.mxu0 0.0
        %947 = vmatpush1.msra.mxu0 0.0
        %948 = vmatprep.subr.mxu0 0.0
        %949 = vmatpush1.msra.mxu0 0.0
        %950 = vmatprep.subr.mxu0 0.0
        %951 = vmatpush1.msra.mxu0 0.0
        %952 = vmatprep.subr.mxu0 0.0
        %953 = vmatpush1.msra.mxu0 0.0
        %954 = vmatprep.subr.mxu0 0.0
        %955 = vmatpush1.msra.mxu0 0.0
        %956 = vmatprep.subr.mxu0 0.0
        %957 = vmatpush1.msra.mxu0 0.0
        %958 = vmatprep.subr.mxu0 0.0
        %959 = vmatpush1.msra.mxu0 0.0
        %960 = vmatprep.subr.mxu0 0.0
        %961 = vmatpush1.msra.mxu0 0.0
        %962 = vmatprep.subr.mxu0 0.0
        %963 = vmatpush1.msra.mxu0 0.0
        %964 = vmatprep.mubr.f32.mxu0 0.0
        %965 = vmatmul.mubr.f32.gmra.mrb[0].mxu0 %v764
        %v966 = vpop.f32.mrb[0].mxu0
        %v967 = vadd.f32 0.0, %v966
        %v968 = vpop.f32.mrb[0].mxu0
        %969 = vmatprep.mubr.f32.mxu0 0.0
        %970 = vmatmul.mubr.f32.gmra.mrb[0].mxu0 %v767
        %v971 = vpop.f32.mrb[0].mxu0
        %v972 = vadd.f32 0.0, %v971
        %v973 = vpop.f32.mrb[0].mxu0
        %974 = vmatprep.mubr.f32.mxu0 0.0
        %975 = vmatmul.mubr.f32.gmra.mrb[0].mxu0 %v770
        %v976 = vpop.f32.mrb[0].mxu0
        %v977 = vadd.f32 0.0, %v976
        %v978 = vpop.f32.mrb[0].mxu0
        %979 = vmatprep.mubr.f32.mxu0 0.0
        %980 = vmatmul.mubr.f32.gmra.mrb[0].mxu0 %v773
        %v981 = vpop.f32.mrb[0].mxu0
        %v982 = vadd.f32 0.0, %v981
        %v983 = vpop.f32.mrb[0].mxu0
        %984 = vmatprep.mubr.f32.mxu0 0.0
        %985 = vmatmul.mubr.f32.gmra.mrb[0].mxu0 %v776
        %v986 = vpop.f32.mrb[0].mxu0
        %v987 = vadd.f32 0.0, %v986
        %v988 = vpop.f32.mrb[0].mxu0
        %989 = vmatprep.mubr.f32.mxu0 0.0
        %990 = vmatmul.mubr.f32.gmra.mrb[0].mxu0 %v779
        %v991 = vpop.f32.mrb[0].mxu0
        %v992 = vadd.f32 0.0, %v991
        %v993 = vpop.f32.mrb[0].mxu0
        %994 = vmatprep.mubr.f32.mxu0 0.0
        %995 = vmatmul.mubr.f32.gmra.mrb[0].mxu0 %v782
        %v996 = vpop.f32.mrb[0].mxu0
        %v997 = vadd.f32 0.0, %v996
        %v998 = vpop.f32.mrb[0].mxu0
        %999 = vmatprep.mubr.f32.mxu0 0.0
        %1000 = vmatmul.mubr.f32.gmra.mrb[0].mxu0 %v785
        %v1001 = vpop.f32.mrb[0].mxu0
        %v1002 = vadd.f32 0.0, %v1001
        %v1003 = vpop.f32.mrb[0].mxu0
        %1004 = vdwg.mxu0
        %v1005 = vld [vmem:[#allocation5] sm:$0xff]
        %v1006 = vld [vmem:[#allocation5 + $0x8] sm:$0xff]
        %v1007 = vld [vmem:[#allocation5 + $0x10] sm:$0xff]
        %v1008 = vld [vmem:[#allocation5 + $0x18] sm:$0xff]
        %v1009 = vld [vmem:[#allocation5 + $0x20] sm:$0xff]
        %v1010 = vld [vmem:[#allocation5 + $0x28] sm:$0xff]
        %v1011 = vld [vmem:[#allocation5 + $0x30] sm:$0xff]
        %v1012 = vld [vmem:[#allocation5 + $0x38] sm:$0xff]
        %1013 = vmatprep.subr.mxu0 0.0
        %1014 = vmatpush1.msra.mxu0 %v1005
        %1015 = vmatprep.subr.mxu0 0.0
        %1016 = vmatpush1.msra.mxu0 %v1006
        %1017 = vmatprep.subr.mxu0 0.0
        %1018 = vmatpush1.msra.mxu0 %v1007
        %1019 = vmatprep.subr.mxu0 0.0
        %1020 = vmatpush1.msra.mxu0 %v1008
        %1021 = vmatprep.subr.mxu0 0.0
        %1022 = vmatpush1.msra.mxu0 %v1009
        %1023 = vmatprep.subr.mxu0 0.0
        %1024 = vmatpush1.msra.mxu0 %v1010
        %1025 = vmatprep.subr.mxu0 0.0
        %1026 = vmatpush1.msra.mxu0 %v1011
        %1027 = vmatprep.subr.mxu0 0.0
        %1028 = vmatpush1.msra.mxu0 %v1012
        %1029 = vmatprep.subr.mxu0 0.0
        %1030 = vmatpush1.msra.mxu0 0.0
        %1031 = vmatprep.subr.mxu0 0.0
        %1032 = vmatpush1.msra.mxu0 0.0
        %1033 = vmatprep.subr.mxu0 0.0
        %1034 = vmatpush1.msra.mxu0 0.0
        %1035 = vmatprep.subr.mxu0 0.0
        %1036 = vmatpush1.msra.mxu0 0.0
        %1037 = vmatprep.subr.mxu0 0.0
        %1038 = vmatpush1.msra.mxu0 0.0
        %1039 = vmatprep.subr.mxu0 0.0
        %1040 = vmatpush1.msra.mxu0 0.0
        %1041 = vmatprep.subr.mxu0 0.0
        %1042 = vmatpush1.msra.mxu0 0.0
        %1043 = vmatprep.subr.mxu0 0.0
        %1044 = vmatpush1.msra.mxu0 0.0
        %1045 = vmatprep.subr.mxu0 0.0
        %1046 = vmatpush1.msra.mxu0 0.0
        %1047 = vmatprep.subr.mxu0 0.0
        %1048 = vmatpush1.msra.mxu0 0.0
        %1049 = vmatprep.subr.mxu0 0.0
        %1050 = vmatpush1.msra.mxu0 0.0
        %1051 = vmatprep.subr.mxu0 0.0
        %1052 = vmatpush1.msra.mxu0 0.0
        %1053 = vmatprep.subr.mxu0 0.0
        %1054 = vmatpush1.msra.mxu0 0.0
        %1055 = vmatprep.subr.mxu0 0.0
        %1056 = vmatpush1.msra.mxu0 0.0
        %1057 = vmatprep.subr.mxu0 0.0
        %1058 = vmatpush1.msra.mxu0 0.0
        %1059 = vmatprep.subr.mxu0 0.0
        %1060 = vmatpush1.msra.mxu0 0.0
        %1061 = vmatprep.subr.mxu0 0.0
        %1062 = vmatpush1.msra.mxu0 0.0
        %1063 = vmatprep.subr.mxu0 0.0
        %1064 = vmatpush1.msra.mxu0 0.0
        %1065 = vmatprep.subr.mxu0 0.0
        %1066 = vmatpush1.msra.mxu0 0.0
        %1067 = vmatprep.subr.mxu0 0.0
        %1068 = vmatpush1.msra.mxu0 0.0
        %1069 = vmatprep.subr.mxu0 0.0
        %1070 = vmatpush1.msra.mxu0 0.0
        %1071 = vmatprep.subr.mxu0 0.0
        %1072 = vmatpush1.msra.mxu0 0.0
        %1073 = vmatprep.subr.mxu0 0.0
        %1074 = vmatpush1.msra.mxu0 0.0
        %1075 = vmatprep.subr.mxu0 0.0
        %1076 = vmatpush1.msra.mxu0 0.0
        %1077 = vmatprep.mubr.f32.mxu0 0.0
        %1078 = vmatmul.mubr.f32.gmra.mrb[0].mxu0 %v764
        %v1079 = vpop.f32.mrb[0].mxu0
        %v1080 = vadd.f32 0.0, %v1079
        %v1081 = vpop.f32.mrb[0].mxu0
        %1082 = vmatprep.mubr.f32.mxu0 0.0
        %1083 = vmatmul.mubr.f32.gmra.mrb[0].mxu0 %v767
        %v1084 = vpop.f32.mrb[0].mxu0
        %v1085 = vadd.f32 0.0, %v1084
        %v1086 = vpop.f32.mrb[0].mxu0
        %1087 = vmatprep.mubr.f32.mxu0 0.0
        %1088 = vmatmul.mubr.f32.gmra.mrb[0].mxu0 %v770
        %v1089 = vpop.f32.mrb[0].mxu0
        %v1090 = vadd.f32 0.0, %v1089
        %v1091 = vpop.f32.mrb[0].mxu0
        %1092 = vmatprep.mubr.f32.mxu0 0.0
        %1093 = vmatmul.mubr.f32.gmra.mrb[0].mxu0 %v773
        %v1094 = vpop.f32.mrb[0].mxu0
        %v1095 = vadd.f32 0.0, %v1094
        %v1096 = vpop.f32.mrb[0].mxu0
        %1097 = vmatprep.mubr.f32.mxu0 0.0
        %1098 = vmatmul.mubr.f32.gmra.mrb[0].mxu0 %v776
        %v1099 = vpop.f32.mrb[0].mxu0
        %v1100 = vadd.f32 0.0, %v1099
        %v1101 = vpop.f32.mrb[0].mxu0
        %1102 = vmatprep.mubr.f32.mxu0 0.0
        %1103 = vmatmul.mubr.f32.gmra.mrb[0].mxu0 %v779
        %v1104 = vpop.f32.mrb[0].mxu0
        %v1105 = vadd.f32 0.0, %v1104
        %v1106 = vpop.f32.mrb[0].mxu0
        %1107 = vmatprep.mubr.f32.mxu0 0.0
        %1108 = vmatmul.mubr.f32.gmra.mrb[0].mxu0 %v782
        %v1109 = vpop.f32.mrb[0].mxu0
        %v1110 = vadd.f32 0.0, %v1109
        %v1111 = vpop.f32.mrb[0].mxu0
        %1112 = vmatprep.mubr.f32.mxu0 0.0
        %1113 = vmatmul.mubr.f32.gmra.mrb[0].mxu0 %v785
        %v1114 = vpop.f32.mrb[0].mxu0
        %v1115 = vadd.f32 0.0, %v1114
        %v1116 = vpop.f32.mrb[0].mxu0
        %1117 = vdwg.mxu0
        %vm1118 = vcmask 130048
        %v1120 = vsel %vm1118, %v854, 0
        %v1123 = vsel %vm1118, %v859, 0
        %v1126 = vsel %vm1118, %v864, 0
        %v1129 = vsel %vm1118, %v869, 0
        %v1132 = vsel %vm1118, %v874, 0
        %v1135 = vsel %vm1118, %v879, 0
        %v1138 = vsel %vm1118, %v884, 0
        %v1141 = vsel %vm1118, %v889, 0
        %v1144 = vsel %vm1118, %v967, 0
        %v1147 = vsel %vm1118, %v972, 0
        %v1150 = vsel %vm1118, %v977, 0
        %v1153 = vsel %vm1118, %v982, 0
        %v1156 = vsel %vm1118, %v987, 0
        %v1159 = vsel %vm1118, %v992, 0
        %v1162 = vsel %vm1118, %v997, 0
        %v1165 = vsel %vm1118, %v1002, 0
        %1167 = vmatprep.subr.mxu0 0.0
        %1168 = vmatpush1.xpose.msra.mxu0 %v1144
        %1169 = vmatprep.subr.mxu0 0.0
        %1170 = vmatpush1.xpose.msra.mxu0 %v1147
        %1171 = vmatprep.subr.mxu0 0.0
        %1172 = vmatpush1.xpose.msra.mxu0 %v1150
        %1173 = vmatprep.subr.mxu0 0.0
        %1174 = vmatpush1.xpose.msra.mxu0 %v1153
        %1175 = vmatprep.subr.mxu0 0.0
        %1176 = vmatpush1.xpose.msra.mxu0 %v1156
        %1177 = vmatprep.subr.mxu0 0.0
        %1178 = vmatpush1.xpose.msra.mxu0 %v1159
        %1179 = vmatprep.subr.mxu0 0.0
        %1180 = vmatpush1.xpose.msra.mxu0 %v1162
        %1181 = vmatprep.subr.mxu0 0.0
        %1182 = vmatpush1.xpose.msra.mxu0 %v1165
        %1183 = vmatprep.subr.mxu0 0.0
        %1184 = vmatpush1.xpose.msra.mxu0 0.0
        %1185 = vmatprep.subr.mxu0 0.0
        %1186 = vmatpush1.xpose.msra.mxu0 0.0
        %1187 = vmatprep.subr.mxu0 0.0
        %1188 = vmatpush1.xpose.msra.mxu0 0.0
        %1189 = vmatprep.subr.mxu0 0.0
        %1190 = vmatpush1.xpose.msra.mxu0 0.0
        %1191 = vmatprep.subr.mxu0 0.0
        %1192 = vmatpush1.xpose.msra.mxu0 0.0
        %1193 = vmatprep.subr.mxu0 0.0
        %1194 = vmatpush1.xpose.msra.mxu0 0.0
        %1195 = vmatprep.subr.mxu0 0.0
        %1196 = vmatpush1.xpose.msra.mxu0 0.0
        %1197 = vmatprep.subr.mxu0 0.0
        %1198 = vmatpush1.xpose.msra.mxu0 0.0
        %1199 = vmatprep.subr.mxu0 0.0
        %1200 = vmatpush1.xpose.msra.mxu0 0.0
        %1201 = vmatprep.subr.mxu0 0.0
        %1202 = vmatpush1.xpose.msra.mxu0 0.0
        %1203 = vmatprep.subr.mxu0 0.0
        %1204 = vmatpush1.xpose.msra.mxu0 0.0
        %1205 = vmatprep.subr.mxu0 0.0
        %1206 = vmatpush1.xpose.msra.mxu0 0.0
        %1207 = vmatprep.subr.mxu0 0.0
        %1208 = vmatpush1.xpose.msra.mxu0 0.0
        %1209 = vmatprep.subr.mxu0 0.0
        %1210 = vmatpush1.xpose.msra.mxu0 0.0
        %1211 = vmatprep.subr.mxu0 0.0
        %1212 = vmatpush1.xpose.msra.mxu0 0.0
        %1213 = vmatprep.subr.mxu0 0.0
        %1214 = vmatpush1.xpose.msra.mxu0 0.0
        %1215 = vmatprep.subr.mxu0 0.0
        %1216 = vmatpush1.xpose.msra.mxu0 0.0
        %1217 = vmatprep.subr.mxu0 0.0
        %1218 = vmatpush1.xpose.msra.mxu0 0.0
        %1219 = vmatprep.subr.mxu0 0.0
        %1220 = vmatpush1.xpose.msra.mxu0 0.0
        %1221 = vmatprep.subr.mxu0 0.0
        %1222 = vmatpush1.xpose.msra.mxu0 0.0
        %1223 = vmatprep.subr.mxu0 0.0
        %1224 = vmatpush1.xpose.msra.mxu0 0.0
        %1225 = vmatprep.subr.mxu0 0.0
        %1226 = vmatpush1.xpose.msra.mxu0 0.0
        %1227 = vmatprep.subr.mxu0 0.0
        %1228 = vmatpush1.xpose.msra.mxu0 0.0
        %1229 = vmatprep.subr.mxu0 0.0
        %1230 = vmatpush1.xpose.msra.mxu0 0.0
        %1231 = vmatprep.mubr.f32.mxu0 0.0
        %1232 = vmatmul.mubr.f32.gmra.mrb[0].mxu0 %v1120
        %v1233 = vpop.f32.mrb[0].mxu0
        %v1234 = vadd.f32 0.0, %v1233
        %v1235 = vpop.f32.mrb[0].mxu0
        %1236 = vmatprep.mubr.f32.mxu0 0.0
        %1237 = vmatmul.mubr.f32.gmra.mrb[0].mxu0 %v1123
        %v1238 = vpop.f32.mrb[0].mxu0
        %v1239 = vadd.f32 0.0, %v1238
        %v1240 = vpop.f32.mrb[0].mxu0
        %1241 = vmatprep.mubr.f32.mxu0 0.0
        %1242 = vmatmul.mubr.f32.gmra.mrb[0].mxu0 %v1126
        %v1243 = vpop.f32.mrb[0].mxu0
        %v1244 = vadd.f32 0.0, %v1243
        %v1245 = vpop.f32.mrb[0].mxu0
        %1246 = vmatprep.mubr.f32.mxu0 0.0
        %1247 = vmatmul.mubr.f32.gmra.mrb[0].mxu0 %v1129
        %v1248 = vpop.f32.mrb[0].mxu0
        %v1249 = vadd.f32 0.0, %v1248
        %v1250 = vpop.f32.mrb[0].mxu0
        %1251 = vmatprep.mubr.f32.mxu0 0.0
        %1252 = vmatmul.mubr.f32.gmra.mrb[0].mxu0 %v1132
        %v1253 = vpop.f32.mrb[0].mxu0
        %v1254 = vadd.f32 0.0, %v1253
        %v1255 = vpop.f32.mrb[0].mxu0
        %1256 = vmatprep.mubr.f32.mxu0 0.0
        %1257 = vmatmul.mubr.f32.gmra.mrb[0].mxu0 %v1135
        %v1258 = vpop.f32.mrb[0].mxu0
        %v1259 = vadd.f32 0.0, %v1258
        %v1260 = vpop.f32.mrb[0].mxu0
        %1261 = vmatprep.mubr.f32.mxu0 0.0
        %1262 = vmatmul.mubr.f32.gmra.mrb[0].mxu0 %v1138
        %v1263 = vpop.f32.mrb[0].mxu0
        %v1264 = vadd.f32 0.0, %v1263
        %v1265 = vpop.f32.mrb[0].mxu0
        %1266 = vmatprep.mubr.f32.mxu0 0.0
        %1267 = vmatmul.mubr.f32.gmra.mrb[0].mxu0 %v1141
        %v1268 = vpop.f32.mrb[0].mxu0
        %v1269 = vadd.f32 0.0, %v1268
        %v1270 = vpop.f32.mrb[0].mxu0
        %1271 = vdwg.mxu0
        %v1272 = vsel %vm601, %v1234, -inf
        %1273 = vmax.xlane.f32.xlu0 %v1272
        %v1274 = vpop.xlane.xlu0 %1273
        %v1275 = vsel %vm601, %v1239, -inf
        %1276 = vmax.xlane.f32.xlu0 %v1275
        %v1277 = vpop.xlane.xlu0 %1276
        %v1278 = vsel %vm601, %v1244, -inf
        %1279 = vmax.xlane.f32.xlu0 %v1278
        %v1280 = vpop.xlane.xlu0 %1279
        %v1281 = vsel %vm601, %v1249, -inf
        %1282 = vmax.xlane.f32.xlu0 %v1281
        %v1283 = vpop.xlane.xlu0 %1282
        %v1284 = vsel %vm601, %v1254, -inf
        %1285 = vmax.xlane.f32.xlu0 %v1284
        %v1286 = vpop.xlane.xlu0 %1285
        %v1287 = vsel %vm601, %v1259, -inf
        %1288 = vmax.xlane.f32.xlu0 %v1287
        %v1289 = vpop.xlane.xlu0 %1288
        %v1290 = vsel %vm601, %v1264, -inf
        %1291 = vmax.xlane.f32.xlu0 %v1290
        %v1292 = vpop.xlane.xlu0 %1291
        %v1293 = vsel %vm601, %v1269, -inf
        %1294 = vmax.xlane.f32.xlu0 %v1293
        %v1295 = vpop.xlane.xlu0 %1294
        %v1296 = vsub.f32 %v1234, %v1274
        %v1297 = vsub.f32 %v1239, %v1277
        %v1298 = vsub.f32 %v1244, %v1280
        %v1299 = vsub.f32 %v1249, %v1283
        %v1300 = vsub.f32 %v1254, %v1286
        %v1301 = vsub.f32 %v1259, %v1289
        %v1302 = vsub.f32 %v1264, %v1292
        %v1303 = vsub.f32 %v1269, %v1295
        %v1304 = vmul.f32 %v1296, 1.442695
        %v1305 = vpow.pop %v1304
        %v1306 = vmul.f32 %v1297, 1.442695
        %v1307 = vpow.pop %v1306
        %v1308 = vmul.f32 %v1298, 1.442695
        %v1309 = vpow.pop %v1308
        %v1310 = vmul.f32 %v1299, 1.442695
        %v1311 = vpow.pop %v1310
        %v1312 = vmul.f32 %v1300, 1.442695
        %v1313 = vpow.pop %v1312
        %v1314 = vmul.f32 %v1301, 1.442695
        %v1315 = vpow.pop %v1314
        %v1316 = vmul.f32 %v1302, 1.442695
        %v1317 = vpow.pop %v1316
        %v1318 = vmul.f32 %v1303, 1.442695
        %v1319 = vpow.pop %v1318
        %v1320 = vsel %vm601, %v1305, 0.0
        %1321 = vadd.xlane.f32.xlu0 %v1320
        %v1322 = vpop.xlane.xlu0 %1321
        %v1323 = vsel %vm601, %v1307, 0.0
        %1324 = vadd.xlane.f32.xlu0 %v1323
        %v1325 = vpop.xlane.xlu0 %1324
        %v1326 = vsel %vm601, %v1309, 0.0
        %1327 = vadd.xlane.f32.xlu0 %v1326
        %v1328 = vpop.xlane.xlu0 %1327
        %v1329 = vsel %vm601, %v1311, 0.0
        %1330 = vadd.xlane.f32.xlu0 %v1329
        %v1331 = vpop.xlane.xlu0 %1330
        %v1332 = vsel %vm601, %v1313, 0.0
        %1333 = vadd.xlane.f32.xlu0 %v1332
        %v1334 = vpop.xlane.xlu0 %1333
        %v1335 = vsel %vm601, %v1315, 0.0
        %1336 = vadd.xlane.f32.xlu0 %v1335
        %v1337 = vpop.xlane.xlu0 %1336
        %v1338 = vsel %vm601, %v1317, 0.0
        %1339 = vadd.xlane.f32.xlu0 %v1338
        %v1340 = vpop.xlane.xlu0 %1339
        %v1341 = vsel %vm601, %v1319, 0.0
        %1342 = vadd.xlane.f32.xlu0 %v1341
        %v1343 = vpop.xlane.xlu0 %1342
        %v1344 = vrcp.pop %v1322
        %v1345 = vmul.f32 %v1305, %v1344
        %v1346 = vrcp.pop %v1325
        %v1347 = vmul.f32 %v1307, %v1346
        %v1348 = vrcp.pop %v1328
        %v1349 = vmul.f32 %v1309, %v1348
        %v1350 = vrcp.pop %v1331
        %v1351 = vmul.f32 %v1311, %v1350
        %v1352 = vrcp.pop %v1334
        %v1353 = vmul.f32 %v1313, %v1352
        %v1354 = vrcp.pop %v1337
        %v1355 = vmul.f32 %v1315, %v1354
        %v1356 = vrcp.pop %v1340
        %v1357 = vmul.f32 %v1317, %v1356
        %v1358 = vrcp.pop %v1343
        %v1359 = vmul.f32 %v1319, %v1358
        %v1361 = vsel %vm601, %v1345, 0
        %v1364 = vsel %vm601, %v1347, 0
        %v1367 = vsel %vm601, %v1349, 0
        %v1370 = vsel %vm601, %v1351, 0
        %v1373 = vsel %vm601, %v1353, 0
        %v1376 = vsel %vm601, %v1355, 0
        %v1379 = vsel %vm601, %v1357, 0
        %v1382 = vsel %vm601, %v1359, 0
        %1384 = vmatprep.subr.mxu0 0.0
        %1385 = vmatpush1.msra.mxu0 %v1080
        %1386 = vmatprep.subr.mxu0 0.0
        %1387 = vmatpush1.msra.mxu0 %v1085
        %1388 = vmatprep.subr.mxu0 0.0
        %1389 = vmatpush1.msra.mxu0 %v1090
        %1390 = vmatprep.subr.mxu0 0.0
        %1391 = vmatpush1.msra.mxu0 %v1095
        %1392 = vmatprep.subr.mxu0 0.0
        %1393 = vmatpush1.msra.mxu0 %v1100
        %1394 = vmatprep.subr.mxu0 0.0
        %1395 = vmatpush1.msra.mxu0 %v1105
        %1396 = vmatprep.subr.mxu0 0.0
        %1397 = vmatpush1.msra.mxu0 %v1110
        %1398 = vmatprep.subr.mxu0 0.0
        %1399 = vmatpush1.msra.mxu0 %v1115
        %1400 = vmatprep.subr.mxu0 0.0
        %1401 = vmatpush1.msra.mxu0 0.0
        %1402 = vmatprep.subr.mxu0 0.0
        %1403 = vmatpush1.msra.mxu0 0.0
        %1404 = vmatprep.subr.mxu0 0.0
        %1405 = vmatpush1.msra.mxu0 0.0
        %1406 = vmatprep.subr.mxu0 0.0
        %1407 = vmatpush1.msra.mxu0 0.0
        %1408 = vmatprep.subr.mxu0 0.0
        %1409 = vmatpush1.msra.mxu0 0.0
        %1410 = vmatprep.subr.mxu0 0.0
        %1411 = vmatpush1.msra.mxu0 0.0
        %1412 = vmatprep.subr.mxu0 0.0
        %1413 = vmatpush1.msra.mxu0 0.0
        %1414 = vmatprep.subr.mxu0 0.0
        %1415 = vmatpush1.msra.mxu0 0.0
        %1416 = vmatprep.subr.mxu0 0.0
        %1417 = vmatpush1.msra.mxu0 0.0
        %1418 = vmatprep.subr.mxu0 0.0
        %1419 = vmatpush1.msra.mxu0 0.0
        %1420 = vmatprep.subr.mxu0 0.0
        %1421 = vmatpush1.msra.mxu0 0.0
        %1422 = vmatprep.subr.mxu0 0.0
        %1423 = vmatpush1.msra.mxu0 0.0
        %1424 = vmatprep.subr.mxu0 0.0
        %1425 = vmatpush1.msra.mxu0 0.0
        %1426 = vmatprep.subr.mxu0 0.0
        %1427 = vmatpush1.msra.mxu0 0.0
        %1428 = vmatprep.subr.mxu0 0.0
        %1429 = vmatpush1.msra.mxu0 0.0
        %1430 = vmatprep.subr.mxu0 0.0
        %1431 = vmatpush1.msra.mxu0 0.0
        %1432 = vmatprep.subr.mxu0 0.0
        %1433 = vmatpush1.msra.mxu0 0.0
        %1434 = vmatprep.subr.mxu0 0.0
        %1435 = vmatpush1.msra.mxu0 0.0
        %1436 = vmatprep.subr.mxu0 0.0
        %1437 = vmatpush1.msra.mxu0 0.0
        %1438 = vmatprep.subr.mxu0 0.0
        %1439 = vmatpush1.msra.mxu0 0.0
        %1440 = vmatprep.subr.mxu0 0.0
        %1441 = vmatpush1.msra.mxu0 0.0
        %1442 = vmatprep.subr.mxu0 0.0
        %1443 = vmatpush1.msra.mxu0 0.0
        %1444 = vmatprep.subr.mxu0 0.0
        %1445 = vmatpush1.msra.mxu0 0.0
        %1446 = vmatprep.subr.mxu0 0.0
        %1447 = vmatpush1.msra.mxu0 0.0
        %1448 = vmatprep.mubr.f32.mxu0 0.0
        %1449 = vmatmul.mubr.f32.gmra.mrb[0].mxu0 %v1361
        %v1450 = vpop.f32.mrb[0].mxu0
        %v1451 = vadd.f32 0.0, %v1450
        %v1452 = vpop.f32.mrb[0].mxu0
        %1453 = vmatprep.mubr.f32.mxu0 0.0
        %1454 = vmatmul.mubr.f32.gmra.mrb[0].mxu0 %v1364
        %v1455 = vpop.f32.mrb[0].mxu0
        %v1456 = vadd.f32 0.0, %v1455
        %v1457 = vpop.f32.mrb[0].mxu0
        %1458 = vmatprep.mubr.f32.mxu0 0.0
        %1459 = vmatmul.mubr.f32.gmra.mrb[0].mxu0 %v1367
        %v1460 = vpop.f32.mrb[0].mxu0
        %v1461 = vadd.f32 0.0, %v1460
        %v1462 = vpop.f32.mrb[0].mxu0
        %1463 = vmatprep.mubr.f32.mxu0 0.0
        %1464 = vmatmul.mubr.f32.gmra.mrb[0].mxu0 %v1370
        %v1465 = vpop.f32.mrb[0].mxu0
        %v1466 = vadd.f32 0.0, %v1465
        %v1467 = vpop.f32.mrb[0].mxu0
        %1468 = vmatprep.mubr.f32.mxu0 0.0
        %1469 = vmatmul.mubr.f32.gmra.mrb[0].mxu0 %v1373
        %v1470 = vpop.f32.mrb[0].mxu0
        %v1471 = vadd.f32 0.0, %v1470
        %v1472 = vpop.f32.mrb[0].mxu0
        %1473 = vmatprep.mubr.f32.mxu0 0.0
        %1474 = vmatmul.mubr.f32.gmra.mrb[0].mxu0 %v1376
        %v1475 = vpop.f32.mrb[0].mxu0
        %v1476 = vadd.f32 0.0, %v1475
        %v1477 = vpop.f32.mrb[0].mxu0
        %1478 = vmatprep.mubr.f32.mxu0 0.0
        %1479 = vmatmul.mubr.f32.gmra.mrb[0].mxu0 %v1379
        %v1480 = vpop.f32.mrb[0].mxu0
        %v1481 = vadd.f32 0.0, %v1480
        %v1482 = vpop.f32.mrb[0].mxu0
        %1483 = vmatprep.mubr.f32.mxu0 0.0
        %1484 = vmatmul.mubr.f32.gmra.mrb[0].mxu0 %v1382
        %v1485 = vpop.f32.mrb[0].mxu0
        %v1486 = vadd.f32 0.0, %v1485
        %v1487 = vpop.f32.mrb[0].mxu0
        %1488 = vdwg.mxu0
        %1489 = vrot.lane.b32.xlu0 %v854, 112
        %v1490 = vpop.permute.xlu0 %1489
        %1491 = vrot.lane.b32.xlu0 %v859, 112
        %v1492 = vpop.permute.xlu0 %1491
        %1493 = vrot.lane.b32.xlu0 %v864, 112
        %v1494 = vpop.permute.xlu0 %1493
        %1495 = vrot.lane.b32.xlu0 %v869, 112
        %v1496 = vpop.permute.xlu0 %1495
        %1497 = vrot.lane.b32.xlu0 %v874, 112
        %v1498 = vpop.permute.xlu0 %1497
        %1499 = vrot.lane.b32.xlu0 %v879, 112
        %v1500 = vpop.permute.xlu0 %1499
        %1501 = vrot.lane.b32.xlu0 %v884, 112
        %v1502 = vpop.permute.xlu0 %1501
        %1503 = vrot.lane.b32.xlu0 %v889, 112
        %v1504 = vpop.permute.xlu0 %1503
        %1505 = vrot.lane.b32.xlu0 %v967, 112
        %v1506 = vpop.permute.xlu0 %1505
        %1507 = vrot.lane.b32.xlu0 %v972, 112
        %v1508 = vpop.permute.xlu0 %1507
        %1509 = vrot.lane.b32.xlu0 %v977, 112
        %v1510 = vpop.permute.xlu0 %1509
        %1511 = vrot.lane.b32.xlu0 %v982, 112
        %v1512 = vpop.permute.xlu0 %1511
        %1513 = vrot.lane.b32.xlu0 %v987, 112
        %v1514 = vpop.permute.xlu0 %1513
        %1515 = vrot.lane.b32.xlu0 %v992, 112
        %v1516 = vpop.permute.xlu0 %1515
        %1517 = vrot.lane.b32.xlu0 %v997, 112
        %v1518 = vpop.permute.xlu0 %1517
        %1519 = vrot.lane.b32.xlu0 %v1002, 112
        %v1520 = vpop.permute.xlu0 %1519
        %v1521 = vsel %vm1118, %v1490, 0
        %v1523 = vsel %vm1118, %v1492, 0
        %v1525 = vsel %vm1118, %v1494, 0
        %v1527 = vsel %vm1118, %v1496, 0
        %v1529 = vsel %vm1118, %v1498, 0
        %v1531 = vsel %vm1118, %v1500, 0
        %v1533 = vsel %vm1118, %v1502, 0
        %v1535 = vsel %vm1118, %v1504, 0
        %v1537 = vsel %vm1118, %v1506, 0
        %v1539 = vsel %vm1118, %v1508, 0
        %v1541 = vsel %vm1118, %v1510, 0
        %v1543 = vsel %vm1118, %v1512, 0
        %v1545 = vsel %vm1118, %v1514, 0
        %v1547 = vsel %vm1118, %v1516, 0
        %v1549 = vsel %vm1118, %v1518, 0
        %v1551 = vsel %vm1118, %v1520, 0
        %1553 = vmatprep.subr.mxu0 0.0
        %1554 = vmatpush1.xpose.msra.mxu0 %v1537
        %1555 = vmatprep.subr.mxu0 0.0
        %1556 = vmatpush1.xpose.msra.mxu0 %v1539
        %1557 = vmatprep.subr.mxu0 0.0
        %1558 = vmatpush1.xpose.msra.mxu0 %v1541
        %1559 = vmatprep.subr.mxu0 0.0
        %1560 = vmatpush1.xpose.msra.mxu0 %v1543
        %1561 = vmatprep.subr.mxu0 0.0
        %1562 = vmatpush1.xpose.msra.mxu0 %v1545
        %1563 = vmatprep.subr.mxu0 0.0
        %1564 = vmatpush1.xpose.msra.mxu0 %v1547
        %1565 = vmatprep.subr.mxu0 0.0
        %1566 = vmatpush1.xpose.msra.mxu0 %v1549
        %1567 = vmatprep.subr.mxu0 0.0
        %1568 = vmatpush1.xpose.msra.mxu0 %v1551
        %1569 = vmatprep.subr.mxu0 0.0
        %1570 = vmatpush1.xpose.msra.mxu0 0.0
        %1571 = vmatprep.subr.mxu0 0.0
        %1572 = vmatpush1.xpose.msra.mxu0 0.0
        %1573 = vmatprep.subr.mxu0 0.0
        %1574 = vmatpush1.xpose.msra.mxu0 0.0
        %1575 = vmatprep.subr.mxu0 0.0
        %1576 = vmatpush1.xpose.msra.mxu0 0.0
        %1577 = vmatprep.subr.mxu0 0.0
        %1578 = vmatpush1.xpose.msra.mxu0 0.0
        %1579 = vmatprep.subr.mxu0 0.0
        %1580 = vmatpush1.xpose.msra.mxu0 0.0
        %1581 = vmatprep.subr.mxu0 0.0
        %1582 = vmatpush1.xpose.msra.mxu0 0.0
        %1583 = vmatprep.subr.mxu0 0.0
        %1584 = vmatpush1.xpose.msra.mxu0 0.0
        %1585 = vmatprep.subr.mxu0 0.0
        %1586 = vmatpush1.xpose.msra.mxu0 0.0
        %1587 = vmatprep.subr.mxu0 0.0
        %1588 = vmatpush1.xpose.msra.mxu0 0.0
        %1589 = vmatprep.subr.mxu0 0.0
        %1590 = vmatpush1.xpose.msra.mxu0 0.0
        %1591 = vmatprep.subr.mxu0 0.0
        %1592 = vmatpush1.xpose.msra.mxu0 0.0
        %1593 = vmatprep.subr.mxu0 0.0
        %1594 = vmatpush1.xpose.msra.mxu0 0.0
        %1595 = vmatprep.subr.mxu0 0.0
        %1596 = vmatpush1.xpose.msra.mxu0 0.0
        %1597 = vmatprep.subr.mxu0 0.0
        %1598 = vmatpush1.xpose.msra.mxu0 0.0
        %1599 = vmatprep.subr.mxu0 0.0
        %1600 = vmatpush1.xpose.msra.mxu0 0.0
        %1601 = vmatprep.subr.mxu0 0.0
        %1602 = vmatpush1.xpose.msra.mxu0 0.0
        %1603 = vmatprep.subr.mxu0 0.0
        %1604 = vmatpush1.xpose.msra.mxu0 0.0
        %1605 = vmatprep.subr.mxu0 0.0
        %1606 = vmatpush1.xpose.msra.mxu0 0.0
        %1607 = vmatprep.subr.mxu0 0.0
        %1608 = vmatpush1.xpose.msra.mxu0 0.0
        %1609 = vmatprep.subr.mxu0 0.0
        %1610 = vmatpush1.xpose.msra.mxu0 0.0
        %1611 = vmatprep.subr.mxu0 0.0
        %1612 = vmatpush1.xpose.msra.mxu0 0.0
        %1613 = vmatprep.subr.mxu0 0.0
        %1614 = vmatpush1.xpose.msra.mxu0 0.0
        %1615 = vmatprep.subr.mxu0 0.0
        %1616 = vmatpush1.xpose.msra.mxu0 0.0
        %1617 = vmatprep.mubr.f32.mxu0 0.0
        %1618 = vmatmul.mubr.f32.gmra.mrb[0].mxu0 %v1521
        %v1619 = vpop.f32.mrb[0].mxu0
        %v1620 = vadd.f32 0.0, %v1619
        %v1621 = vpop.f32.mrb[0].mxu0
        %1622 = vmatprep.mubr.f32.mxu0 0.0
        %1623 = vmatmul.mubr.f32.gmra.mrb[0].mxu0 %v1523
        %v1624 = vpop.f32.mrb[0].mxu0
        %v1625 = vadd.f32 0.0, %v1624
        %v1626 = vpop.f32.mrb[0].mxu0
        %1627 = vmatprep.mubr.f32.mxu0 0.0
        %1628 = vmatmul.mubr.f32.gmra.mrb[0].mxu0 %v1525
        %v1629 = vpop.f32.mrb[0].mxu0
        %v1630 = vadd.f32 0.0, %v1629
        %v1631 = vpop.f32.mrb[0].mxu0
        %1632 = vmatprep.mubr.f32.mxu0 0.0
        %1633 = vmatmul.mubr.f32.gmra.mrb[0].mxu0 %v1527
        %v1634 = vpop.f32.mrb[0].mxu0
        %v1635 = vadd.f32 0.0, %v1634
        %v1636 = vpop.f32.mrb[0].mxu0
        %1637 = vmatprep.mubr.f32.mxu0 0.0
        %1638 = vmatmul.mubr.f32.gmra.mrb[0].mxu0 %v1529
        %v1639 = vpop.f32.mrb[0].mxu0
        %v1640 = vadd.f32 0.0, %v1639
        %v1641 = vpop.f32.mrb[0].mxu0
        %1642 = vmatprep.mubr.f32.mxu0 0.0
        %1643 = vmatmul.mubr.f32.gmra.mrb[0].mxu0 %v1531
        %v1644 = vpop.f32.mrb[0].mxu0
        %v1645 = vadd.f32 0.0, %v1644
        %v1646 = vpop.f32.mrb[0].mxu0
        %1647 = vmatprep.mubr.f32.mxu0 0.0
        %1648 = vmatmul.mubr.f32.gmra.mrb[0].mxu0 %v1533
        %v1649 = vpop.f32.mrb[0].mxu0
        %v1650 = vadd.f32 0.0, %v1649
        %v1651 = vpop.f32.mrb[0].mxu0
        %1652 = vmatprep.mubr.f32.mxu0 0.0
        %1653 = vmatmul.mubr.f32.gmra.mrb[0].mxu0 %v1535
        %v1654 = vpop.f32.mrb[0].mxu0
        %v1655 = vadd.f32 0.0, %v1654
        %v1656 = vpop.f32.mrb[0].mxu0
        %1657 = vdwg.mxu0
        %v1658 = vsel %vm601, %v1620, -inf
        %1659 = vmax.xlane.f32.xlu0 %v1658
        %v1660 = vpop.xlane.xlu0 %1659
        %v1661 = vsel %vm601, %v1625, -inf
        %1662 = vmax.xlane.f32.xlu0 %v1661
        %v1663 = vpop.xlane.xlu0 %1662
        %v1664 = vsel %vm601, %v1630, -inf
        %1665 = vmax.xlane.f32.xlu0 %v1664
        %v1666 = vpop.xlane.xlu0 %1665
        %v1667 = vsel %vm601, %v1635, -inf
        %1668 = vmax.xlane.f32.xlu0 %v1667
        %v1669 = vpop.xlane.xlu0 %1668
        %v1670 = vsel %vm601, %v1640, -inf
        %1671 = vmax.xlane.f32.xlu0 %v1670
        %v1672 = vpop.xlane.xlu0 %1671
        %v1673 = vsel %vm601, %v1645, -inf
        %1674 = vmax.xlane.f32.xlu0 %v1673
        %v1675 = vpop.xlane.xlu0 %1674
        %v1676 = vsel %vm601, %v1650, -inf
        %1677 = vmax.xlane.f32.xlu0 %v1676
        %v1678 = vpop.xlane.xlu0 %1677
        %v1679 = vsel %vm601, %v1655, -inf
        %1680 = vmax.xlane.f32.xlu0 %v1679
        %v1681 = vpop.xlane.xlu0 %1680
        %v1682 = vsub.f32 %v1620, %v1660
        %v1683 = vsub.f32 %v1625, %v1663
        %v1684 = vsub.f32 %v1630, %v1666
        %v1685 = vsub.f32 %v1635, %v1669
        %v1686 = vsub.f32 %v1640, %v1672
        %v1687 = vsub.f32 %v1645, %v1675
        %v1688 = vsub.f32 %v1650, %v1678
        %v1689 = vsub.f32 %v1655, %v1681
        %v1690 = vmul.f32 %v1682, 1.442695
        %v1691 = vpow.pop %v1690
        %v1692 = vmul.f32 %v1683, 1.442695
        %v1693 = vpow.pop %v1692
        %v1694 = vmul.f32 %v1684, 1.442695
        %v1695 = vpow.pop %v1694
        %v1696 = vmul.f32 %v1685, 1.442695
        %v1697 = vpow.pop %v1696
        %v1698 = vmul.f32 %v1686, 1.442695
        %v1699 = vpow.pop %v1698
        %v1700 = vmul.f32 %v1687, 1.442695
        %v1701 = vpow.pop %v1700
        %v1702 = vmul.f32 %v1688, 1.442695
        %v1703 = vpow.pop %v1702
        %v1704 = vmul.f32 %v1689, 1.442695
        %v1705 = vpow.pop %v1704
        %v1706 = vsel %vm601, %v1691, 0.0
        %1707 = vadd.xlane.f32.xlu0 %v1706
        %v1708 = vpop.xlane.xlu0 %1707
        %v1709 = vsel %vm601, %v1693, 0.0
        %1710 = vadd.xlane.f32.xlu0 %v1709
        %v1711 = vpop.xlane.xlu0 %1710
        %v1712 = vsel %vm601, %v1695, 0.0
        %1713 = vadd.xlane.f32.xlu0 %v1712
        %v1714 = vpop.xlane.xlu0 %1713
        %v1715 = vsel %vm601, %v1697, 0.0
        %1716 = vadd.xlane.f32.xlu0 %v1715
        %v1717 = vpop.xlane.xlu0 %1716
        %v1718 = vsel %vm601, %v1699, 0.0
        %1719 = vadd.xlane.f32.xlu0 %v1718
        %v1720 = vpop.xlane.xlu0 %1719
        %v1721 = vsel %vm601, %v1701, 0.0
        %1722 = vadd.xlane.f32.xlu0 %v1721
        %v1723 = vpop.xlane.xlu0 %1722
        %v1724 = vsel %vm601, %v1703, 0.0
        %1725 = vadd.xlane.f32.xlu0 %v1724
        %v1726 = vpop.xlane.xlu0 %1725
        %v1727 = vsel %vm601, %v1705, 0.0
        %1728 = vadd.xlane.f32.xlu0 %v1727
        %v1729 = vpop.xlane.xlu0 %1728
        %v1730 = vrcp.pop %v1708
        %v1731 = vmul.f32 %v1691, %v1730
        %v1732 = vrcp.pop %v1711
        %v1733 = vmul.f32 %v1693, %v1732
        %v1734 = vrcp.pop %v1714
        %v1735 = vmul.f32 %v1695, %v1734
        %v1736 = vrcp.pop %v1717
        %v1737 = vmul.f32 %v1697, %v1736
        %v1738 = vrcp.pop %v1720
        %v1739 = vmul.f32 %v1699, %v1738
        %v1740 = vrcp.pop %v1723
        %v1741 = vmul.f32 %v1701, %v1740
        %v1742 = vrcp.pop %v1726
        %v1743 = vmul.f32 %v1703, %v1742
        %v1744 = vrcp.pop %v1729
        %v1745 = vmul.f32 %v1705, %v1744
        %1754 = vrot.lane.b32.xlu0 %v1080, 112
        %v1755 = vpop.permute.xlu0 %1754
        %1756 = vrot.lane.b32.xlu0 %v1085, 112
        %v1757 = vpop.permute.xlu0 %1756
        %1758 = vrot.lane.b32.xlu0 %v1090, 112
        %v1759 = vpop.permute.xlu0 %1758
        %1760 = vrot.lane.b32.xlu0 %v1095, 112
        %v1761 = vpop.permute.xlu0 %1760
        %1762 = vrot.lane.b32.xlu0 %v1100, 112
        %v1763 = vpop.permute.xlu0 %1762
        %1764 = vrot.lane.b32.xlu0 %v1105, 112
        %v1765 = vpop.permute.xlu0 %1764
        %1766 = vrot.lane.b32.xlu0 %v1110, 112
        %v1767 = vpop.permute.xlu0 %1766
        %1768 = vrot.lane.b32.xlu0 %v1115, 112
        %v1769 = vpop.permute.xlu0 %1768
        %v1779 = vsel %vm601, %v1731, 0
        %v1782 = vsel %vm601, %v1733, 0
        %v1785 = vsel %vm601, %v1735, 0
        %v1788 = vsel %vm601, %v1737, 0
        %v1791 = vsel %vm601, %v1739, 0
        %v1794 = vsel %vm601, %v1741, 0
        %v1797 = vsel %vm601, %v1743, 0
        %v1800 = vsel %vm601, %v1745, 0
        %1802 = vmatprep.subr.mxu0 0.0
        %1803 = vmatpush1.msra.mxu0 %v1755
        %1804 = vmatprep.subr.mxu0 0.0
        %1805 = vmatpush1.msra.mxu0 %v1757
        %1806 = vmatprep.subr.mxu0 0.0
        %1807 = vmatpush1.msra.mxu0 %v1759
        %1808 = vmatprep.subr.mxu0 0.0
        %1809 = vmatpush1.msra.mxu0 %v1761
        %1810 = vmatprep.subr.mxu0 0.0
        %1811 = vmatpush1.msra.mxu0 %v1763
        %1812 = vmatprep.subr.mxu0 0.0
        %1813 = vmatpush1.msra.mxu0 %v1765
        %1814 = vmatprep.subr.mxu0 0.0
        %1815 = vmatpush1.msra.mxu0 %v1767
        %1816 = vmatprep.subr.mxu0 0.0
        %1817 = vmatpush1.msra.mxu0 %v1769
        %1818 = vmatprep.subr.mxu0 0.0
        %1819 = vmatpush1.msra.mxu0 0.0
        %1820 = vmatprep.subr.mxu0 0.0
        %1821 = vmatpush1.msra.mxu0 0.0
        %1822 = vmatprep.subr.mxu0 0.0
        %1823 = vmatpush1.msra.mxu0 0.0
        %1824 = vmatprep.subr.mxu0 0.0
        %1825 = vmatpush1.msra.mxu0 0.0
        %1826 = vmatprep.subr.mxu0 0.0
        %1827 = vmatpush1.msra.mxu0 0.0
        %1828 = vmatprep.subr.mxu0 0.0
        %1829 = vmatpush1.msra.mxu0 0.0
        %1830 = vmatprep.subr.mxu0 0.0
        %1831 = vmatpush1.msra.mxu0 0.0
        %1832 = vmatprep.subr.mxu0 0.0
        %1833 = vmatpush1.msra.mxu0 0.0
        %1834 = vmatprep.subr.mxu0 0.0
        %1835 = vmatpush1.msra.mxu0 0.0
        %1836 = vmatprep.subr.mxu0 0.0
        %1837 = vmatpush1.msra.mxu0 0.0
        %1838 = vmatprep.subr.mxu0 0.0
        %1839 = vmatpush1.msra.mxu0 0.0
        %1840 = vmatprep.subr.mxu0 0.0
        %1841 = vmatpush1.msra.mxu0 0.0
        %1842 = vmatprep.subr.mxu0 0.0
        %1843 = vmatpush1.msra.mxu0 0.0
        %1844 = vmatprep.subr.mxu0 0.0
        %1845 = vmatpush1.msra.mxu0 0.0
        %1846 = vmatprep.subr.mxu0 0.0
        %1847 = vmatpush1.msra.mxu0 0.0
        %1848 = vmatprep.subr.mxu0 0.0
        %1849 = vmatpush1.msra.mxu0 0.0
        %1850 = vmatprep.subr.mxu0 0.0
        %1851 = vmatpush1.msra.mxu0 0.0
        %1852 = vmatprep.subr.mxu0 0.0
        %1853 = vmatpush1.msra.mxu0 0.0
        %1854 = vmatprep.subr.mxu0 0.0
        %1855 = vmatpush1.msra.mxu0 0.0
        %1856 = vmatprep.subr.mxu0 0.0
        %1857 = vmatpush1.msra.mxu0 0.0
        %1858 = vmatprep.subr.mxu0 0.0
        %1859 = vmatpush1.msra.mxu0 0.0
        %1860 = vmatprep.subr.mxu0 0.0
        %1861 = vmatpush1.msra.mxu0 0.0
        %1862 = vmatprep.subr.mxu0 0.0
        %1863 = vmatpush1.msra.mxu0 0.0
        %1864 = vmatprep.subr.mxu0 0.0
        %1865 = vmatpush1.msra.mxu0 0.0
        %1866 = vmatprep.mubr.f32.mxu0 0.0
        %1867 = vmatmul.mubr.f32.gmra.mrb[0].mxu0 %v1779
        %v1868 = vpop.f32.mrb[0].mxu0
        %v1869 = vadd.f32 0.0, %v1868
        %v1870 = vpop.f32.mrb[0].mxu0
        %1871 = vmatprep.mubr.f32.mxu0 0.0
        %1872 = vmatmul.mubr.f32.gmra.mrb[0].mxu0 %v1782
        %v1873 = vpop.f32.mrb[0].mxu0
        %v1874 = vadd.f32 0.0, %v1873
        %v1875 = vpop.f32.mrb[0].mxu0
        %1876 = vmatprep.mubr.f32.mxu0 0.0
        %1877 = vmatmul.mubr.f32.gmra.mrb[0].mxu0 %v1785
        %v1878 = vpop.f32.mrb[0].mxu0
        %v1879 = vadd.f32 0.0, %v1878
        %v1880 = vpop.f32.mrb[0].mxu0
        %1881 = vmatprep.mubr.f32.mxu0 0.0
        %1882 = vmatmul.mubr.f32.gmra.mrb[0].mxu0 %v1788
        %v1883 = vpop.f32.mrb[0].mxu0
        %v1884 = vadd.f32 0.0, %v1883
        %v1885 = vpop.f32.mrb[0].mxu0
        %1886 = vmatprep.mubr.f32.mxu0 0.0
        %1887 = vmatmul.mubr.f32.gmra.mrb[0].mxu0 %v1791
        %v1888 = vpop.f32.mrb[0].mxu0
        %v1889 = vadd.f32 0.0, %v1888
        %v1890 = vpop.f32.mrb[0].mxu0
        %1891 = vmatprep.mubr.f32.mxu0 0.0
        %1892 = vmatmul.mubr.f32.gmra.mrb[0].mxu0 %v1794
        %v1893 = vpop.f32.mrb[0].mxu0
        %v1894 = vadd.f32 0.0, %v1893
        %v1895 = vpop.f32.mrb[0].mxu0
        %1896 = vmatprep.mubr.f32.mxu0 0.0
        %1897 = vmatmul.mubr.f32.gmra.mrb[0].mxu0 %v1797
        %v1898 = vpop.f32.mrb[0].mxu0
        %v1899 = vadd.f32 0.0, %v1898
        %v1900 = vpop.f32.mrb[0].mxu0
        %1901 = vmatprep.mubr.f32.mxu0 0.0
        %1902 = vmatmul.mubr.f32.gmra.mrb[0].mxu0 %v1800
        %v1903 = vpop.f32.mrb[0].mxu0
        %v1904 = vadd.f32 0.0, %v1903
        %v1905 = vpop.f32.mrb[0].mxu0
        %1906 = vdwg.mxu0
        %1907 = vrot.lane.b32.xlu0 %v854, 96
        %v1908 = vpop.permute.xlu0 %1907
        %1909 = vrot.lane.b32.xlu0 %v859, 96
        %v1910 = vpop.permute.xlu0 %1909
        %1911 = vrot.lane.b32.xlu0 %v864, 96
        %v1912 = vpop.permute.xlu0 %1911
        %1913 = vrot.lane.b32.xlu0 %v869, 96
        %v1914 = vpop.permute.xlu0 %1913
        %1915 = vrot.lane.b32.xlu0 %v874, 96
        %v1916 = vpop.permute.xlu0 %1915
        %1917 = vrot.lane.b32.xlu0 %v879, 96
        %v1918 = vpop.permute.xlu0 %1917
        %1919 = vrot.lane.b32.xlu0 %v884, 96
        %v1920 = vpop.permute.xlu0 %1919
        %1921 = vrot.lane.b32.xlu0 %v889, 96
        %v1922 = vpop.permute.xlu0 %1921
        %1923 = vrot.lane.b32.xlu0 %v967, 96
        %v1924 = vpop.permute.xlu0 %1923
        %1925 = vrot.lane.b32.xlu0 %v972, 96
        %v1926 = vpop.permute.xlu0 %1925
        %1927 = vrot.lane.b32.xlu0 %v977, 96
        %v1928 = vpop.permute.xlu0 %1927
        %1929 = vrot.lane.b32.xlu0 %v982, 96
        %v1930 = vpop.permute.xlu0 %1929
        %1931 = vrot.lane.b32.xlu0 %v987, 96
        %v1932 = vpop.permute.xlu0 %1931
        %1933 = vrot.lane.b32.xlu0 %v992, 96
        %v1934 = vpop.permute.xlu0 %1933
        %1935 = vrot.lane.b32.xlu0 %v997, 96
        %v1936 = vpop.permute.xlu0 %1935
        %1937 = vrot.lane.b32.xlu0 %v1002, 96
        %v1938 = vpop.permute.xlu0 %1937
        %v1939 = vsel %vm1118, %v1908, 0
        %v1941 = vsel %vm1118, %v1910, 0
        %v1943 = vsel %vm1118, %v1912, 0
        %v1945 = vsel %vm1118, %v1914, 0
        %v1947 = vsel %vm1118, %v1916, 0
        %v1949 = vsel %vm1118, %v1918, 0
        %v1951 = vsel %vm1118, %v1920, 0
        %v1953 = vsel %vm1118, %v1922, 0
        %v1955 = vsel %vm1118, %v1924, 0
        %v1957 = vsel %vm1118, %v1926, 0
        %v1959 = vsel %vm1118, %v1928, 0
        %v1961 = vsel %vm1118, %v1930, 0
        %v1963 = vsel %vm1118, %v1932, 0
        %v1965 = vsel %vm1118, %v1934, 0
        %v1967 = vsel %vm1118, %v1936, 0
        %v1969 = vsel %vm1118, %v1938, 0
        %1971 = vmatprep.subr.mxu0 0.0
        %1972 = vmatpush1.xpose.msra.mxu0 %v1955
        %1973 = vmatprep.subr.mxu0 0.0
        %1974 = vmatpush1.xpose.msra.mxu0 %v1957
        %1975 = vmatprep.subr.mxu0 0.0
        %1976 = vmatpush1.xpose.msra.mxu0 %v1959
        %1977 = vmatprep.subr.mxu0 0.0
        %1978 = vmatpush1.xpose.msra.mxu0 %v1961
        %1979 = vmatprep.subr.mxu0 0.0
        %1980 = vmatpush1.xpose.msra.mxu0 %v1963
        %1981 = vmatprep.subr.mxu0 0.0
        %1982 = vmatpush1.xpose.msra.mxu0 %v1965
        %1983 = vmatprep.subr.mxu0 0.0
        %1984 = vmatpush1.xpose.msra.mxu0 %v1967
        %1985 = vmatprep.subr.mxu0 0.0
        %1986 = vmatpush1.xpose.msra.mxu0 %v1969
        %1987 = vmatprep.subr.mxu0 0.0
        %1988 = vmatpush1.xpose.msra.mxu0 0.0
        %1989 = vmatprep.subr.mxu0 0.0
        %1990 = vmatpush1.xpose.msra.mxu0 0.0
        %1991 = vmatprep.subr.mxu0 0.0
        %1992 = vmatpush1.xpose.msra.mxu0 0.0
        %1993 = vmatprep.subr.mxu0 0.0
        %1994 = vmatpush1.xpose.msra.mxu0 0.0
        %1995 = vmatprep.subr.mxu0 0.0
        %1996 = vmatpush1.xpose.msra.mxu0 0.0
        %1997 = vmatprep.subr.mxu0 0.0
        %1998 = vmatpush1.xpose.msra.mxu0 0.0
        %1999 = vmatprep.subr.mxu0 0.0
        %2000 = vmatpush1.xpose.msra.mxu0 0.0
        %2001 = vmatprep.subr.mxu0 0.0
        %2002 = vmatpush1.xpose.msra.mxu0 0.0
        %2003 = vmatprep.subr.mxu0 0.0
        %2004 = vmatpush1.xpose.msra.mxu0 0.0
        %2005 = vmatprep.subr.mxu0 0.0
        %2006 = vmatpush1.xpose.msra.mxu0 0.0
        %2007 = vmatprep.subr.mxu0 0.0
        %2008 = vmatpush1.xpose.msra.mxu0 0.0
        %2009 = vmatprep.subr.mxu0 0.0
        %2010 = vmatpush1.xpose.msra.mxu0 0.0
        %2011 = vmatprep.subr.mxu0 0.0
        %2012 = vmatpush1.xpose.msra.mxu0 0.0
        %2013 = vmatprep.subr.mxu0 0.0
        %2014 = vmatpush1.xpose.msra.mxu0 0.0
        %2015 = vmatprep.subr.mxu0 0.0
        %2016 = vmatpush1.xpose.msra.mxu0 0.0
        %2017 = vmatprep.subr.mxu0 0.0
        %2018 = vmatpush1.xpose.msra.mxu0 0.0
        %2019 = vmatprep.subr.mxu0 0.0
        %2020 = vmatpush1.xpose.msra.mxu0 0.0
        %2021 = vmatprep.subr.mxu0 0.0
        %2022 = vmatpush1.xpose.msra.mxu0 0.0
        %2023 = vmatprep.subr.mxu0 0.0
        %2024 = vmatpush1.xpose.msra.mxu0 0.0
        %2025 = vmatprep.subr.mxu0 0.0
        %2026 = vmatpush1.xpose.msra.mxu0 0.0
        %2027 = vmatprep.subr.mxu0 0.0
        %2028 = vmatpush1.xpose.msra.mxu0 0.0
        %2029 = vmatprep.subr.mxu0 0.0
        %2030 = vmatpush1.xpose.msra.mxu0 0.0
        %2031 = vmatprep.subr.mxu0 0.0
        %2032 = vmatpush1.xpose.msra.mxu0 0.0
        %2033 = vmatprep.subr.mxu0 0.0
        %2034 = vmatpush1.xpose.msra.mxu0 0.0
        %2035 = vmatprep.mubr.f32.mxu0 0.0
        %2036 = vmatmul.mubr.f32.gmra.mrb[0].mxu0 %v1939
        %v2037 = vpop.f32.mrb[0].mxu0
        %v2038 = vadd.f32 0.0, %v2037
        %v2039 = vpop.f32.mrb[0].mxu0
        %2040 = vmatprep.mubr.f32.mxu0 0.0
        %2041 = vmatmul.mubr.f32.gmra.mrb[0].mxu0 %v1941
        %v2042 = vpop.f32.mrb[0].mxu0
        %v2043 = vadd.f32 0.0, %v2042
        %v2044 = vpop.f32.mrb[0].mxu0
        %2045 = vmatprep.mubr.f32.mxu0 0.0
        %2046 = vmatmul.mubr.f32.gmra.mrb[0].mxu0 %v1943
        %v2047 = vpop.f32.mrb[0].mxu0
        %v2048 = vadd.f32 0.0, %v2047
        %v2049 = vpop.f32.mrb[0].mxu0
        %2050 = vmatprep.mubr.f32.mxu0 0.0
        %2051 = vmatmul.mubr.f32.gmra.mrb[0].mxu0 %v1945
        %v2052 = vpop.f32.mrb[0].mxu0
        %v2053 = vadd.f32 0.0, %v2052
        %v2054 = vpop.f32.mrb[0].mxu0
        %2055 = vmatprep.mubr.f32.mxu0 0.0
        %2056 = vmatmul.mubr.f32.gmra.mrb[0].mxu0 %v1947
        %v2057 = vpop.f32.mrb[0].mxu0
        %v2058 = vadd.f32 0.0, %v2057
        %v2059 = vpop.f32.mrb[0].mxu0
        %2060 = vmatprep.mubr.f32.mxu0 0.0
        %2061 = vmatmul.mubr.f32.gmra.mrb[0].mxu0 %v1949
        %v2062 = vpop.f32.mrb[0].mxu0
        %v2063 = vadd.f32 0.0, %v2062
        %v2064 = vpop.f32.mrb[0].mxu0
        %2065 = vmatprep.mubr.f32.mxu0 0.0
        %2066 = vmatmul.mubr.f32.gmra.mrb[0].mxu0 %v1951
        %v2067 = vpop.f32.mrb[0].mxu0
        %v2068 = vadd.f32 0.0, %v2067
        %v2069 = vpop.f32.mrb[0].mxu0
        %2070 = vmatprep.mubr.f32.mxu0 0.0
        %2071 = vmatmul.mubr.f32.gmra.mrb[0].mxu0 %v1953
        %v2072 = vpop.f32.mrb[0].mxu0
        %v2073 = vadd.f32 0.0, %v2072
        %v2074 = vpop.f32.mrb[0].mxu0
        %2075 = vdwg.mxu0
        %v2076 = vsel %vm601, %v2038, -inf
        %2077 = vmax.xlane.f32.xlu0 %v2076
        %v2078 = vpop.xlane.xlu0 %2077
        %v2079 = vsel %vm601, %v2043, -inf
        %2080 = vmax.xlane.f32.xlu0 %v2079
        %v2081 = vpop.xlane.xlu0 %2080
        %v2082 = vsel %vm601, %v2048, -inf
        %2083 = vmax.xlane.f32.xlu0 %v2082
        %v2084 = vpop.xlane.xlu0 %2083
        %v2085 = vsel %vm601, %v2053, -inf
        %2086 = vmax.xlane.f32.xlu0 %v2085
        %v2087 = vpop.xlane.xlu0 %2086
        %v2088 = vsel %vm601, %v2058, -inf
        %2089 = vmax.xlane.f32.xlu0 %v2088
        %v2090 = vpop.xlane.xlu0 %2089
        %v2091 = vsel %vm601, %v2063, -inf
        %2092 = vmax.xlane.f32.xlu0 %v2091
        %v2093 = vpop.xlane.xlu0 %2092
        %v2094 = vsel %vm601, %v2068, -inf
        %2095 = vmax.xlane.f32.xlu0 %v2094
        %v2096 = vpop.xlane.xlu0 %2095
        %v2097 = vsel %vm601, %v2073, -inf
        %2098 = vmax.xlane.f32.xlu0 %v2097
        %v2099 = vpop.xlane.xlu0 %2098
        %v2100 = vsub.f32 %v2038, %v2078
        %v2101 = vsub.f32 %v2043, %v2081
        %v2102 = vsub.f32 %v2048, %v2084
        %v2103 = vsub.f32 %v2053, %v2087
        %v2104 = vsub.f32 %v2058, %v2090
        %v2105 = vsub.f32 %v2063, %v2093
        %v2106 = vsub.f32 %v2068, %v2096
        %v2107 = vsub.f32 %v2073, %v2099
        %v2108 = vmul.f32 %v2100, 1.442695
        %v2109 = vpow.pop %v2108
        %v2110 = vmul.f32 %v2101, 1.442695
        %v2111 = vpow.pop %v2110
        %v2112 = vmul.f32 %v2102, 1.442695
        %v2113 = vpow.pop %v2112
        %v2114 = vmul.f32 %v2103, 1.442695
        %v2115 = vpow.pop %v2114
        %v2116 = vmul.f32 %v2104, 1.442695
        %v2117 = vpow.pop %v2116
        %v2118 = vmul.f32 %v2105, 1.442695
        %v2119 = vpow.pop %v2118
        %v2120 = vmul.f32 %v2106, 1.442695
        %v2121 = vpow.pop %v2120
        %v2122 = vmul.f32 %v2107, 1.442695
        %v2123 = vpow.pop %v2122
        %v2124 = vsel %vm601, %v2109, 0.0
        %2125 = vadd.xlane.f32.xlu0 %v2124
        %v2126 = vpop.xlane.xlu0 %2125
        %v2127 = vsel %vm601, %v2111, 0.0
        %2128 = vadd.xlane.f32.xlu0 %v2127
        %v2129 = vpop.xlane.xlu0 %2128
        %v2130 = vsel %vm601, %v2113, 0.0
        %2131 = vadd.xlane.f32.xlu0 %v2130
        %v2132 = vpop.xlane.xlu0 %2131
        %v2133 = vsel %vm601, %v2115, 0.0
        %2134 = vadd.xlane.f32.xlu0 %v2133
        %v2135 = vpop.xlane.xlu0 %2134
        %v2136 = vsel %vm601, %v2117, 0.0
        %2137 = vadd.xlane.f32.xlu0 %v2136
        %v2138 = vpop.xlane.xlu0 %2137
        %v2139 = vsel %vm601, %v2119, 0.0
        %2140 = vadd.xlane.f32.xlu0 %v2139
        %v2141 = vpop.xlane.xlu0 %2140
        %v2142 = vsel %vm601, %v2121, 0.0
        %2143 = vadd.xlane.f32.xlu0 %v2142
        %v2144 = vpop.xlane.xlu0 %2143
        %v2145 = vsel %vm601, %v2123, 0.0
        %2146 = vadd.xlane.f32.xlu0 %v2145
        %v2147 = vpop.xlane.xlu0 %2146
        %v2148 = vrcp.pop %v2126
        %v2149 = vmul.f32 %v2109, %v2148
        %v2150 = vrcp.pop %v2129
        %v2151 = vmul.f32 %v2111, %v2150
        %v2152 = vrcp.pop %v2132
        %v2153 = vmul.f32 %v2113, %v2152
        %v2154 = vrcp.pop %v2135
        %v2155 = vmul.f32 %v2115, %v2154
        %v2156 = vrcp.pop %v2138
        %v2157 = vmul.f32 %v2117, %v2156
        %v2158 = vrcp.pop %v2141
        %v2159 = vmul.f32 %v2119, %v2158
        %v2160 = vrcp.pop %v2144
        %v2161 = vmul.f32 %v2121, %v2160
        %v2162 = vrcp.pop %v2147
        %v2163 = vmul.f32 %v2123, %v2162
        %2164 = vrot.lane.b32.xlu0 %v1080, 96
        %v2165 = vpop.permute.xlu0 %2164
        %2166 = vrot.lane.b32.xlu0 %v1085, 96
        %v2167 = vpop.permute.xlu0 %2166
        %2168 = vrot.lane.b32.xlu0 %v1090, 96
        %v2169 = vpop.permute.xlu0 %2168
        %2170 = vrot.lane.b32.xlu0 %v1095, 96
        %v2171 = vpop.permute.xlu0 %2170
        %2172 = vrot.lane.b32.xlu0 %v1100, 96
        %v2173 = vpop.permute.xlu0 %2172
        %2174 = vrot.lane.b32.xlu0 %v1105, 96
        %v2175 = vpop.permute.xlu0 %2174
        %2176 = vrot.lane.b32.xlu0 %v1110, 96
        %v2177 = vpop.permute.xlu0 %2176
        %2178 = vrot.lane.b32.xlu0 %v1115, 96
        %v2179 = vpop.permute.xlu0 %2178
        %v2189 = vsel %vm601, %v2149, 0
        %v2192 = vsel %vm601, %v2151, 0
        %v2195 = vsel %vm601, %v2153, 0
        %v2198 = vsel %vm601, %v2155, 0
        %v2201 = vsel %vm601, %v2157, 0
        %v2204 = vsel %vm601, %v2159, 0
        %v2207 = vsel %vm601, %v2161, 0
        %v2210 = vsel %vm601, %v2163, 0
        %2212 = vmatprep.subr.mxu0 0.0
        %2213 = vmatpush1.msra.mxu0 %v2165
        %2214 = vmatprep.subr.mxu0 0.0
        %2215 = vmatpush1.msra.mxu0 %v2167
        %2216 = vmatprep.subr.mxu0 0.0
        %2217 = vmatpush1.msra.mxu0 %v2169
        %2218 = vmatprep.subr.mxu0 0.0
        %2219 = vmatpush1.msra.mxu0 %v2171
        %2220 = vmatprep.subr.mxu0 0.0
        %2221 = vmatpush1.msra.mxu0 %v2173
        %2222 = vmatprep.subr.mxu0 0.0
        %2223 = vmatpush1.msra.mxu0 %v2175
        %2224 = vmatprep.subr.mxu0 0.0
        %2225 = vmatpush1.msra.mxu0 %v2177
        %2226 = vmatprep.subr.mxu0 0.0
        %2227 = vmatpush1.msra.mxu0 %v2179
        %2228 = vmatprep.subr.mxu0 0.0
        %2229 = vmatpush1.msra.mxu0 0.0
        %2230 = vmatprep.subr.mxu0 0.0
        %2231 = vmatpush1.msra.mxu0 0.0
        %2232 = vmatprep.subr.mxu0 0.0
        %2233 = vmatpush1.msra.mxu0 0.0
        %2234 = vmatprep.subr.mxu0 0.0
        %2235 = vmatpush1.msra.mxu0 0.0
        %2236 = vmatprep.subr.mxu0 0.0
        %2237 = vmatpush1.msra.mxu0 0.0
        %2238 = vmatprep.subr.mxu0 0.0
        %2239 = vmatpush1.msra.mxu0 0.0
        %2240 = vmatprep.subr.mxu0 0.0
        %2241 = vmatpush1.msra.mxu0 0.0
        %2242 = vmatprep.subr.mxu0 0.0
        %2243 = vmatpush1.msra.mxu0 0.0
        %2244 = vmatprep.subr.mxu0 0.0
        %2245 = vmatpush1.msra.mxu0 0.0
        %2246 = vmatprep.subr.mxu0 0.0
        %2247 = vmatpush1.msra.mxu0 0.0
        %2248 = vmatprep.subr.mxu0 0.0
        %2249 = vmatpush1.msra.mxu0 0.0
        %2250 = vmatprep.subr.mxu0 0.0
        %2251 = vmatpush1.msra.mxu0 0.0
        %2252 = vmatprep.subr.mxu0 0.0
        %2253 = vmatpush1.msra.mxu0 0.0
        %2254 = vmatprep.subr.mxu0 0.0
        %2255 = vmatpush1.msra.mxu0 0.0
        %2256 = vmatprep.subr.mxu0 0.0
        %2257 = vmatpush1.msra.mxu0 0.0
        %2258 = vmatprep.subr.mxu0 0.0
        %2259 = vmatpush1.msra.mxu0 0.0
        %2260 = vmatprep.subr.mxu0 0.0
        %2261 = vmatpush1.msra.mxu0 0.0
        %2262 = vmatprep.subr.mxu0 0.0
        %2263 = vmatpush1.msra.mxu0 0.0
        %2264 = vmatprep.subr.mxu0 0.0
        %2265 = vmatpush1.msra.mxu0 0.0
        %2266 = vmatprep.subr.mxu0 0.0
        %2267 = vmatpush1.msra.mxu0 0.0
        %2268 = vmatprep.subr.mxu0 0.0
        %2269 = vmatpush1.msra.mxu0 0.0
        %2270 = vmatprep.subr.mxu0 0.0
        %2271 = vmatpush1.msra.mxu0 0.0
        %2272 = vmatprep.subr.mxu0 0.0
        %2273 = vmatpush1.msra.mxu0 0.0
        %2274 = vmatprep.subr.mxu0 0.0
        %2275 = vmatpush1.msra.mxu0 0.0
        %2276 = vmatprep.mubr.f32.mxu0 0.0
        %2277 = vmatmul.mubr.f32.gmra.mrb[0].mxu0 %v2189
        %v2278 = vpop.f32.mrb[0].mxu0
        %v2279 = vadd.f32 0.0, %v2278
        %v2280 = vpop.f32.mrb[0].mxu0
        %2281 = vmatprep.mubr.f32.mxu0 0.0
        %2282 = vmatmul.mubr.f32.gmra.mrb[0].mxu0 %v2192
        %v2283 = vpop.f32.mrb[0].mxu0
        %v2284 = vadd.f32 0.0, %v2283
        %v2285 = vpop.f32.mrb[0].mxu0
        %2286 = vmatprep.mubr.f32.mxu0 0.0
        %2287 = vmatmul.mubr.f32.gmra.mrb[0].mxu0 %v2195
        %v2288 = vpop.f32.mrb[0].mxu0
        %v2289 = vadd.f32 0.0, %v2288
        %v2290 = vpop.f32.mrb[0].mxu0
        %2291 = vmatprep.mubr.f32.mxu0 0.0
        %2292 = vmatmul.mubr.f32.gmra.mrb[0].mxu0 %v2198
        %v2293 = vpop.f32.mrb[0].mxu0
        %v2294 = vadd.f32 0.0, %v2293
        %v2295 = vpop.f32.mrb[0].mxu0
        %2296 = vmatprep.mubr.f32.mxu0 0.0
        %2297 = vmatmul.mubr.f32.gmra.mrb[0].mxu0 %v2201
        %v2298 = vpop.f32.mrb[0].mxu0
        %v2299 = vadd.f32 0.0, %v2298
        %v2300 = vpop.f32.mrb[0].mxu0
        %2301 = vmatprep.mubr.f32.mxu0 0.0
        %2302 = vmatmul.mubr.f32.gmra.mrb[0].mxu0 %v2204
        %v2303 = vpop.f32.mrb[0].mxu0
        %v2304 = vadd.f32 0.0, %v2303
        %v2305 = vpop.f32.mrb[0].mxu0
        %2306 = vmatprep.mubr.f32.mxu0 0.0
        %2307 = vmatmul.mubr.f32.gmra.mrb[0].mxu0 %v2207
        %v2308 = vpop.f32.mrb[0].mxu0
        %v2309 = vadd.f32 0.0, %v2308
        %v2310 = vpop.f32.mrb[0].mxu0
        %2311 = vmatprep.mubr.f32.mxu0 0.0
        %2312 = vmatmul.mubr.f32.gmra.mrb[0].mxu0 %v2210
        %v2313 = vpop.f32.mrb[0].mxu0
        %v2314 = vadd.f32 0.0, %v2313
        %v2315 = vpop.f32.mrb[0].mxu0
        %2316 = vdwg.mxu0
        %2317 = vrot.lane.b32.xlu0 %v854, 80
        %v2318 = vpop.permute.xlu0 %2317
        %2319 = vrot.lane.b32.xlu0 %v859, 80
        %v2320 = vpop.permute.xlu0 %2319
        %2321 = vrot.lane.b32.xlu0 %v864, 80
        %v2322 = vpop.permute.xlu0 %2321
        %2323 = vrot.lane.b32.xlu0 %v869, 80
        %v2324 = vpop.permute.xlu0 %2323
        %2325 = vrot.lane.b32.xlu0 %v874, 80
        %v2326 = vpop.permute.xlu0 %2325
        %2327 = vrot.lane.b32.xlu0 %v879, 80
        %v2328 = vpop.permute.xlu0 %2327
        %2329 = vrot.lane.b32.xlu0 %v884, 80
        %v2330 = vpop.permute.xlu0 %2329
        %2331 = vrot.lane.b32.xlu0 %v889, 80
        %v2332 = vpop.permute.xlu0 %2331
        %2333 = vrot.lane.b32.xlu0 %v967, 80
        %v2334 = vpop.permute.xlu0 %2333
        %2335 = vrot.lane.b32.xlu0 %v972, 80
        %v2336 = vpop.permute.xlu0 %2335
        %2337 = vrot.lane.b32.xlu0 %v977, 80
        %v2338 = vpop.permute.xlu0 %2337
        %2339 = vrot.lane.b32.xlu0 %v982, 80
        %v2340 = vpop.permute.xlu0 %2339
        %2341 = vrot.lane.b32.xlu0 %v987, 80
        %v2342 = vpop.permute.xlu0 %2341
        %2343 = vrot.lane.b32.xlu0 %v992, 80
        %v2344 = vpop.permute.xlu0 %2343
        %2345 = vrot.lane.b32.xlu0 %v997, 80
        %v2346 = vpop.permute.xlu0 %2345
        %2347 = vrot.lane.b32.xlu0 %v1002, 80
        %v2348 = vpop.permute.xlu0 %2347
        %v2349 = vsel %vm1118, %v2318, 0
        %v2351 = vsel %vm1118, %v2320, 0
        %v2353 = vsel %vm1118, %v2322, 0
        %v2355 = vsel %vm1118, %v2324, 0
        %v2357 = vsel %vm1118, %v2326, 0
        %v2359 = vsel %vm1118, %v2328, 0
        %v2361 = vsel %vm1118, %v2330, 0
        %v2363 = vsel %vm1118, %v2332, 0
        %v2365 = vsel %vm1118, %v2334, 0
        %v2367 = vsel %vm1118, %v2336, 0
        %v2369 = vsel %vm1118, %v2338, 0
        %v2371 = vsel %vm1118, %v2340, 0
        %v2373 = vsel %vm1118, %v2342, 0
        %v2375 = vsel %vm1118, %v2344, 0
        %v2377 = vsel %vm1118, %v2346, 0
        %v2379 = vsel %vm1118, %v2348, 0
        %2381 = vmatprep.subr.mxu0 0.0
        %2382 = vmatpush1.xpose.msra.mxu0 %v2365
        %2383 = vmatprep.subr.mxu0 0.0
        %2384 = vmatpush1.xpose.msra.mxu0 %v2367
        %2385 = vmatprep.subr.mxu0 0.0
        %2386 = vmatpush1.xpose.msra.mxu0 %v2369
        %2387 = vmatprep.subr.mxu0 0.0
        %2388 = vmatpush1.xpose.msra.mxu0 %v2371
        %2389 = vmatprep.subr.mxu0 0.0
        %2390 = vmatpush1.xpose.msra.mxu0 %v2373
        %2391 = vmatprep.subr.mxu0 0.0
        %2392 = vmatpush1.xpose.msra.mxu0 %v2375
        %2393 = vmatprep.subr.mxu0 0.0
        %2394 = vmatpush1.xpose.msra.mxu0 %v2377
        %2395 = vmatprep.subr.mxu0 0.0
        %2396 = vmatpush1.xpose.msra.mxu0 %v2379
        %2397 = vmatprep.subr.mxu0 0.0
        %2398 = vmatpush1.xpose.msra.mxu0 0.0
        %2399 = vmatprep.subr.mxu0 0.0
        %2400 = vmatpush1.xpose.msra.mxu0 0.0
        %2401 = vmatprep.subr.mxu0 0.0
        %2402 = vmatpush1.xpose.msra.mxu0 0.0
        %2403 = vmatprep.subr.mxu0 0.0
        %2404 = vmatpush1.xpose.msra.mxu0 0.0
        %2405 = vmatprep.subr.mxu0 0.0
        %2406 = vmatpush1.xpose.msra.mxu0 0.0
        %2407 = vmatprep.subr.mxu0 0.0
        %2408 = vmatpush1.xpose.msra.mxu0 0.0
        %2409 = vmatprep.subr.mxu0 0.0
        %2410 = vmatpush1.xpose.msra.mxu0 0.0
        %2411 = vmatprep.subr.mxu0 0.0
        %2412 = vmatpush1.xpose.msra.mxu0 0.0
        %2413 = vmatprep.subr.mxu0 0.0
        %2414 = vmatpush1.xpose.msra.mxu0 0.0
        %2415 = vmatprep.subr.mxu0 0.0
        %2416 = vmatpush1.xpose.msra.mxu0 0.0
        %2417 = vmatprep.subr.mxu0 0.0
        %2418 = vmatpush1.xpose.msra.mxu0 0.0
        %2419 = vmatprep.subr.mxu0 0.0
        %2420 = vmatpush1.xpose.msra.mxu0 0.0
        %2421 = vmatprep.subr.mxu0 0.0
        %2422 = vmatpush1.xpose.msra.mxu0 0.0
        %2423 = vmatprep.subr.mxu0 0.0
        %2424 = vmatpush1.xpose.msra.mxu0 0.0
        %2425 = vmatprep.subr.mxu0 0.0
        %2426 = vmatpush1.xpose.msra.mxu0 0.0
        %2427 = vmatprep.subr.mxu0 0.0
        %2428 = vmatpush1.xpose.msra.mxu0 0.0
        %2429 = vmatprep.subr.mxu0 0.0
        %2430 = vmatpush1.xpose.msra.mxu0 0.0
        %2431 = vmatprep.subr.mxu0 0.0
        %2432 = vmatpush1.xpose.msra.mxu0 0.0
        %2433 = vmatprep.subr.mxu0 0.0
        %2434 = vmatpush1.xpose.msra.mxu0 0.0
        %2435 = vmatprep.subr.mxu0 0.0
        %2436 = vmatpush1.xpose.msra.mxu0 0.0
        %2437 = vmatprep.subr.mxu0 0.0
        %2438 = vmatpush1.xpose.msra.mxu0 0.0
        %2439 = vmatprep.subr.mxu0 0.0
        %2440 = vmatpush1.xpose.msra.mxu0 0.0
        %2441 = vmatprep.subr.mxu0 0.0
        %2442 = vmatpush1.xpose.msra.mxu0 0.0
        %2443 = vmatprep.subr.mxu0 0.0
        %2444 = vmatpush1.xpose.msra.mxu0 0.0
        %2445 = vmatprep.mubr.f32.mxu0 0.0
        %2446 = vmatmul.mubr.f32.gmra.mrb[0].mxu0 %v2349
        %v2447 = vpop.f32.mrb[0].mxu0
        %v2448 = vadd.f32 0.0, %v2447
        %v2449 = vpop.f32.mrb[0].mxu0
        %2450 = vmatprep.mubr.f32.mxu0 0.0
        %2451 = vmatmul.mubr.f32.gmra.mrb[0].mxu0 %v2351
        %v2452 = vpop.f32.mrb[0].mxu0
        %v2453 = vadd.f32 0.0, %v2452
        %v2454 = vpop.f32.mrb[0].mxu0
        %2455 = vmatprep.mubr.f32.mxu0 0.0
        %2456 = vmatmul.mubr.f32.gmra.mrb[0].mxu0 %v2353
        %v2457 = vpop.f32.mrb[0].mxu0
        %v2458 = vadd.f32 0.0, %v2457
        %v2459 = vpop.f32.mrb[0].mxu0
        %2460 = vmatprep.mubr.f32.mxu0 0.0
        %2461 = vmatmul.mubr.f32.gmra.mrb[0].mxu0 %v2355
        %v2462 = vpop.f32.mrb[0].mxu0
        %v2463 = vadd.f32 0.0, %v2462
        %v2464 = vpop.f32.mrb[0].mxu0
        %2465 = vmatprep.mubr.f32.mxu0 0.0
        %2466 = vmatmul.mubr.f32.gmra.mrb[0].mxu0 %v2357
        %v2467 = vpop.f32.mrb[0].mxu0
        %v2468 = vadd.f32 0.0, %v2467
        %v2469 = vpop.f32.mrb[0].mxu0
        %2470 = vmatprep.mubr.f32.mxu0 0.0
        %2471 = vmatmul.mubr.f32.gmra.mrb[0].mxu0 %v2359
        %v2472 = vpop.f32.mrb[0].mxu0
        %v2473 = vadd.f32 0.0, %v2472
        %v2474 = vpop.f32.mrb[0].mxu0
        %2475 = vmatprep.mubr.f32.mxu0 0.0
        %2476 = vmatmul.mubr.f32.gmra.mrb[0].mxu0 %v2361
        %v2477 = vpop.f32.mrb[0].mxu0
        %v2478 = vadd.f32 0.0, %v2477
        %v2479 = vpop.f32.mrb[0].mxu0
        %2480 = vmatprep.mubr.f32.mxu0 0.0
        %2481 = vmatmul.mubr.f32.gmra.mrb[0].mxu0 %v2363
        %v2482 = vpop.f32.mrb[0].mxu0
        %v2483 = vadd.f32 0.0, %v2482
        %v2484 = vpop.f32.mrb[0].mxu0
        %2485 = vdwg.mxu0
        %v2486 = vsel %vm601, %v2448, -inf
        %2487 = vmax.xlane.f32.xlu0 %v2486
        %v2488 = vpop.xlane.xlu0 %2487
        %v2489 = vsel %vm601, %v2453, -inf
        %2490 = vmax.xlane.f32.xlu0 %v2489
        %v2491 = vpop.xlane.xlu0 %2490
        %v2492 = vsel %vm601, %v2458, -inf
        %2493 = vmax.xlane.f32.xlu0 %v2492
        %v2494 = vpop.xlane.xlu0 %2493
        %v2495 = vsel %vm601, %v2463, -inf
        %2496 = vmax.xlane.f32.xlu0 %v2495
        %v2497 = vpop.xlane.xlu0 %2496
        %v2498 = vsel %vm601, %v2468, -inf
        %2499 = vmax.xlane.f32.xlu0 %v2498
        %v2500 = vpop.xlane.xlu0 %2499
        %v2501 = vsel %vm601, %v2473, -inf
        %2502 = vmax.xlane.f32.xlu0 %v2501
        %v2503 = vpop.xlane.xlu0 %2502
        %v2504 = vsel %vm601, %v2478, -inf
        %2505 = vmax.xlane.f32.xlu0 %v2504
        %v2506 = vpop.xlane.xlu0 %2505
        %v2507 = vsel %vm601, %v2483, -inf
        %2508 = vmax.xlane.f32.xlu0 %v2507
        %v2509 = vpop.xlane.xlu0 %2508
        %v2510 = vsub.f32 %v2448, %v2488
        %v2511 = vsub.f32 %v2453, %v2491
        %v2512 = vsub.f32 %v2458, %v2494
        %v2513 = vsub.f32 %v2463, %v2497
        %v2514 = vsub.f32 %v2468, %v2500
        %v2515 = vsub.f32 %v2473, %v2503
        %v2516 = vsub.f32 %v2478, %v2506
        %v2517 = vsub.f32 %v2483, %v2509
        %v2518 = vmul.f32 %v2510, 1.442695
        %v2519 = vpow.pop %v2518
        %v2520 = vmul.f32 %v2511, 1.442695
        %v2521 = vpow.pop %v2520
        %v2522 = vmul.f32 %v2512, 1.442695
        %v2523 = vpow.pop %v2522
        %v2524 = vmul.f32 %v2513, 1.442695
        %v2525 = vpow.pop %v2524
        %v2526 = vmul.f32 %v2514, 1.442695
        %v2527 = vpow.pop %v2526
        %v2528 = vmul.f32 %v2515, 1.442695
        %v2529 = vpow.pop %v2528
        %v2530 = vmul.f32 %v2516, 1.442695
        %v2531 = vpow.pop %v2530
        %v2532 = vmul.f32 %v2517, 1.442695
        %v2533 = vpow.pop %v2532
        %v2534 = vsel %vm601, %v2519, 0.0
        %2535 = vadd.xlane.f32.xlu0 %v2534
        %v2536 = vpop.xlane.xlu0 %2535
        %v2537 = vsel %vm601, %v2521, 0.0
        %2538 = vadd.xlane.f32.xlu0 %v2537
        %v2539 = vpop.xlane.xlu0 %2538
        %v2540 = vsel %vm601, %v2523, 0.0
        %2541 = vadd.xlane.f32.xlu0 %v2540
        %v2542 = vpop.xlane.xlu0 %2541
        %v2543 = vsel %vm601, %v2525, 0.0
        %2544 = vadd.xlane.f32.xlu0 %v2543
        %v2545 = vpop.xlane.xlu0 %2544
        %v2546 = vsel %vm601, %v2527, 0.0
        %2547 = vadd.xlane.f32.xlu0 %v2546
        %v2548 = vpop.xlane.xlu0 %2547
        %v2549 = vsel %vm601, %v2529, 0.0
        %2550 = vadd.xlane.f32.xlu0 %v2549
        %v2551 = vpop.xlane.xlu0 %2550
        %v2552 = vsel %vm601, %v2531, 0.0
        %2553 = vadd.xlane.f32.xlu0 %v2552
        %v2554 = vpop.xlane.xlu0 %2553
        %v2555 = vsel %vm601, %v2533, 0.0
        %2556 = vadd.xlane.f32.xlu0 %v2555
        %v2557 = vpop.xlane.xlu0 %2556
        %v2558 = vrcp.pop %v2536
        %v2559 = vmul.f32 %v2519, %v2558
        %v2560 = vrcp.pop %v2539
        %v2561 = vmul.f32 %v2521, %v2560
        %v2562 = vrcp.pop %v2542
        %v2563 = vmul.f32 %v2523, %v2562
        %v2564 = vrcp.pop %v2545
        %v2565 = vmul.f32 %v2525, %v2564
        %v2566 = vrcp.pop %v2548
        %v2567 = vmul.f32 %v2527, %v2566
        %v2568 = vrcp.pop %v2551
        %v2569 = vmul.f32 %v2529, %v2568
        %v2570 = vrcp.pop %v2554
        %v2571 = vmul.f32 %v2531, %v2570
        %v2572 = vrcp.pop %v2557
        %v2573 = vmul.f32 %v2533, %v2572
        %2574 = vrot.lane.b32.xlu0 %v1080, 80
        %v2575 = vpop.permute.xlu0 %2574
        %2576 = vrot.lane.b32.xlu0 %v1085, 80
        %v2577 = vpop.permute.xlu0 %2576
        %2578 = vrot.lane.b32.xlu0 %v1090, 80
        %v2579 = vpop.permute.xlu0 %2578
        %2580 = vrot.lane.b32.xlu0 %v1095, 80
        %v2581 = vpop.permute.xlu0 %2580
        %2582 = vrot.lane.b32.xlu0 %v1100, 80
        %v2583 = vpop.permute.xlu0 %2582
        %2584 = vrot.lane.b32.xlu0 %v1105, 80
        %v2585 = vpop.permute.xlu0 %2584
        %2586 = vrot.lane.b32.xlu0 %v1110, 80
        %v2587 = vpop.permute.xlu0 %2586
        %2588 = vrot.lane.b32.xlu0 %v1115, 80
        %v2589 = vpop.permute.xlu0 %2588
        %v2599 = vsel %vm601, %v2559, 0
        %v2602 = vsel %vm601, %v2561, 0
        %v2605 = vsel %vm601, %v2563, 0
        %v2608 = vsel %vm601, %v2565, 0
        %v2611 = vsel %vm601, %v2567, 0
        %v2614 = vsel %vm601, %v2569, 0
        %v2617 = vsel %vm601, %v2571, 0
        %v2620 = vsel %vm601, %v2573, 0
        %2622 = vmatprep.subr.mxu0 0.0
        %2623 = vmatpush1.msra.mxu0 %v2575
        %2624 = vmatprep.subr.mxu0 0.0
        %2625 = vmatpush1.msra.mxu0 %v2577
        %2626 = vmatprep.subr.mxu0 0.0
        %2627 = vmatpush1.msra.mxu0 %v2579
        %2628 = vmatprep.subr.mxu0 0.0
        %2629 = vmatpush1.msra.mxu0 %v2581
        %2630 = vmatprep.subr.mxu0 0.0
        %2631 = vmatpush1.msra.mxu0 %v2583
        %2632 = vmatprep.subr.mxu0 0.0
        %2633 = vmatpush1.msra.mxu0 %v2585
        %2634 = vmatprep.subr.mxu0 0.0
        %2635 = vmatpush1.msra.mxu0 %v2587
        %2636 = vmatprep.subr.mxu0 0.0
        %2637 = vmatpush1.msra.mxu0 %v2589
        %2638 = vmatprep.subr.mxu0 0.0
        %2639 = vmatpush1.msra.mxu0 0.0
        %2640 = vmatprep.subr.mxu0 0.0
        %2641 = vmatpush1.msra.mxu0 0.0
        %2642 = vmatprep.subr.mxu0 0.0
        %2643 = vmatpush1.msra.mxu0 0.0
        %2644 = vmatprep.subr.mxu0 0.0
        %2645 = vmatpush1.msra.mxu0 0.0
        %2646 = vmatprep.subr.mxu0 0.0
        %2647 = vmatpush1.msra.mxu0 0.0
        %2648 = vmatprep.subr.mxu0 0.0
        %2649 = vmatpush1.msra.mxu0 0.0
        %2650 = vmatprep.subr.mxu0 0.0
        %2651 = vmatpush1.msra.mxu0 0.0
        %2652 = vmatprep.subr.mxu0 0.0
        %2653 = vmatpush1.msra.mxu0 0.0
        %2654 = vmatprep.subr.mxu0 0.0
        %2655 = vmatpush1.msra.mxu0 0.0
        %2656 = vmatprep.subr.mxu0 0.0
        %2657 = vmatpush1.msra.mxu0 0.0
        %2658 = vmatprep.subr.mxu0 0.0
        %2659 = vmatpush1.msra.mxu0 0.0
        %2660 = vmatprep.subr.mxu0 0.0
        %2661 = vmatpush1.msra.mxu0 0.0
        %2662 = vmatprep.subr.mxu0 0.0
        %2663 = vmatpush1.msra.mxu0 0.0
        %2664 = vmatprep.subr.mxu0 0.0
        %2665 = vmatpush1.msra.mxu0 0.0
        %2666 = vmatprep.subr.mxu0 0.0
        %2667 = vmatpush1.msra.mxu0 0.0
        %2668 = vmatprep.subr.mxu0 0.0
        %2669 = vmatpush1.msra.mxu0 0.0
        %2670 = vmatprep.subr.mxu0 0.0
        %2671 = vmatpush1.msra.mxu0 0.0
        %2672 = vmatprep.subr.mxu0 0.0
        %2673 = vmatpush1.msra.mxu0 0.0
        %2674 = vmatprep.subr.mxu0 0.0
        %2675 = vmatpush1.msra.mxu0 0.0
        %2676 = vmatprep.subr.mxu0 0.0
        %2677 = vmatpush1.msra.mxu0 0.0
        %2678 = vmatprep.subr.mxu0 0.0
        %2679 = vmatpush1.msra.mxu0 0.0
        %2680 = vmatprep.subr.mxu0 0.0
        %2681 = vmatpush1.msra.mxu0 0.0
        %2682 = vmatprep.subr.mxu0 0.0
        %2683 = vmatpush1.msra.mxu0 0.0
        %2684 = vmatprep.subr.mxu0 0.0
        %2685 = vmatpush1.msra.mxu0 0.0
        %2686 = vmatprep.mubr.f32.mxu0 0.0
        %2687 = vmatmul.mubr.f32.gmra.mrb[0].mxu0 %v2599
        %v2688 = vpop.f32.mrb[0].mxu0
        %v2689 = vadd.f32 0.0, %v2688
        %v2690 = vpop.f32.mrb[0].mxu0
        %2691 = vmatprep.mubr.f32.mxu0 0.0
        %2692 = vmatmul.mubr.f32.gmra.mrb[0].mxu0 %v2602
        %v2693 = vpop.f32.mrb[0].mxu0
        %v2694 = vadd.f32 0.0, %v2693
        %v2695 = vpop.f32.mrb[0].mxu0
        %2696 = vmatprep.mubr.f32.mxu0 0.0
        %2697 = vmatmul.mubr.f32.gmra.mrb[0].mxu0 %v2605
        %v2698 = vpop.f32.mrb[0].mxu0
        %v2699 = vadd.f32 0.0, %v2698
        %v2700 = vpop.f32.mrb[0].mxu0
        %2701 = vmatprep.mubr.f32.mxu0 0.0
        %2702 = vmatmul.mubr.f32.gmra.mrb[0].mxu0 %v2608
        %v2703 = vpop.f32.mrb[0].mxu0
        %v2704 = vadd.f32 0.0, %v2703
        %v2705 = vpop.f32.mrb[0].mxu0
        %2706 = vmatprep.mubr.f32.mxu0 0.0
        %2707 = vmatmul.mubr.f32.gmra.mrb[0].mxu0 %v2611
        %v2708 = vpop.f32.mrb[0].mxu0
        %v2709 = vadd.f32 0.0, %v2708
        %v2710 = vpop.f32.mrb[0].mxu0
        %2711 = vmatprep.mubr.f32.mxu0 0.0
        %2712 = vmatmul.mubr.f32.gmra.mrb[0].mxu0 %v2614
        %v2713 = vpop.f32.mrb[0].mxu0
        %v2714 = vadd.f32 0.0, %v2713
        %v2715 = vpop.f32.mrb[0].mxu0
        %2716 = vmatprep.mubr.f32.mxu0 0.0
        %2717 = vmatmul.mubr.f32.gmra.mrb[0].mxu0 %v2617
        %v2718 = vpop.f32.mrb[0].mxu0
        %v2719 = vadd.f32 0.0, %v2718
        %v2720 = vpop.f32.mrb[0].mxu0
        %2721 = vmatprep.mubr.f32.mxu0 0.0
        %2722 = vmatmul.mubr.f32.gmra.mrb[0].mxu0 %v2620
        %v2723 = vpop.f32.mrb[0].mxu0
        %v2724 = vadd.f32 0.0, %v2723
        %v2725 = vpop.f32.mrb[0].mxu0
        %2726 = vdwg.mxu0
        %2735 = vrot.lane.b32.xlu0 %v1869, 16
        %v2736 = vpop.permute.xlu0 %2735
        %2737 = vrot.lane.b32.xlu0 %v1874, 16
        %v2738 = vpop.permute.xlu0 %2737
        %2739 = vrot.lane.b32.xlu0 %v1879, 16
        %v2740 = vpop.permute.xlu0 %2739
        %2741 = vrot.lane.b32.xlu0 %v1884, 16
        %v2742 = vpop.permute.xlu0 %2741
        %2743 = vrot.lane.b32.xlu0 %v1889, 16
        %v2744 = vpop.permute.xlu0 %2743
        %2745 = vrot.lane.b32.xlu0 %v1894, 16
        %v2746 = vpop.permute.xlu0 %2745
        %2747 = vrot.lane.b32.xlu0 %v1899, 16
        %v2748 = vpop.permute.xlu0 %2747
        %2749 = vrot.lane.b32.xlu0 %v1904, 16
        %v2750 = vpop.permute.xlu0 %2749
        %2767 = vrot.lane.b32.xlu0 %v2279, 32
        %v2768 = vpop.permute.xlu0 %2767
        %2769 = vrot.lane.b32.xlu0 %v2284, 32
        %v2770 = vpop.permute.xlu0 %2769
        %2771 = vrot.lane.b32.xlu0 %v2289, 32
        %v2772 = vpop.permute.xlu0 %2771
        %2773 = vrot.lane.b32.xlu0 %v2294, 32
        %v2774 = vpop.permute.xlu0 %2773
        %2775 = vrot.lane.b32.xlu0 %v2299, 32
        %v2776 = vpop.permute.xlu0 %2775
        %2777 = vrot.lane.b32.xlu0 %v2304, 32
        %v2778 = vpop.permute.xlu0 %2777
        %2779 = vrot.lane.b32.xlu0 %v2309, 32
        %v2780 = vpop.permute.xlu0 %2779
        %2781 = vrot.lane.b32.xlu0 %v2314, 32
        %v2782 = vpop.permute.xlu0 %2781
        %2799 = vrot.lane.b32.xlu0 %v2689, 48
        %v2800 = vpop.permute.xlu0 %2799
        %2801 = vrot.lane.b32.xlu0 %v2694, 48
        %v2802 = vpop.permute.xlu0 %2801
        %2803 = vrot.lane.b32.xlu0 %v2699, 48
        %v2804 = vpop.permute.xlu0 %2803
        %2805 = vrot.lane.b32.xlu0 %v2704, 48
        %v2806 = vpop.permute.xlu0 %2805
        %2807 = vrot.lane.b32.xlu0 %v2709, 48
        %v2808 = vpop.permute.xlu0 %2807
        %2809 = vrot.lane.b32.xlu0 %v2714, 48
        %v2810 = vpop.permute.xlu0 %2809
        %2811 = vrot.lane.b32.xlu0 %v2719, 48
        %v2812 = vpop.permute.xlu0 %2811
        %2813 = vrot.lane.b32.xlu0 %v2724, 48
        %v2814 = vpop.permute.xlu0 %2813
        %v2823 = vsel %vm1118, %v1451, %v2736
        %v2824 = vsel %vm1118, %v1456, %v2738
        %v2825 = vsel %vm1118, %v1461, %v2740
        %v2826 = vsel %vm1118, %v1466, %v2742
        %v2827 = vsel %vm1118, %v1471, %v2744
        %v2828 = vsel %vm1118, %v1476, %v2746
        %v2829 = vsel %vm1118, %v1481, %v2748
        %v2830 = vsel %vm1118, %v1486, %v2750
        %vm2831 = vcmask 261120
        %v2832 = vsel %vm2831, %v2823, %v2768
        %v2833 = vsel %vm2831, %v2824, %v2770
        %v2834 = vsel %vm2831, %v2825, %v2772
        %v2835 = vsel %vm2831, %v2826, %v2774
        %v2836 = vsel %vm2831, %v2827, %v2776
        %v2837 = vsel %vm2831, %v2828, %v2778
        %v2838 = vsel %vm2831, %v2829, %v2780
        %v2839 = vsel %vm2831, %v2830, %v2782
        %vm2840 = vcmask 392192
        %v2841 = vsel %vm2840, %v2832, %v2800
        %v2842 = vsel %vm2840, %v2833, %v2802
        %v2843 = vsel %vm2840, %v2834, %v2804
        %v2844 = vsel %vm2840, %v2835, %v2806
        %v2845 = vsel %vm2840, %v2836, %v2808
        %v2846 = vsel %vm2840, %v2837, %v2810
        %v2847 = vsel %vm2840, %v2838, %v2812
        %v2848 = vsel %vm2840, %v2839, %v2814
        %v2849 = vld [vmem:[#allocation7] sm:$0xff]
        %v2850 = vld [vmem:[#allocation7 + $0x8] sm:$0xff]
        %v2851 = vld [vmem:[#allocation7 + $0x10] sm:$0xff]
        %v2852 = vld [vmem:[#allocation7 + $0x18] sm:$0xff]
        %v2853 = vld [vmem:[#allocation7 + $0x20] sm:$0xff]
        %v2854 = vld [vmem:[#allocation7 + $0x28] sm:$0xff]
        %v2855 = vld [vmem:[#allocation7 + $0x30] sm:$0xff]
        %v2856 = vld [vmem:[#allocation7 + $0x38] sm:$0xff]
        %2858 = vset.pattern.permute.xlu0 0
        %2859 = vperm.xlu0 %2858, %v593
        %v2860 = vpop.permute.xlu0 %2859
        %2863 = vset.pattern.permute.xlu0 0
        %2864 = vperm.xlu0 %2863, %v594
        %v2865 = vpop.permute.xlu0 %2864
        %2868 = vset.pattern.permute.xlu0 0
        %2869 = vperm.xlu0 %2868, %v595
        %v2870 = vpop.permute.xlu0 %2869
        %2873 = vset.pattern.permute.xlu0 0
        %2874 = vperm.xlu0 %2873, %v596
        %v2875 = vpop.permute.xlu0 %2874
        %2878 = vset.pattern.permute.xlu0 0
        %2879 = vperm.xlu0 %2878, %v597
        %v2880 = vpop.permute.xlu0 %2879
        %2883 = vset.pattern.permute.xlu0 0
        %2884 = vperm.xlu0 %2883, %v598
        %v2885 = vpop.permute.xlu0 %2884
        %2888 = vset.pattern.permute.xlu0 0
        %2889 = vperm.xlu0 %2888, %v599
        %v2890 = vpop.permute.xlu0 %2889
        %2893 = vset.pattern.permute.xlu0 0
        %2894 = vperm.xlu0 %2893, %v600
        %v2895 = vpop.permute.xlu0 %2894
        %2897 = vxpose.xlu0.b32.start [1/16] %v2849, 128
        %2898 = vxpose.xlu0.b32.cont [2/16] %v2850, 128
        %2899 = vxpose.xlu0.b32.cont [3/16] %v2851, 128
        %2900 = vxpose.xlu0.b32.cont [4/16] %v2852, 128
        %2901 = vxpose.xlu0.b32.cont [5/16] %v2853, 128
        %2902 = vxpose.xlu0.b32.cont [6/16] %v2854, 128
        %2903 = vxpose.xlu0.b32.cont [7/16] %v2855, 128
        %2904 = vxpose.xlu0.b32.cont [8/16] %v2856, 128
        %2905 = vxpose.xlu0.b32.cont [9/16] 0.0, 128
        %2906 = vxpose.xlu0.b32.cont [10/16] 0.0, 128
        %2907 = vxpose.xlu0.b32.cont [11/16] 0.0, 128
        %2908 = vxpose.xlu0.b32.cont [12/16] 0.0, 128
        %2909 = vxpose.xlu0.b32.cont [13/16] 0.0, 128
        %2910 = vxpose.xlu0.b32.cont [14/16] 0.0, 128
        %2911 = vxpose.xlu0.b32.cont [15/16] 0.0, 128
        %2912 = vxpose.xlu0.b32.end [16/16] 0.0, 128
        %v2913 = vpop.trf.xlu0
        %v2914 = vpop.trf.xlu0
        %v2915 = vpop.trf.xlu0
        %v2916 = vpop.trf.xlu0
        %v2917 = vpop.trf.xlu0
        %v2918 = vpop.trf.xlu0
        %v2919 = vpop.trf.xlu0
        %v2920 = vpop.trf.xlu0
        %v2921 = vpop.trf.xlu0
        %v2922 = vpop.trf.xlu0
        %v2923 = vpop.trf.xlu0
        %v2924 = vpop.trf.xlu0
        %v2925 = vpop.trf.xlu0
        %v2926 = vpop.trf.xlu0
        %v2927 = vpop.trf.xlu0
        %v2928 = vpop.trf.xlu0
        %v2930 = vsel %vm601, %v2913, 0
        %v2933 = vsel %vm601, %v2914, 0
        %v2936 = vsel %vm601, %v2915, 0
        %v2939 = vsel %vm601, %v2916, 0
        %v2942 = vsel %vm601, %v2917, 0
        %v2945 = vsel %vm601, %v2918, 0
        %v2948 = vsel %vm601, %v2919, 0
        %v2951 = vsel %vm601, %v2920, 0
        %v2954 = vsel %vm601, %v2841, 0
        %v2957 = vsel %vm601, %v2842, 0
        %v2960 = vsel %vm601, %v2843, 0
        %v2963 = vsel %vm601, %v2844, 0
        %v2966 = vsel %vm601, %v2845, 0
        %v2969 = vsel %vm601, %v2846, 0
        %v2972 = vsel %vm601, %v2847, 0
        %v2975 = vsel %vm601, %v2848, 0
        %2977 = vmatprep.subr.mxu0 0.0
        %2978 = vmatpush1.xpose.msra.mxu0 %v2954
        %2979 = vmatprep.subr.mxu0 0.0
        %2980 = vmatpush1.xpose.msra.mxu0 %v2957
        %2981 = vmatprep.subr.mxu0 0.0
        %2982 = vmatpush1.xpose.msra.mxu0 %v2960
        %2983 = vmatprep.subr.mxu0 0.0
        %2984 = vmatpush1.xpose.msra.mxu0 %v2963
        %2985 = vmatprep.subr.mxu0 0.0
        %2986 = vmatpush1.xpose.msra.mxu0 %v2966
        %2987 = vmatprep.subr.mxu0 0.0
        %2988 = vmatpush1.xpose.msra.mxu0 %v2969
        %2989 = vmatprep.subr.mxu0 0.0
        %2990 = vmatpush1.xpose.msra.mxu0 %v2972
        %2991 = vmatprep.subr.mxu0 0.0
        %2992 = vmatpush1.xpose.msra.mxu0 %v2975
        %2993 = vmatprep.subr.mxu0 0.0
        %2994 = vmatpush1.xpose.msra.mxu0 0.0
        %2995 = vmatprep.subr.mxu0 0.0
        %2996 = vmatpush1.xpose.msra.mxu0 0.0
        %2997 = vmatprep.subr.mxu0 0.0
        %2998 = vmatpush1.xpose.msra.mxu0 0.0
        %2999 = vmatprep.subr.mxu0 0.0
        %3000 = vmatpush1.xpose.msra.mxu0 0.0
        %3001 = vmatprep.subr.mxu0 0.0
        %3002 = vmatpush1.xpose.msra.mxu0 0.0
        %3003 = vmatprep.subr.mxu0 0.0
        %3004 = vmatpush1.xpose.msra.mxu0 0.0
        %3005 = vmatprep.subr.mxu0 0.0
        %3006 = vmatpush1.xpose.msra.mxu0 0.0
        %3007 = vmatprep.subr.mxu0 0.0
        %3008 = vmatpush1.xpose.msra.mxu0 0.0
        %3009 = vmatprep.subr.mxu0 0.0
        %3010 = vmatpush1.xpose.msra.mxu0 0.0
        %3011 = vmatprep.subr.mxu0 0.0
        %3012 = vmatpush1.xpose.msra.mxu0 0.0
        %3013 = vmatprep.subr.mxu0 0.0
        %3014 = vmatpush1.xpose.msra.mxu0 0.0
        %3015 = vmatprep.subr.mxu0 0.0
        %3016 = vmatpush1.xpose.msra.mxu0 0.0
        %3017 = vmatprep.subr.mxu0 0.0
        %3018 = vmatpush1.xpose.msra.mxu0 0.0
        %3019 = vmatprep.subr.mxu0 0.0
        %3020 = vmatpush1.xpose.msra.mxu0 0.0
        %3021 = vmatprep.subr.mxu0 0.0
        %3022 = vmatpush1.xpose.msra.mxu0 0.0
        %3023 = vmatprep.subr.mxu0 0.0
        %3024 = vmatpush1.xpose.msra.mxu0 0.0
        %3025 = vmatprep.subr.mxu0 0.0
        %3026 = vmatpush1.xpose.msra.mxu0 0.0
        %3027 = vmatprep.subr.mxu0 0.0
        %3028 = vmatpush1.xpose.msra.mxu0 0.0
        %3029 = vmatprep.subr.mxu0 0.0
        %3030 = vmatpush1.xpose.msra.mxu0 0.0
        %3031 = vmatprep.subr.mxu0 0.0
        %3032 = vmatpush1.xpose.msra.mxu0 0.0
        %3033 = vmatprep.subr.mxu0 0.0
        %3034 = vmatpush1.xpose.msra.mxu0 0.0
        %3035 = vmatprep.subr.mxu0 0.0
        %3036 = vmatpush1.xpose.msra.mxu0 0.0
        %3037 = vmatprep.subr.mxu0 0.0
        %3038 = vmatpush1.xpose.msra.mxu0 0.0
        %3039 = vmatprep.subr.mxu0 0.0
        %3040 = vmatpush1.xpose.msra.mxu0 0.0
        %3041 = vmatprep.mubr.f32.mxu0 0.0
        %3042 = vmatmul.mubr.f32.gmra.mrb[0].mxu0 %v2930
        %v3043 = vpop.f32.mrb[0].mxu0
        %v3044 = vadd.f32 %v2860, %v3043
        %v3045 = vpop.f32.mrb[0].mxu0
        %3046 = vmatprep.mubr.f32.mxu0 0.0
        %3047 = vmatmul.mubr.f32.gmra.mrb[0].mxu0 %v2933
        %v3048 = vpop.f32.mrb[0].mxu0
        %v3049 = vadd.f32 %v2865, %v3048
        %v3050 = vpop.f32.mrb[0].mxu0
        %3051 = vmatprep.mubr.f32.mxu0 0.0
        %3052 = vmatmul.mubr.f32.gmra.mrb[0].mxu0 %v2936
        %v3053 = vpop.f32.mrb[0].mxu0
        %v3054 = vadd.f32 %v2870, %v3053
        %v3055 = vpop.f32.mrb[0].mxu0
        %3056 = vmatprep.mubr.f32.mxu0 0.0
        %3057 = vmatmul.mubr.f32.gmra.mrb[0].mxu0 %v2939
        %v3058 = vpop.f32.mrb[0].mxu0
        %v3059 = vadd.f32 %v2875, %v3058
        %v3060 = vpop.f32.mrb[0].mxu0
        %3061 = vmatprep.mubr.f32.mxu0 0.0
        %3062 = vmatmul.mubr.f32.gmra.mrb[0].mxu0 %v2942
        %v3063 = vpop.f32.mrb[0].mxu0
        %v3064 = vadd.f32 %v2880, %v3063
        %v3065 = vpop.f32.mrb[0].mxu0
        %3066 = vmatprep.mubr.f32.mxu0 0.0
        %3067 = vmatmul.mubr.f32.gmra.mrb[0].mxu0 %v2945
        %v3068 = vpop.f32.mrb[0].mxu0
        %v3069 = vadd.f32 %v2885, %v3068
        %v3070 = vpop.f32.mrb[0].mxu0
        %3071 = vmatprep.mubr.f32.mxu0 0.0
        %3072 = vmatmul.mubr.f32.gmra.mrb[0].mxu0 %v2948
        %v3073 = vpop.f32.mrb[0].mxu0
        %v3074 = vadd.f32 %v2890, %v3073
        %v3075 = vpop.f32.mrb[0].mxu0
        %3076 = vmatprep.mubr.f32.mxu0 0.0
        %3077 = vmatmul.mubr.f32.gmra.mrb[0].mxu0 %v2951
        %v3078 = vpop.f32.mrb[0].mxu0
        %v3079 = vadd.f32 %v2895, %v3078
        %v3080 = vpop.f32.mrb[0].mxu0
        %3081 = vdwg.mxu0
        %v3082 = vadd.f32 %v3044, %v572
        %v3083 = vadd.f32 %v3049, %v573
        %v3084 = vadd.f32 %v3054, %v574
        %v3085 = vadd.f32 %v3059, %v575
        %v3086 = vadd.f32 %v3064, %v576
        %v3087 = vadd.f32 %v3069, %v577
        %v3088 = vadd.f32 %v3074, %v578
        %v3089 = vadd.f32 %v3079, %v579
        %v3090 = vsel %vm601, %v3082, 0.0
        %3091 = vadd.xlane.f32.xlu0 %v3090
        %v3092 = vpop.xlane.xlu0 %3091
        %v3093 = vsel %vm601, %v3083, 0.0
        %3094 = vadd.xlane.f32.xlu0 %v3093
        %v3095 = vpop.xlane.xlu0 %3094
        %v3096 = vsel %vm601, %v3084, 0.0
        %3097 = vadd.xlane.f32.xlu0 %v3096
        %v3098 = vpop.xlane.xlu0 %3097
        %v3099 = vsel %vm601, %v3085, 0.0
        %3100 = vadd.xlane.f32.xlu0 %v3099
        %v3101 = vpop.xlane.xlu0 %3100
        %v3102 = vsel %vm601, %v3086, 0.0
        %3103 = vadd.xlane.f32.xlu0 %v3102
        %v3104 = vpop.xlane.xlu0 %3103
        %v3105 = vsel %vm601, %v3087, 0.0
        %3106 = vadd.xlane.f32.xlu0 %v3105
        %v3107 = vpop.xlane.xlu0 %3106
        %v3108 = vsel %vm601, %v3088, 0.0
        %3109 = vadd.xlane.f32.xlu0 %v3108
        %v3110 = vpop.xlane.xlu0 %3109
        %v3111 = vsel %vm601, %v3089, 0.0
        %3112 = vadd.xlane.f32.xlu0 %v3111
        %v3113 = vpop.xlane.xlu0 %3112
        %v3114 = vmul.f32 %v3092, %v626
        %v3115 = vmul.f32 %v3095, %v626
        %v3116 = vmul.f32 %v3098, %v626
        %v3117 = vmul.f32 %v3101, %v626
        %v3118 = vmul.f32 %v3104, %v626
        %v3119 = vmul.f32 %v3107, %v626
        %v3120 = vmul.f32 %v3110, %v626
        %v3121 = vmul.f32 %v3113, %v626
        %v3122 = vsub.f32 %v3082, %v3114
        %v3123 = vsub.f32 %v3083, %v3115
        %v3124 = vsub.f32 %v3084, %v3116
        %v3125 = vsub.f32 %v3085, %v3117
        %v3126 = vsub.f32 %v3086, %v3118
        %v3127 = vsub.f32 %v3087, %v3119
        %v3128 = vsub.f32 %v3088, %v3120
        %v3129 = vsub.f32 %v3089, %v3121
        %v3130 = vmul.f32 %v3122, %v3122
        %v3131 = vmul.f32 %v3123, %v3123
        %v3132 = vmul.f32 %v3124, %v3124
        %v3133 = vmul.f32 %v3125, %v3125
        %v3134 = vmul.f32 %v3126, %v3126
        %v3135 = vmul.f32 %v3127, %v3127
        %v3136 = vmul.f32 %v3128, %v3128
        %v3137 = vmul.f32 %v3129, %v3129
        %v3138 = vsel %vm601, %v3130, 0.0
        %3139 = vadd.xlane.f32.xlu0 %v3138
        %v3140 = vpop.xlane.xlu0 %3139
        %v3141 = vsel %vm601, %v3131, 0.0
        %3142 = vadd.xlane.f32.xlu0 %v3141
        %v3143 = vpop.xlane.xlu0 %3142
        %v3144 = vsel %vm601, %v3132, 0.0
        %3145 = vadd.xlane.f32.xlu0 %v3144
        %v3146 = vpop.xlane.xlu0 %3145
        %v3147 = vsel %vm601, %v3133, 0.0
        %3148 = vadd.xlane.f32.xlu0 %v3147
        %v3149 = vpop.xlane.xlu0 %3148
        %v3150 = vsel %vm601, %v3134, 0.0
        %3151 = vadd.xlane.f32.xlu0 %v3150
        %v3152 = vpop.xlane.xlu0 %3151
        %v3153 = vsel %vm601, %v3135, 0.0
        %3154 = vadd.xlane.f32.xlu0 %v3153
        %v3155 = vpop.xlane.xlu0 %3154
        %v3156 = vsel %vm601, %v3136, 0.0
        %3157 = vadd.xlane.f32.xlu0 %v3156
        %v3158 = vpop.xlane.xlu0 %3157
        %v3159 = vsel %vm601, %v3137, 0.0
        %3160 = vadd.xlane.f32.xlu0 %v3159
        %v3161 = vpop.xlane.xlu0 %3160
        %v3162 = vmul.f32 %v3140, %v626
        %v3163 = vmul.f32 %v3143, %v626
        %v3164 = vmul.f32 %v3146, %v626
        %v3165 = vmul.f32 %v3149, %v626
        %v3166 = vmul.f32 %v3152, %v626
        %v3167 = vmul.f32 %v3155, %v626
        %v3168 = vmul.f32 %v3158, %v626
        %v3169 = vmul.f32 %v3161, %v626
        %v3170 = vadd.f32 %v3162, 1e-05
        %v3171 = vadd.f32 %v3163, 1e-05
        %v3172 = vadd.f32 %v3164, 1e-05
        %v3173 = vadd.f32 %v3165, 1e-05
        %v3174 = vadd.f32 %v3166, 1e-05
        %v3175 = vadd.f32 %v3167, 1e-05
        %v3176 = vadd.f32 %v3168, 1e-05
        %v3177 = vadd.f32 %v3169, 1e-05
        %v3178 = vrsqrt.pop %v3170
        %v3179 = vrsqrt.pop %v3171
        %v3180 = vrsqrt.pop %v3172
        %v3181 = vrsqrt.pop %v3173
        %v3182 = vrsqrt.pop %v3174
        %v3183 = vrsqrt.pop %v3175
        %v3184 = vrsqrt.pop %v3176
        %v3185 = vrsqrt.pop %v3177
        %v3186 = vmul.f32 %v3122, %v3178
        %v3187 = vmul.f32 %v3123, %v3179
        %v3188 = vmul.f32 %v3124, %v3180
        %v3189 = vmul.f32 %v3125, %v3181
        %v3190 = vmul.f32 %v3126, %v3182
        %v3191 = vmul.f32 %v3127, %v3183
        %v3192 = vmul.f32 %v3128, %v3184
        %v3193 = vmul.f32 %v3129, %v3185
        %v3194 = vmul.f32 %v3186, %v586
        %v3195 = vmul.f32 %v3187, %v586
        %v3196 = vmul.f32 %v3188, %v586
        %v3197 = vmul.f32 %v3189, %v586
        %v3198 = vmul.f32 %v3190, %v586
        %v3199 = vmul.f32 %v3191, %v586
        %v3200 = vmul.f32 %v3192, %v586
        %v3201 = vmul.f32 %v3193, %v586
        %v3202 = vadd.f32 %v3194, %v587
        %v3203 = vadd.f32 %v3195, %v587
        %v3204 = vadd.f32 %v3196, %v587
        %v3205 = vadd.f32 %v3197, %v587
        %v3206 = vadd.f32 %v3198, %v587
        %v3207 = vadd.f32 %v3199, %v587
        %v3208 = vadd.f32 %v3200, %v587
        %v3209 = vadd.f32 %v3201, %v587
        %v3210 = vld [vmem:[#allocation8] sm:$0xff]
        %v3211 = vld [vmem:[#allocation8 + $0x8] sm:$0xff]
        %v3212 = vld [vmem:[#allocation8 + $0x10] sm:$0xff]
        %v3213 = vld [vmem:[#allocation8 + $0x18] sm:$0xff]
        %v3214 = vld [vmem:[#allocation8 + $0x20] sm:$0xff]
        %v3215 = vld [vmem:[#allocation8 + $0x28] sm:$0xff]
        %v3216 = vld [vmem:[#allocation8 + $0x30] sm:$0xff]
        %v3217 = vld [vmem:[#allocation8 + $0x38] sm:$0xff]
        %3218 = vxpose.xlu0.b32.start [1/16] %v3202, 128
        %3219 = vxpose.xlu0.b32.cont [2/16] %v3203, 128
        %3220 = vxpose.xlu0.b32.cont [3/16] %v3204, 128
        %3221 = vxpose.xlu0.b32.cont [4/16] %v3205, 128
        %3222 = vxpose.xlu0.b32.cont [5/16] %v3206, 128
        %3223 = vxpose.xlu0.b32.cont [6/16] %v3207, 128
        %3224 = vxpose.xlu0.b32.cont [7/16] %v3208, 128
        %3225 = vxpose.xlu0.b32.cont [8/16] %v3209, 128
        %3226 = vxpose.xlu0.b32.cont [9/16] 0.0, 128
        %3227 = vxpose.xlu0.b32.cont [10/16] 0.0, 128
        %3228 = vxpose.xlu0.b32.cont [11/16] 0.0, 128
        %3229 = vxpose.xlu0.b32.cont [12/16] 0.0, 128
        %3230 = vxpose.xlu0.b32.cont [13/16] 0.0, 128
        %3231 = vxpose.xlu0.b32.cont [14/16] 0.0, 128
        %3232 = vxpose.xlu0.b32.cont [15/16] 0.0, 128
        %3233 = vxpose.xlu0.b32.end [16/16] 0.0, 128
        %v3234 = vpop.trf.xlu0
        %v3235 = vpop.trf.xlu0
        %v3236 = vpop.trf.xlu0
        %v3237 = vpop.trf.xlu0
        %v3238 = vpop.trf.xlu0
        %v3239 = vpop.trf.xlu0
        %v3240 = vpop.trf.xlu0
        %v3241 = vpop.trf.xlu0
        %v3242 = vpop.trf.xlu0
        %v3243 = vpop.trf.xlu0
        %v3244 = vpop.trf.xlu0
        %v3245 = vpop.trf.xlu0
        %v3246 = vpop.trf.xlu0
        %v3247 = vpop.trf.xlu0
        %v3248 = vpop.trf.xlu0
        %v3249 = vpop.trf.xlu0
        %v3251 = vsel %vm601, %v3234, 0
        %v3254 = vsel %vm601, %v3235, 0
        %v3257 = vsel %vm601, %v3236, 0
        %v3260 = vsel %vm601, %v3237, 0
        %v3263 = vsel %vm601, %v3238, 0
        %v3266 = vsel %vm601, %v3239, 0
        %v3269 = vsel %vm601, %v3240, 0
        %v3272 = vsel %vm601, %v3241, 0
        %3274 = vmatprep.subr.mxu0 0.0
        %3275 = vmatpush1.msra.mxu0 %v3210
        %3276 = vmatprep.subr.mxu0 0.0
        %3277 = vmatpush1.msra.mxu0 %v3211
        %3278 = vmatprep.subr.mxu0 0.0
        %3279 = vmatpush1.msra.mxu0 %v3212
        %3280 = vmatprep.subr.mxu0 0.0
        %3281 = vmatpush1.msra.mxu0 %v3213
        %3282 = vmatprep.subr.mxu0 0.0
        %3283 = vmatpush1.msra.mxu0 %v3214
        %3284 = vmatprep.subr.mxu0 0.0
        %3285 = vmatpush1.msra.mxu0 %v3215
        %3286 = vmatprep.subr.mxu0 0.0
        %3287 = vmatpush1.msra.mxu0 %v3216
        %3288 = vmatprep.subr.mxu0 0.0
        %3289 = vmatpush1.msra.mxu0 %v3217
        %3290 = vmatprep.subr.mxu0 0.0
        %3291 = vmatpush1.msra.mxu0 0.0
        %3292 = vmatprep.subr.mxu0 0.0
        %3293 = vmatpush1.msra.mxu0 0.0
        %3294 = vmatprep.subr.mxu0 0.0
        %3295 = vmatpush1.msra.mxu0 0.0
        %3296 = vmatprep.subr.mxu0 0.0
        %3297 = vmatpush1.msra.mxu0 0.0
        %3298 = vmatprep.subr.mxu0 0.0
        %3299 = vmatpush1.msra.mxu0 0.0
        %3300 = vmatprep.subr.mxu0 0.0
        %3301 = vmatpush1.msra.mxu0 0.0
        %3302 = vmatprep.subr.mxu0 0.0
        %3303 = vmatpush1.msra.mxu0 0.0
        %3304 = vmatprep.subr.mxu0 0.0
        %3305 = vmatpush1.msra.mxu0 0.0
        %3306 = vmatprep.subr.mxu0 0.0
        %3307 = vmatpush1.msra.mxu0 0.0
        %3308 = vmatprep.subr.mxu0 0.0
        %3309 = vmatpush1.msra.mxu0 0.0
        %3310 = vmatprep.subr.mxu0 0.0
        %3311 = vmatpush1.msra.mxu0 0.0
        %3312 = vmatprep.subr.mxu0 0.0
        %3313 = vmatpush1.msra.mxu0 0.0
        %3314 = vmatprep.subr.mxu0 0.0
        %3315 = vmatpush1.msra.mxu0 0.0
        %3316 = vmatprep.subr.mxu0 0.0
        %3317 = vmatpush1.msra.mxu0 0.0
        %3318 = vmatprep.subr.mxu0 0.0
        %3319 = vmatpush1.msra.mxu0 0.0
        %3320 = vmatprep.subr.mxu0 0.0
        %3321 = vmatpush1.msra.mxu0 0.0
        %3322 = vmatprep.subr.mxu0 0.0
        %3323 = vmatpush1.msra.mxu0 0.0
        %3324 = vmatprep.subr.mxu0 0.0
        %3325 = vmatpush1.msra.mxu0 0.0
        %3326 = vmatprep.subr.mxu0 0.0
        %3327 = vmatpush1.msra.mxu0 0.0
        %3328 = vmatprep.subr.mxu0 0.0
        %3329 = vmatpush1.msra.mxu0 0.0
        %3330 = vmatprep.subr.mxu0 0.0
        %3331 = vmatpush1.msra.mxu0 0.0
        %3332 = vmatprep.subr.mxu0 0.0
        %3333 = vmatpush1.msra.mxu0 0.0
        %3334 = vmatprep.subr.mxu0 0.0
        %3335 = vmatpush1.msra.mxu0 0.0
        %3336 = vmatprep.subr.mxu0 0.0
        %3337 = vmatpush1.msra.mxu0 0.0
        %3338 = vmatprep.mubr.f32.mxu0 0.0
        %3339 = vmatmul.mubr.f32.gmra.mrb[0].mxu0 %v3251
        %v3340 = vpop.f32.mrb[0].mxu0
        %v3341 = vadd.f32 0.0, %v3340
        %v3342 = vpop.f32.mrb[0].mxu0
        %3343 = vmatprep.mubr.f32.mxu0 0.0
        %3344 = vmatmul.mubr.f32.gmra.mrb[0].mxu0 %v3254
        %v3345 = vpop.f32.mrb[0].mxu0
        %v3346 = vadd.f32 0.0, %v3345
        %v3347 = vpop.f32.mrb[0].mxu0
        %3348 = vmatprep.mubr.f32.mxu0 0.0
        %3349 = vmatmul.mubr.f32.gmra.mrb[0].mxu0 %v3257
        %v3350 = vpop.f32.mrb[0].mxu0
        %v3351 = vadd.f32 0.0, %v3350
        %v3352 = vpop.f32.mrb[0].mxu0
        %3353 = vmatprep.mubr.f32.mxu0 0.0
        %3354 = vmatmul.mubr.f32.gmra.mrb[0].mxu0 %v3260
        %v3355 = vpop.f32.mrb[0].mxu0
        %v3356 = vadd.f32 0.0, %v3355
        %v3357 = vpop.f32.mrb[0].mxu0
        %3358 = vmatprep.mubr.f32.mxu0 0.0
        %3359 = vmatmul.mubr.f32.gmra.mrb[0].mxu0 %v3263
        %v3360 = vpop.f32.mrb[0].mxu0
        %v3361 = vadd.f32 0.0, %v3360
        %v3362 = vpop.f32.mrb[0].mxu0
        %3363 = vmatprep.mubr.f32.mxu0 0.0
        %3364 = vmatmul.mubr.f32.gmra.mrb[0].mxu0 %v3266
        %v3365 = vpop.f32.mrb[0].mxu0
        %v3366 = vadd.f32 0.0, %v3365
        %v3367 = vpop.f32.mrb[0].mxu0
        %3368 = vmatprep.mubr.f32.mxu0 0.0
        %3369 = vmatmul.mubr.f32.gmra.mrb[0].mxu0 %v3269
        %v3370 = vpop.f32.mrb[0].mxu0
        %v3371 = vadd.f32 0.0, %v3370
        %v3372 = vpop.f32.mrb[0].mxu0
        %3373 = vmatprep.mubr.f32.mxu0 0.0
        %3374 = vmatmul.mubr.f32.gmra.mrb[0].mxu0 %v3272
        %v3375 = vpop.f32.mrb[0].mxu0
        %v3376 = vadd.f32 0.0, %v3375
        %v3377 = vpop.f32.mrb[0].mxu0
        %3378 = vdwg.mxu0
        %v3379 = vld [vmem:[#allocation10] sm:$0xff]
        %v3380 = vld [vmem:[#allocation10 + $0x8] sm:$0xff]
        %v3381 = vld [vmem:[#allocation10 + $0x10] sm:$0xff]
        %v3382 = vld [vmem:[#allocation10 + $0x18] sm:$0xff]
        %3383 = vxpose.xlu0.b32.start [1/16] %v580, 128
        %3384 = vxpose.xlu0.b32.cont [2/16] %v581, 128
        %3385 = vxpose.xlu0.b32.cont [3/16] %v582, 128
        %3386 = vxpose.xlu0.b32.cont [4/16] %v583, 128
        %3387 = vxpose.xlu0.b32.cont [5/16] 0.0, 128
        %3388 = vxpose.xlu0.b32.cont [6/16] 0.0, 128
        %3389 = vxpose.xlu0.b32.cont [7/16] 0.0, 128
        %3390 = vxpose.xlu0.b32.cont [8/16] 0.0, 128
        %3391 = vxpose.xlu0.b32.cont [9/16] 0.0, 128
        %3392 = vxpose.xlu0.b32.cont [10/16] 0.0, 128
        %3393 = vxpose.xlu0.b32.cont [11/16] 0.0, 128
        %3394 = vxpose.xlu0.b32.cont [12/16] 0.0, 128
        %3395 = vxpose.xlu0.b32.cont [13/16] 0.0, 128
        %3396 = vxpose.xlu0.b32.cont [14/16] 0.0, 128
        %3397 = vxpose.xlu0.b32.cont [15/16] 0.0, 128
        %3398 = vxpose.xlu0.b32.end [16/16] 0.0, 128
        %v3399 = vpop.trf.xlu0
        %v3400 = vpop.trf.xlu0
        %v3401 = vpop.trf.xlu0
        %v3402 = vpop.trf.xlu0
        %v3403 = vpop.trf.xlu0
        %v3404 = vpop.trf.xlu0
        %v3405 = vpop.trf.xlu0
        %v3406 = vpop.trf.xlu0
        %v3407 = vpop.trf.xlu0
        %v3408 = vpop.trf.xlu0
        %v3409 = vpop.trf.xlu0
        %v3410 = vpop.trf.xlu0
        %v3411 = vpop.trf.xlu0
        %v3412 = vpop.trf.xlu0
        %v3413 = vpop.trf.xlu0
        %v3414 = vpop.trf.xlu0
        %v3416 = vsel %vm2831, %v3399, 0
        %v3419 = vsel %vm2831, %v3400, 0
        %v3422 = vsel %vm2831, %v3401, 0
        %v3425 = vsel %vm2831, %v3402, 0
        %3427 = vmatprep.subr.mxu0 0.0
        %3428 = vmatpush1.msra.mxu0 %v3379
        %3429 = vmatprep.subr.mxu0 0.0
        %3430 = vmatpush1.msra.mxu0 %v3380
        %3431 = vmatprep.subr.mxu0 0.0
        %3432 = vmatpush1.msra.mxu0 %v3381
        %3433 = vmatprep.subr.mxu0 0.0
        %3434 = vmatpush1.msra.mxu0 %v3382
        %3435 = vmatprep.subr.mxu0 0.0
        %3436 = vmatpush1.msra.mxu0 0.0
        %3437 = vmatprep.subr.mxu0 0.0
        %3438 = vmatpush1.msra.mxu0 0.0
        %3439 = vmatprep.subr.mxu0 0.0
        %3440 = vmatpush1.msra.mxu0 0.0
        %3441 = vmatprep.subr.mxu0 0.0
        %3442 = vmatpush1.msra.mxu0 0.0
        %3443 = vmatprep.subr.mxu0 0.0
        %3444 = vmatpush1.msra.mxu0 0.0
        %3445 = vmatprep.subr.mxu0 0.0
        %3446 = vmatpush1.msra.mxu0 0.0
        %3447 = vmatprep.subr.mxu0 0.0
        %3448 = vmatpush1.msra.mxu0 0.0
        %3449 = vmatprep.subr.mxu0 0.0
        %3450 = vmatpush1.msra.mxu0 0.0
        %3451 = vmatprep.subr.mxu0 0.0
        %3452 = vmatpush1.msra.mxu0 0.0
        %3453 = vmatprep.subr.mxu0 0.0
        %3454 = vmatpush1.msra.mxu0 0.0
        %3455 = vmatprep.subr.mxu0 0.0
        %3456 = vmatpush1.msra.mxu0 0.0
        %3457 = vmatprep.subr.mxu0 0.0
        %3458 = vmatpush1.msra.mxu0 0.0
        %3459 = vmatprep.subr.mxu0 0.0
        %3460 = vmatpush1.msra.mxu0 0.0
        %3461 = vmatprep.subr.mxu0 0.0
        %3462 = vmatpush1.msra.mxu0 0.0
        %3463 = vmatprep.subr.mxu0 0.0
        %3464 = vmatpush1.msra.mxu0 0.0
        %3465 = vmatprep.subr.mxu0 0.0
        %3466 = vmatpush1.msra.mxu0 0.0
        %3467 = vmatprep.subr.mxu0 0.0
        %3468 = vmatpush1.msra.mxu0 0.0
        %3469 = vmatprep.subr.mxu0 0.0
        %3470 = vmatpush1.msra.mxu0 0.0
        %3471 = vmatprep.subr.mxu0 0.0
        %3472 = vmatpush1.msra.mxu0 0.0
        %3473 = vmatprep.subr.mxu0 0.0
        %3474 = vmatpush1.msra.mxu0 0.0
        %3475 = vmatprep.subr.mxu0 0.0
        %3476 = vmatpush1.msra.mxu0 0.0
        %3477 = vmatprep.subr.mxu0 0.0
        %3478 = vmatpush1.msra.mxu0 0.0
        %3479 = vmatprep.subr.mxu0 0.0
        %3480 = vmatpush1.msra.mxu0 0.0
        %3481 = vmatprep.subr.mxu0 0.0
        %3482 = vmatpush1.msra.mxu0 0.0
        %3483 = vmatprep.subr.mxu0 0.0
        %3484 = vmatpush1.msra.mxu0 0.0
        %3485 = vmatprep.subr.mxu0 0.0
        %3486 = vmatpush1.msra.mxu0 0.0
        %3487 = vmatprep.subr.mxu0 0.0
        %3488 = vmatpush1.msra.mxu0 0.0
        %3489 = vmatprep.subr.mxu0 0.0
        %3490 = vmatpush1.msra.mxu0 0.0
        %3491 = vmatprep.mubr.f32.mxu0 0.0
        %3492 = vmatmul.mubr.f32.gmra.mrb[0].mxu0 %v3416
        %v3493 = vpop.f32.mrb[0].mxu0
        %v3494 = vadd.f32 0.0, %v3493
        %v3495 = vpop.f32.mrb[0].mxu0
        %3496 = vmatprep.mubr.f32.mxu0 0.0
        %3497 = vmatmul.mubr.f32.gmra.mrb[0].mxu0 %v3419
        %v3498 = vpop.f32.mrb[0].mxu0
        %v3499 = vadd.f32 0.0, %v3498
        %v3500 = vpop.f32.mrb[0].mxu0
        %3501 = vmatprep.mubr.f32.mxu0 0.0
        %3502 = vmatmul.mubr.f32.gmra.mrb[0].mxu0 %v3422
        %v3503 = vpop.f32.mrb[0].mxu0
        %v3504 = vadd.f32 0.0, %v3503
        %v3505 = vpop.f32.mrb[0].mxu0
        %3506 = vmatprep.mubr.f32.mxu0 0.0
        %3507 = vmatmul.mubr.f32.gmra.mrb[0].mxu0 %v3425
        %v3508 = vpop.f32.mrb[0].mxu0
        %v3509 = vadd.f32 0.0, %v3508
        %v3510 = vpop.f32.mrb[0].mxu0
        %3511 = vdwg.mxu0
        %v3512 = vld [vmem:[%s10] sm:$0xff]
        %v3513 = vld [vmem:[%s10 + $0x8] sm:$0xff]
        %v3514 = vld [vmem:[%s10 + $0x10] sm:$0xff]
        %v3515 = vld [vmem:[%s10 + $0x18] sm:$0xff]
        %3516 = vmatprep.subr.mxu0 0.0
        %3517 = vmatpush1.msra.mxu0 %v3512
        %3518 = vmatprep.subr.mxu0 0.0
        %3519 = vmatpush1.msra.mxu0 %v3513
        %3520 = vmatprep.subr.mxu0 0.0
        %3521 = vmatpush1.msra.mxu0 %v3514
        %3522 = vmatprep.subr.mxu0 0.0
        %3523 = vmatpush1.msra.mxu0 %v3515
        %3524 = vmatprep.subr.mxu0 0.0
        %3525 = vmatpush1.msra.mxu0 0.0
        %3526 = vmatprep.subr.mxu0 0.0
        %3527 = vmatpush1.msra.mxu0 0.0
        %3528 = vmatprep.subr.mxu0 0.0
        %3529 = vmatpush1.msra.mxu0 0.0
        %3530 = vmatprep.subr.mxu0 0.0
        %3531 = vmatpush1.msra.mxu0 0.0
        %3532 = vmatprep.subr.mxu0 0.0
        %3533 = vmatpush1.msra.mxu0 0.0
        %3534 = vmatprep.subr.mxu0 0.0
        %3535 = vmatpush1.msra.mxu0 0.0
        %3536 = vmatprep.subr.mxu0 0.0
        %3537 = vmatpush1.msra.mxu0 0.0
        %3538 = vmatprep.subr.mxu0 0.0
        %3539 = vmatpush1.msra.mxu0 0.0
        %3540 = vmatprep.subr.mxu0 0.0
        %3541 = vmatpush1.msra.mxu0 0.0
        %3542 = vmatprep.subr.mxu0 0.0
        %3543 = vmatpush1.msra.mxu0 0.0
        %3544 = vmatprep.subr.mxu0 0.0
        %3545 = vmatpush1.msra.mxu0 0.0
        %3546 = vmatprep.subr.mxu0 0.0
        %3547 = vmatpush1.msra.mxu0 0.0
        %3548 = vmatprep.subr.mxu0 0.0
        %3549 = vmatpush1.msra.mxu0 0.0
        %3550 = vmatprep.subr.mxu0 0.0
        %3551 = vmatpush1.msra.mxu0 0.0
        %3552 = vmatprep.subr.mxu0 0.0
        %3553 = vmatpush1.msra.mxu0 0.0
        %3554 = vmatprep.subr.mxu0 0.0
        %3555 = vmatpush1.msra.mxu0 0.0
        %3556 = vmatprep.subr.mxu0 0.0
        %3557 = vmatpush1.msra.mxu0 0.0
        %3558 = vmatprep.subr.mxu0 0.0
        %3559 = vmatpush1.msra.mxu0 0.0
        %3560 = vmatprep.subr.mxu0 0.0
        %3561 = vmatpush1.msra.mxu0 0.0
        %3562 = vmatprep.subr.mxu0 0.0
        %3563 = vmatpush1.msra.mxu0 0.0
        %3564 = vmatprep.subr.mxu0 0.0
        %3565 = vmatpush1.msra.mxu0 0.0
        %3566 = vmatprep.subr.mxu0 0.0
        %3567 = vmatpush1.msra.mxu0 0.0
        %3568 = vmatprep.subr.mxu0 0.0
        %3569 = vmatpush1.msra.mxu0 0.0
        %3570 = vmatprep.subr.mxu0 0.0
        %3571 = vmatpush1.msra.mxu0 0.0
        %3572 = vmatprep.subr.mxu0 0.0
        %3573 = vmatpush1.msra.mxu0 0.0
        %3574 = vmatprep.subr.mxu0 0.0
        %3575 = vmatpush1.msra.mxu0 0.0
        %3576 = vmatprep.subr.mxu0 0.0
        %3577 = vmatpush1.msra.mxu0 0.0
        %3578 = vmatprep.subr.mxu0 0.0
        %3579 = vmatpush1.msra.mxu0 0.0
        %3580 = vmatprep.mubr.f32.mxu0 0.0
        %3581 = vmatmul.mubr.f32.gmra.mrb[0].mxu0 %v3416
        %v3582 = vpop.f32.mrb[0].mxu0
        %v3583 = vadd.f32 0.0, %v3582
        %v3584 = vpop.f32.mrb[0].mxu0
        %3585 = vmatprep.mubr.f32.mxu0 0.0
        %3586 = vmatmul.mubr.f32.gmra.mrb[0].mxu0 %v3419
        %v3587 = vpop.f32.mrb[0].mxu0
        %v3588 = vadd.f32 0.0, %v3587
        %v3589 = vpop.f32.mrb[0].mxu0
        %3590 = vmatprep.mubr.f32.mxu0 0.0
        %3591 = vmatmul.mubr.f32.gmra.mrb[0].mxu0 %v3422
        %v3592 = vpop.f32.mrb[0].mxu0
        %v3593 = vadd.f32 0.0, %v3592
        %v3594 = vpop.f32.mrb[0].mxu0
        %3595 = vmatprep.mubr.f32.mxu0 0.0
        %3596 = vmatmul.mubr.f32.gmra.mrb[0].mxu0 %v3425
        %v3597 = vpop.f32.mrb[0].mxu0
        %v3598 = vadd.f32 0.0, %v3597
        %v3599 = vpop.f32.mrb[0].mxu0
        %3600 = vdwg.mxu0
        %v3602 = vsel %vm1118, %v3341, 0
        %v3605 = vsel %vm1118, %v3346, 0
        %v3608 = vsel %vm1118, %v3351, 0
        %v3611 = vsel %vm1118, %v3356, 0
        %v3614 = vsel %vm1118, %v3361, 0
        %v3617 = vsel %vm1118, %v3366, 0
        %v3620 = vsel %vm1118, %v3371, 0
        %v3623 = vsel %vm1118, %v3376, 0
        %v3626 = vsel %vm1118, %v3494, 0
        %v3629 = vsel %vm1118, %v3499, 0
        %v3632 = vsel %vm1118, %v3504, 0
        %v3635 = vsel %vm1118, %v3509, 0
        %3637 = vmatprep.subr.mxu0 0.0
        %3638 = vmatpush1.xpose.msra.mxu0 %v3626
        %3639 = vmatprep.subr.mxu0 0.0
        %3640 = vmatpush1.xpose.msra.mxu0 %v3629
        %3641 = vmatprep.subr.mxu0 0.0
        %3642 = vmatpush1.xpose.msra.mxu0 %v3632
        %3643 = vmatprep.subr.mxu0 0.0
        %3644 = vmatpush1.xpose.msra.mxu0 %v3635
        %3645 = vmatprep.subr.mxu0 0.0
        %3646 = vmatpush1.xpose.msra.mxu0 0.0
        %3647 = vmatprep.subr.mxu0 0.0
        %3648 = vmatpush1.xpose.msra.mxu0 0.0
        %3649 = vmatprep.subr.mxu0 0.0
        %3650 = vmatpush1.xpose.msra.mxu0 0.0
        %3651 = vmatprep.subr.mxu0 0.0
        %3652 = vmatpush1.xpose.msra.mxu0 0.0
        %3653 = vmatprep.subr.mxu0 0.0
        %3654 = vmatpush1.xpose.msra.mxu0 0.0
        %3655 = vmatprep.subr.mxu0 0.0
        %3656 = vmatpush1.xpose.msra.mxu0 0.0
        %3657 = vmatprep.subr.mxu0 0.0
        %3658 = vmatpush1.xpose.msra.mxu0 0.0
        %3659 = vmatprep.subr.mxu0 0.0
        %3660 = vmatpush1.xpose.msra.mxu0 0.0
        %3661 = vmatprep.subr.mxu0 0.0
        %3662 = vmatpush1.xpose.msra.mxu0 0.0
        %3663 = vmatprep.subr.mxu0 0.0
        %3664 = vmatpush1.xpose.msra.mxu0 0.0
        %3665 = vmatprep.subr.mxu0 0.0
        %3666 = vmatpush1.xpose.msra.mxu0 0.0
        %3667 = vmatprep.subr.mxu0 0.0
        %3668 = vmatpush1.xpose.msra.mxu0 0.0
        %3669 = vmatprep.subr.mxu0 0.0
        %3670 = vmatpush1.xpose.msra.mxu0 0.0
        %3671 = vmatprep.subr.mxu0 0.0
        %3672 = vmatpush1.xpose.msra.mxu0 0.0
        %3673 = vmatprep.subr.mxu0 0.0
        %3674 = vmatpush1.xpose.msra.mxu0 0.0
        %3675 = vmatprep.subr.mxu0 0.0
        %3676 = vmatpush1.xpose.msra.mxu0 0.0
        %3677 = vmatprep.subr.mxu0 0.0
        %3678 = vmatpush1.xpose.msra.mxu0 0.0
        %3679 = vmatprep.subr.mxu0 0.0
        %3680 = vmatpush1.xpose.msra.mxu0 0.0
        %3681 = vmatprep.subr.mxu0 0.0
        %3682 = vmatpush1.xpose.msra.mxu0 0.0
        %3683 = vmatprep.subr.mxu0 0.0
        %3684 = vmatpush1.xpose.msra.mxu0 0.0
        %3685 = vmatprep.subr.mxu0 0.0
        %3686 = vmatpush1.xpose.msra.mxu0 0.0
        %3687 = vmatprep.subr.mxu0 0.0
        %3688 = vmatpush1.xpose.msra.mxu0 0.0
        %3689 = vmatprep.subr.mxu0 0.0
        %3690 = vmatpush1.xpose.msra.mxu0 0.0
        %3691 = vmatprep.subr.mxu0 0.0
        %3692 = vmatpush1.xpose.msra.mxu0 0.0
        %3693 = vmatprep.subr.mxu0 0.0
        %3694 = vmatpush1.xpose.msra.mxu0 0.0
        %3695 = vmatprep.subr.mxu0 0.0
        %3696 = vmatpush1.xpose.msra.mxu0 0.0
        %3697 = vmatprep.subr.mxu0 0.0
        %3698 = vmatpush1.xpose.msra.mxu0 0.0
        %3699 = vmatprep.subr.mxu0 0.0
        %3700 = vmatpush1.xpose.msra.mxu0 0.0
        %3701 = vmatprep.mubr.f32.mxu0 0.0
        %3702 = vmatmul.mubr.f32.gmra.mrb[0].mxu0 %v3602
        %v3703 = vpop.f32.mrb[0].mxu0
        %v3704 = vadd.f32 0.0, %v3703
        %v3705 = vpop.f32.mrb[0].mxu0
        %3706 = vmatprep.mubr.f32.mxu0 0.0
        %3707 = vmatmul.mubr.f32.gmra.mrb[0].mxu0 %v3605
        %v3708 = vpop.f32.mrb[0].mxu0
        %v3709 = vadd.f32 0.0, %v3708
        %v3710 = vpop.f32.mrb[0].mxu0
        %3711 = vmatprep.mubr.f32.mxu0 0.0
        %3712 = vmatmul.mubr.f32.gmra.mrb[0].mxu0 %v3608
        %v3713 = vpop.f32.mrb[0].mxu0
        %v3714 = vadd.f32 0.0, %v3713
        %v3715 = vpop.f32.mrb[0].mxu0
        %3716 = vmatprep.mubr.f32.mxu0 0.0
        %3717 = vmatmul.mubr.f32.gmra.mrb[0].mxu0 %v3611
        %v3718 = vpop.f32.mrb[0].mxu0
        %v3719 = vadd.f32 0.0, %v3718
        %v3720 = vpop.f32.mrb[0].mxu0
        %3721 = vmatprep.mubr.f32.mxu0 0.0
        %3722 = vmatmul.mubr.f32.gmra.mrb[0].mxu0 %v3614
        %v3723 = vpop.f32.mrb[0].mxu0
        %v3724 = vadd.f32 0.0, %v3723
        %v3725 = vpop.f32.mrb[0].mxu0
        %3726 = vmatprep.mubr.f32.mxu0 0.0
        %3727 = vmatmul.mubr.f32.gmra.mrb[0].mxu0 %v3617
        %v3728 = vpop.f32.mrb[0].mxu0
        %v3729 = vadd.f32 0.0, %v3728
        %v3730 = vpop.f32.mrb[0].mxu0
        %3731 = vmatprep.mubr.f32.mxu0 0.0
        %3732 = vmatmul.mubr.f32.gmra.mrb[0].mxu0 %v3620
        %v3733 = vpop.f32.mrb[0].mxu0
        %v3734 = vadd.f32 0.0, %v3733
        %v3735 = vpop.f32.mrb[0].mxu0
        %3736 = vmatprep.mubr.f32.mxu0 0.0
        %3737 = vmatmul.mubr.f32.gmra.mrb[0].mxu0 %v3623
        %v3738 = vpop.f32.mrb[0].mxu0
        %v3739 = vadd.f32 0.0, %v3738
        %v3740 = vpop.f32.mrb[0].mxu0
        %3741 = vdwg.mxu0
        %v3742 = vsel %vm2831, %v3704, -inf
        %3743 = vmax.xlane.f32.xlu0 %v3742
        %v3744 = vpop.xlane.xlu0 %3743
        %v3745 = vsel %vm2831, %v3709, -inf
        %3746 = vmax.xlane.f32.xlu0 %v3745
        %v3747 = vpop.xlane.xlu0 %3746
        %v3748 = vsel %vm2831, %v3714, -inf
        %3749 = vmax.xlane.f32.xlu0 %v3748
        %v3750 = vpop.xlane.xlu0 %3749
        %v3751 = vsel %vm2831, %v3719, -inf
        %3752 = vmax.xlane.f32.xlu0 %v3751
        %v3753 = vpop.xlane.xlu0 %3752
        %v3754 = vsel %vm2831, %v3724, -inf
        %3755 = vmax.xlane.f32.xlu0 %v3754
        %v3756 = vpop.xlane.xlu0 %3755
        %v3757 = vsel %vm2831, %v3729, -inf
        %3758 = vmax.xlane.f32.xlu0 %v3757
        %v3759 = vpop.xlane.xlu0 %3758
        %v3760 = vsel %vm2831, %v3734, -inf
        %3761 = vmax.xlane.f32.xlu0 %v3760
        %v3762 = vpop.xlane.xlu0 %3761
        %v3763 = vsel %vm2831, %v3739, -inf
        %3764 = vmax.xlane.f32.xlu0 %v3763
        %v3765 = vpop.xlane.xlu0 %3764
        %v3766 = vsub.f32 %v3704, %v3744
        %v3767 = vsub.f32 %v3709, %v3747
        %v3768 = vsub.f32 %v3714, %v3750
        %v3769 = vsub.f32 %v3719, %v3753
        %v3770 = vsub.f32 %v3724, %v3756
        %v3771 = vsub.f32 %v3729, %v3759
        %v3772 = vsub.f32 %v3734, %v3762
        %v3773 = vsub.f32 %v3739, %v3765
        %v3774 = vmul.f32 %v3766, 1.442695
        %v3775 = vpow.pop %v3774
        %v3776 = vmul.f32 %v3767, 1.442695
        %v3777 = vpow.pop %v3776
        %v3778 = vmul.f32 %v3768, 1.442695
        %v3779 = vpow.pop %v3778
        %v3780 = vmul.f32 %v3769, 1.442695
        %v3781 = vpow.pop %v3780
        %v3782 = vmul.f32 %v3770, 1.442695
        %v3783 = vpow.pop %v3782
        %v3784 = vmul.f32 %v3771, 1.442695
        %v3785 = vpow.pop %v3784
        %v3786 = vmul.f32 %v3772, 1.442695
        %v3787 = vpow.pop %v3786
        %v3788 = vmul.f32 %v3773, 1.442695
        %v3789 = vpow.pop %v3788
        %v3790 = vsel %vm2831, %v3775, 0.0
        %3791 = vadd.xlane.f32.xlu0 %v3790
        %v3792 = vpop.xlane.xlu0 %3791
        %v3793 = vsel %vm2831, %v3777, 0.0
        %3794 = vadd.xlane.f32.xlu0 %v3793
        %v3795 = vpop.xlane.xlu0 %3794
        %v3796 = vsel %vm2831, %v3779, 0.0
        %3797 = vadd.xlane.f32.xlu0 %v3796
        %v3798 = vpop.xlane.xlu0 %3797
        %v3799 = vsel %vm2831, %v3781, 0.0
        %3800 = vadd.xlane.f32.xlu0 %v3799
        %v3801 = vpop.xlane.xlu0 %3800
        %v3802 = vsel %vm2831, %v3783, 0.0
        %3803 = vadd.xlane.f32.xlu0 %v3802
        %v3804 = vpop.xlane.xlu0 %3803
        %v3805 = vsel %vm2831, %v3785, 0.0
        %3806 = vadd.xlane.f32.xlu0 %v3805
        %v3807 = vpop.xlane.xlu0 %3806
        %v3808 = vsel %vm2831, %v3787, 0.0
        %3809 = vadd.xlane.f32.xlu0 %v3808
        %v3810 = vpop.xlane.xlu0 %3809
        %v3811 = vsel %vm2831, %v3789, 0.0
        %3812 = vadd.xlane.f32.xlu0 %v3811
        %v3813 = vpop.xlane.xlu0 %3812
        %v3814 = vrcp.pop %v3792
        %v3815 = vmul.f32 %v3775, %v3814
        %v3816 = vrcp.pop %v3795
        %v3817 = vmul.f32 %v3777, %v3816
        %v3818 = vrcp.pop %v3798
        %v3819 = vmul.f32 %v3779, %v3818
        %v3820 = vrcp.pop %v3801
        %v3821 = vmul.f32 %v3781, %v3820
        %v3822 = vrcp.pop %v3804
        %v3823 = vmul.f32 %v3783, %v3822
        %v3824 = vrcp.pop %v3807
        %v3825 = vmul.f32 %v3785, %v3824
        %v3826 = vrcp.pop %v3810
        %v3827 = vmul.f32 %v3787, %v3826
        %v3828 = vrcp.pop %v3813
        %v3829 = vmul.f32 %v3789, %v3828
        %v3831 = vsel %vm2831, %v3815, 0
        %v3834 = vsel %vm2831, %v3817, 0
        %v3837 = vsel %vm2831, %v3819, 0
        %v3840 = vsel %vm2831, %v3821, 0
        %v3843 = vsel %vm2831, %v3823, 0
        %v3846 = vsel %vm2831, %v3825, 0
        %v3849 = vsel %vm2831, %v3827, 0
        %v3852 = vsel %vm2831, %v3829, 0
        %3854 = vmatprep.subr.mxu0 0.0
        %3855 = vmatpush1.msra.mxu0 %v3583
        %3856 = vmatprep.subr.mxu0 0.0
        %3857 = vmatpush1.msra.mxu0 %v3588
        %3858 = vmatprep.subr.mxu0 0.0
        %3859 = vmatpush1.msra.mxu0 %v3593
        %3860 = vmatprep.subr.mxu0 0.0
        %3861 = vmatpush1.msra.mxu0 %v3598
        %3862 = vmatprep.subr.mxu0 0.0
        %3863 = vmatpush1.msra.mxu0 0.0
        %3864 = vmatprep.subr.mxu0 0.0
        %3865 = vmatpush1.msra.mxu0 0.0
        %3866 = vmatprep.subr.mxu0 0.0
        %3867 = vmatpush1.msra.mxu0 0.0
        %3868 = vmatprep.subr.mxu0 0.0
        %3869 = vmatpush1.msra.mxu0 0.0
        %3870 = vmatprep.subr.mxu0 0.0
        %3871 = vmatpush1.msra.mxu0 0.0
        %3872 = vmatprep.subr.mxu0 0.0
        %3873 = vmatpush1.msra.mxu0 0.0
        %3874 = vmatprep.subr.mxu0 0.0
        %3875 = vmatpush1.msra.mxu0 0.0
        %3876 = vmatprep.subr.mxu0 0.0
        %3877 = vmatpush1.msra.mxu0 0.0
        %3878 = vmatprep.subr.mxu0 0.0
        %3879 = vmatpush1.msra.mxu0 0.0
        %3880 = vmatprep.subr.mxu0 0.0
        %3881 = vmatpush1.msra.mxu0 0.0
        %3882 = vmatprep.subr.mxu0 0.0
        %3883 = vmatpush1.msra.mxu0 0.0
        %3884 = vmatprep.subr.mxu0 0.0
        %3885 = vmatpush1.msra.mxu0 0.0
        %3886 = vmatprep.subr.mxu0 0.0
        %3887 = vmatpush1.msra.mxu0 0.0
        %3888 = vmatprep.subr.mxu0 0.0
        %3889 = vmatpush1.msra.mxu0 0.0
        %3890 = vmatprep.subr.mxu0 0.0
        %3891 = vmatpush1.msra.mxu0 0.0
        %3892 = vmatprep.subr.mxu0 0.0
        %3893 = vmatpush1.msra.mxu0 0.0
        %3894 = vmatprep.subr.mxu0 0.0
        %3895 = vmatpush1.msra.mxu0 0.0
        %3896 = vmatprep.subr.mxu0 0.0
        %3897 = vmatpush1.msra.mxu0 0.0
        %3898 = vmatprep.subr.mxu0 0.0
        %3899 = vmatpush1.msra.mxu0 0.0
        %3900 = vmatprep.subr.mxu0 0.0
        %3901 = vmatpush1.msra.mxu0 0.0
        %3902 = vmatprep.subr.mxu0 0.0
        %3903 = vmatpush1.msra.mxu0 0.0
        %3904 = vmatprep.subr.mxu0 0.0
        %3905 = vmatpush1.msra.mxu0 0.0
        %3906 = vmatprep.subr.mxu0 0.0
        %3907 = vmatpush1.msra.mxu0 0.0
        %3908 = vmatprep.subr.mxu0 0.0
        %3909 = vmatpush1.msra.mxu0 0.0
        %3910 = vmatprep.subr.mxu0 0.0
        %3911 = vmatpush1.msra.mxu0 0.0
        %3912 = vmatprep.subr.mxu0 0.0
        %3913 = vmatpush1.msra.mxu0 0.0
        %3914 = vmatprep.subr.mxu0 0.0
        %3915 = vmatpush1.msra.mxu0 0.0
        %3916 = vmatprep.subr.mxu0 0.0
        %3917 = vmatpush1.msra.mxu0 0.0
        %3918 = vmatprep.mubr.f32.mxu0 0.0
        %3919 = vmatmul.mubr.f32.gmra.mrb[0].mxu0 %v3831
        %v3920 = vpop.f32.mrb[0].mxu0
        %v3921 = vadd.f32 0.0, %v3920
        %v3922 = vpop.f32.mrb[0].mxu0
        %3923 = vmatprep.mubr.f32.mxu0 0.0
        %3924 = vmatmul.mubr.f32.gmra.mrb[0].mxu0 %v3834
        %v3925 = vpop.f32.mrb[0].mxu0
        %v3926 = vadd.f32 0.0, %v3925
        %v3927 = vpop.f32.mrb[0].mxu0
        %3928 = vmatprep.mubr.f32.mxu0 0.0
        %3929 = vmatmul.mubr.f32.gmra.mrb[0].mxu0 %v3837
        %v3930 = vpop.f32.mrb[0].mxu0
        %v3931 = vadd.f32 0.0, %v3930
        %v3932 = vpop.f32.mrb[0].mxu0
        %3933 = vmatprep.mubr.f32.mxu0 0.0
        %3934 = vmatmul.mubr.f32.gmra.mrb[0].mxu0 %v3840
        %v3935 = vpop.f32.mrb[0].mxu0
        %v3936 = vadd.f32 0.0, %v3935
        %v3937 = vpop.f32.mrb[0].mxu0
        %3938 = vmatprep.mubr.f32.mxu0 0.0
        %3939 = vmatmul.mubr.f32.gmra.mrb[0].mxu0 %v3843
        %v3940 = vpop.f32.mrb[0].mxu0
        %v3941 = vadd.f32 0.0, %v3940
        %v3942 = vpop.f32.mrb[0].mxu0
        %3943 = vmatprep.mubr.f32.mxu0 0.0
        %3944 = vmatmul.mubr.f32.gmra.mrb[0].mxu0 %v3846
        %v3945 = vpop.f32.mrb[0].mxu0
        %v3946 = vadd.f32 0.0, %v3945
        %v3947 = vpop.f32.mrb[0].mxu0
        %3948 = vmatprep.mubr.f32.mxu0 0.0
        %3949 = vmatmul.mubr.f32.gmra.mrb[0].mxu0 %v3849
        %v3950 = vpop.f32.mrb[0].mxu0
        %v3951 = vadd.f32 0.0, %v3950
        %v3952 = vpop.f32.mrb[0].mxu0
        %3953 = vmatprep.mubr.f32.mxu0 0.0
        %3954 = vmatmul.mubr.f32.gmra.mrb[0].mxu0 %v3852
        %v3955 = vpop.f32.mrb[0].mxu0
        %v3956 = vadd.f32 0.0, %v3955
        %v3957 = vpop.f32.mrb[0].mxu0
        %3958 = vdwg.mxu0
        %3959 = vrot.lane.b32.xlu0 %v3341, 112
        %v3960 = vpop.permute.xlu0 %3959
        %3961 = vrot.lane.b32.xlu0 %v3346, 112
        %v3962 = vpop.permute.xlu0 %3961
        %3963 = vrot.lane.b32.xlu0 %v3351, 112
        %v3964 = vpop.permute.xlu0 %3963
        %3965 = vrot.lane.b32.xlu0 %v3356, 112
        %v3966 = vpop.permute.xlu0 %3965
        %3967 = vrot.lane.b32.xlu0 %v3361, 112
        %v3968 = vpop.permute.xlu0 %3967
        %3969 = vrot.lane.b32.xlu0 %v3366, 112
        %v3970 = vpop.permute.xlu0 %3969
        %3971 = vrot.lane.b32.xlu0 %v3371, 112
        %v3972 = vpop.permute.xlu0 %3971
        %3973 = vrot.lane.b32.xlu0 %v3376, 112
        %v3974 = vpop.permute.xlu0 %3973
        %3975 = vrot.lane.b32.xlu0 %v3494, 112
        %v3976 = vpop.permute.xlu0 %3975
        %3977 = vrot.lane.b32.xlu0 %v3499, 112
        %v3978 = vpop.permute.xlu0 %3977
        %3979 = vrot.lane.b32.xlu0 %v3504, 112
        %v3980 = vpop.permute.xlu0 %3979
        %3981 = vrot.lane.b32.xlu0 %v3509, 112
        %v3982 = vpop.permute.xlu0 %3981
        %v3983 = vsel %vm1118, %v3960, 0
        %v3985 = vsel %vm1118, %v3962, 0
        %v3987 = vsel %vm1118, %v3964, 0
        %v3989 = vsel %vm1118, %v3966, 0
        %v3991 = vsel %vm1118, %v3968, 0
        %v3993 = vsel %vm1118, %v3970, 0
        %v3995 = vsel %vm1118, %v3972, 0
        %v3997 = vsel %vm1118, %v3974, 0
        %v3999 = vsel %vm1118, %v3976, 0
        %v4001 = vsel %vm1118, %v3978, 0
        %v4003 = vsel %vm1118, %v3980, 0
        %v4005 = vsel %vm1118, %v3982, 0
        %4007 = vmatprep.subr.mxu0 0.0
        %4008 = vmatpush1.xpose.msra.mxu0 %v3999
        %4009 = vmatprep.subr.mxu0 0.0
        %4010 = vmatpush1.xpose.msra.mxu0 %v4001
        %4011 = vmatprep.subr.mxu0 0.0
        %4012 = vmatpush1.xpose.msra.mxu0 %v4003
        %4013 = vmatprep.subr.mxu0 0.0
        %4014 = vmatpush1.xpose.msra.mxu0 %v4005
        %4015 = vmatprep.subr.mxu0 0.0
        %4016 = vmatpush1.xpose.msra.mxu0 0.0
        %4017 = vmatprep.subr.mxu0 0.0
        %4018 = vmatpush1.xpose.msra.mxu0 0.0
        %4019 = vmatprep.subr.mxu0 0.0
        %4020 = vmatpush1.xpose.msra.mxu0 0.0
        %4021 = vmatprep.subr.mxu0 0.0
        %4022 = vmatpush1.xpose.msra.mxu0 0.0
        %4023 = vmatprep.subr.mxu0 0.0
        %4024 = vmatpush1.xpose.msra.mxu0 0.0
        %4025 = vmatprep.subr.mxu0 0.0
        %4026 = vmatpush1.xpose.msra.mxu0 0.0
        %4027 = vmatprep.subr.mxu0 0.0
        %4028 = vmatpush1.xpose.msra.mxu0 0.0
        %4029 = vmatprep.subr.mxu0 0.0
        %4030 = vmatpush1.xpose.msra.mxu0 0.0
        %4031 = vmatprep.subr.mxu0 0.0
        %4032 = vmatpush1.xpose.msra.mxu0 0.0
        %4033 = vmatprep.subr.mxu0 0.0
        %4034 = vmatpush1.xpose.msra.mxu0 0.0
        %4035 = vmatprep.subr.mxu0 0.0
        %4036 = vmatpush1.xpose.msra.mxu0 0.0
        %4037 = vmatprep.subr.mxu0 0.0
        %4038 = vmatpush1.xpose.msra.mxu0 0.0
        %4039 = vmatprep.subr.mxu0 0.0
        %4040 = vmatpush1.xpose.msra.mxu0 0.0
        %4041 = vmatprep.subr.mxu0 0.0
        %4042 = vmatpush1.xpose.msra.mxu0 0.0
        %4043 = vmatprep.subr.mxu0 0.0
        %4044 = vmatpush1.xpose.msra.mxu0 0.0
        %4045 = vmatprep.subr.mxu0 0.0
        %4046 = vmatpush1.xpose.msra.mxu0 0.0
        %4047 = vmatprep.subr.mxu0 0.0
        %4048 = vmatpush1.xpose.msra.mxu0 0.0
        %4049 = vmatprep.subr.mxu0 0.0
        %4050 = vmatpush1.xpose.msra.mxu0 0.0
        %4051 = vmatprep.subr.mxu0 0.0
        %4052 = vmatpush1.xpose.msra.mxu0 0.0
        %4053 = vmatprep.subr.mxu0 0.0
        %4054 = vmatpush1.xpose.msra.mxu0 0.0
        %4055 = vmatprep.subr.mxu0 0.0
        %4056 = vmatpush1.xpose.msra.mxu0 0.0
        %4057 = vmatprep.subr.mxu0 0.0
        %4058 = vmatpush1.xpose.msra.mxu0 0.0
        %4059 = vmatprep.subr.mxu0 0.0
        %4060 = vmatpush1.xpose.msra.mxu0 0.0
        %4061 = vmatprep.subr.mxu0 0.0
        %4062 = vmatpush1.xpose.msra.mxu0 0.0
        %4063 = vmatprep.subr.mxu0 0.0
        %4064 = vmatpush1.xpose.msra.mxu0 0.0
        %4065 = vmatprep.subr.mxu0 0.0
        %4066 = vmatpush1.xpose.msra.mxu0 0.0
        %4067 = vmatprep.subr.mxu0 0.0
        %4068 = vmatpush1.xpose.msra.mxu0 0.0
        %4069 = vmatprep.subr.mxu0 0.0
        %4070 = vmatpush1.xpose.msra.mxu0 0.0
        %4071 = vmatprep.mubr.f32.mxu0 0.0
        %4072 = vmatmul.mubr.f32.gmra.mrb[0].mxu0 %v3983
        %v4073 = vpop.f32.mrb[0].mxu0
        %v4074 = vadd.f32 0.0, %v4073
        %v4075 = vpop.f32.mrb[0].mxu0
        %4076 = vmatprep.mubr.f32.mxu0 0.0
        %4077 = vmatmul.mubr.f32.gmra.mrb[0].mxu0 %v3985
        %v4078 = vpop.f32.mrb[0].mxu0
        %v4079 = vadd.f32 0.0, %v4078
        %v4080 = vpop.f32.mrb[0].mxu0
        %4081 = vmatprep.mubr.f32.mxu0 0.0
        %4082 = vmatmul.mubr.f32.gmra.mrb[0].mxu0 %v3987
        %v4083 = vpop.f32.mrb[0].mxu0
        %v4084 = vadd.f32 0.0, %v4083
        %v4085 = vpop.f32.mrb[0].mxu0
        %4086 = vmatprep.mubr.f32.mxu0 0.0
        %4087 = vmatmul.mubr.f32.gmra.mrb[0].mxu0 %v3989
        %v4088 = vpop.f32.mrb[0].mxu0
        %v4089 = vadd.f32 0.0, %v4088
        %v4090 = vpop.f32.mrb[0].mxu0
        %4091 = vmatprep.mubr.f32.mxu0 0.0
        %4092 = vmatmul.mubr.f32.gmra.mrb[0].mxu0 %v3991
        %v4093 = vpop.f32.mrb[0].mxu0
        %v4094 = vadd.f32 0.0, %v4093
        %v4095 = vpop.f32.mrb[0].mxu0
        %4096 = vmatprep.mubr.f32.mxu0 0.0
        %4097 = vmatmul.mubr.f32.gmra.mrb[0].mxu0 %v3993
        %v4098 = vpop.f32.mrb[0].mxu0
        %v4099 = vadd.f32 0.0, %v4098
        %v4100 = vpop.f32.mrb[0].mxu0
        %4101 = vmatprep.mubr.f32.mxu0 0.0
        %4102 = vmatmul.mubr.f32.gmra.mrb[0].mxu0 %v3995
        %v4103 = vpop.f32.mrb[0].mxu0
        %v4104 = vadd.f32 0.0, %v4103
        %v4105 = vpop.f32.mrb[0].mxu0
        %4106 = vmatprep.mubr.f32.mxu0 0.0
        %4107 = vmatmul.mubr.f32.gmra.mrb[0].mxu0 %v3997
        %v4108 = vpop.f32.mrb[0].mxu0
        %v4109 = vadd.f32 0.0, %v4108
        %v4110 = vpop.f32.mrb[0].mxu0
        %4111 = vdwg.mxu0
        %v4112 = vsel %vm2831, %v4074, -inf
        %4113 = vmax.xlane.f32.xlu0 %v4112
        %v4114 = vpop.xlane.xlu0 %4113
        %v4115 = vsel %vm2831, %v4079, -inf
        %4116 = vmax.xlane.f32.xlu0 %v4115
        %v4117 = vpop.xlane.xlu0 %4116
        %v4118 = vsel %vm2831, %v4084, -inf
        %4119 = vmax.xlane.f32.xlu0 %v4118
        %v4120 = vpop.xlane.xlu0 %4119
        %v4121 = vsel %vm2831, %v4089, -inf
        %4122 = vmax.xlane.f32.xlu0 %v4121
        %v4123 = vpop.xlane.xlu0 %4122
        %v4124 = vsel %vm2831, %v4094, -inf
        %4125 = vmax.xlane.f32.xlu0 %v4124
        %v4126 = vpop.xlane.xlu0 %4125
        %v4127 = vsel %vm2831, %v4099, -inf
        %4128 = vmax.xlane.f32.xlu0 %v4127
        %v4129 = vpop.xlane.xlu0 %4128
        %v4130 = vsel %vm2831, %v4104, -inf
        %4131 = vmax.xlane.f32.xlu0 %v4130
        %v4132 = vpop.xlane.xlu0 %4131
        %v4133 = vsel %vm2831, %v4109, -inf
        %4134 = vmax.xlane.f32.xlu0 %v4133
        %v4135 = vpop.xlane.xlu0 %4134
        %v4136 = vsub.f32 %v4074, %v4114
        %v4137 = vsub.f32 %v4079, %v4117
        %v4138 = vsub.f32 %v4084, %v4120
        %v4139 = vsub.f32 %v4089, %v4123
        %v4140 = vsub.f32 %v4094, %v4126
        %v4141 = vsub.f32 %v4099, %v4129
        %v4142 = vsub.f32 %v4104, %v4132
        %v4143 = vsub.f32 %v4109, %v4135
        %v4144 = vmul.f32 %v4136, 1.442695
        %v4145 = vpow.pop %v4144
        %v4146 = vmul.f32 %v4137, 1.442695
        %v4147 = vpow.pop %v4146
        %v4148 = vmul.f32 %v4138, 1.442695
        %v4149 = vpow.pop %v4148
        %v4150 = vmul.f32 %v4139, 1.442695
        %v4151 = vpow.pop %v4150
        %v4152 = vmul.f32 %v4140, 1.442695
        %v4153 = vpow.pop %v4152
        %v4154 = vmul.f32 %v4141, 1.442695
        %v4155 = vpow.pop %v4154
        %v4156 = vmul.f32 %v4142, 1.442695
        %v4157 = vpow.pop %v4156
        %v4158 = vmul.f32 %v4143, 1.442695
        %v4159 = vpow.pop %v4158
        %v4160 = vsel %vm2831, %v4145, 0.0
        %4161 = vadd.xlane.f32.xlu0 %v4160
        %v4162 = vpop.xlane.xlu0 %4161
        %v4163 = vsel %vm2831, %v4147, 0.0
        %4164 = vadd.xlane.f32.xlu0 %v4163
        %v4165 = vpop.xlane.xlu0 %4164
        %v4166 = vsel %vm2831, %v4149, 0.0
        %4167 = vadd.xlane.f32.xlu0 %v4166
        %v4168 = vpop.xlane.xlu0 %4167
        %v4169 = vsel %vm2831, %v4151, 0.0
        %4170 = vadd.xlane.f32.xlu0 %v4169
        %v4171 = vpop.xlane.xlu0 %4170
        %v4172 = vsel %vm2831, %v4153, 0.0
        %4173 = vadd.xlane.f32.xlu0 %v4172
        %v4174 = vpop.xlane.xlu0 %4173
        %v4175 = vsel %vm2831, %v4155, 0.0
        %4176 = vadd.xlane.f32.xlu0 %v4175
        %v4177 = vpop.xlane.xlu0 %4176
        %v4178 = vsel %vm2831, %v4157, 0.0
        %4179 = vadd.xlane.f32.xlu0 %v4178
        %v4180 = vpop.xlane.xlu0 %4179
        %v4181 = vsel %vm2831, %v4159, 0.0
        %4182 = vadd.xlane.f32.xlu0 %v4181
        %v4183 = vpop.xlane.xlu0 %4182
        %v4184 = vrcp.pop %v4162
        %v4185 = vmul.f32 %v4145, %v4184
        %v4186 = vrcp.pop %v4165
        %v4187 = vmul.f32 %v4147, %v4186
        %v4188 = vrcp.pop %v4168
        %v4189 = vmul.f32 %v4149, %v4188
        %v4190 = vrcp.pop %v4171
        %v4191 = vmul.f32 %v4151, %v4190
        %v4192 = vrcp.pop %v4174
        %v4193 = vmul.f32 %v4153, %v4192
        %v4194 = vrcp.pop %v4177
        %v4195 = vmul.f32 %v4155, %v4194
        %v4196 = vrcp.pop %v4180
        %v4197 = vmul.f32 %v4157, %v4196
        %v4198 = vrcp.pop %v4183
        %v4199 = vmul.f32 %v4159, %v4198
        %4204 = vrot.lane.b32.xlu0 %v3583, 112
        %v4205 = vpop.permute.xlu0 %4204
        %4206 = vrot.lane.b32.xlu0 %v3588, 112
        %v4207 = vpop.permute.xlu0 %4206
        %4208 = vrot.lane.b32.xlu0 %v3593, 112
        %v4209 = vpop.permute.xlu0 %4208
        %4210 = vrot.lane.b32.xlu0 %v3598, 112
        %v4211 = vpop.permute.xlu0 %4210
        %v4217 = vsel %vm2831, %v4185, 0
        %v4220 = vsel %vm2831, %v4187, 0
        %v4223 = vsel %vm2831, %v4189, 0
        %v4226 = vsel %vm2831, %v4191, 0
        %v4229 = vsel %vm2831, %v4193, 0
        %v4232 = vsel %vm2831, %v4195, 0
        %v4235 = vsel %vm2831, %v4197, 0
        %v4238 = vsel %vm2831, %v4199, 0
        %4240 = vmatprep.subr.mxu0 0.0
        %4241 = vmatpush1.msra.mxu0 %v4205
        %4242 = vmatprep.subr.mxu0 0.0
        %4243 = vmatpush1.msra.mxu0 %v4207
        %4244 = vmatprep.subr.mxu0 0.0
        %4245 = vmatpush1.msra.mxu0 %v4209
        %4246 = vmatprep.subr.mxu0 0.0
        %4247 = vmatpush1.msra.mxu0 %v4211
        %4248 = vmatprep.subr.mxu0 0.0
        %4249 = vmatpush1.msra.mxu0 0.0
        %4250 = vmatprep.subr.mxu0 0.0
        %4251 = vmatpush1.msra.mxu0 0.0
        %4252 = vmatprep.subr.mxu0 0.0
        %4253 = vmatpush1.msra.mxu0 0.0
        %4254 = vmatprep.subr.mxu0 0.0
        %4255 = vmatpush1.msra.mxu0 0.0
        %4256 = vmatprep.subr.mxu0 0.0
        %4257 = vmatpush1.msra.mxu0 0.0
        %4258 = vmatprep.subr.mxu0 0.0
        %4259 = vmatpush1.msra.mxu0 0.0
        %4260 = vmatprep.subr.mxu0 0.0
        %4261 = vmatpush1.msra.mxu0 0.0
        %4262 = vmatprep.subr.mxu0 0.0
        %4263 = vmatpush1.msra.mxu0 0.0
        %4264 = vmatprep.subr.mxu0 0.0
        %4265 = vmatpush1.msra.mxu0 0.0
        %4266 = vmatprep.subr.mxu0 0.0
        %4267 = vmatpush1.msra.mxu0 0.0
        %4268 = vmatprep.subr.mxu0 0.0
        %4269 = vmatpush1.msra.mxu0 0.0
        %4270 = vmatprep.subr.mxu0 0.0
        %4271 = vmatpush1.msra.mxu0 0.0
        %4272 = vmatprep.subr.mxu0 0.0
        %4273 = vmatpush1.msra.mxu0 0.0
        %4274 = vmatprep.subr.mxu0 0.0
        %4275 = vmatpush1.msra.mxu0 0.0
        %4276 = vmatprep.subr.mxu0 0.0
        %4277 = vmatpush1.msra.mxu0 0.0
        %4278 = vmatprep.subr.mxu0 0.0
        %4279 = vmatpush1.msra.mxu0 0.0
        %4280 = vmatprep.subr.mxu0 0.0
        %4281 = vmatpush1.msra.mxu0 0.0
        %4282 = vmatprep.subr.mxu0 0.0
        %4283 = vmatpush1.msra.mxu0 0.0
        %4284 = vmatprep.subr.mxu0 0.0
        %4285 = vmatpush1.msra.mxu0 0.0
        %4286 = vmatprep.subr.mxu0 0.0
        %4287 = vmatpush1.msra.mxu0 0.0
        %4288 = vmatprep.subr.mxu0 0.0
        %4289 = vmatpush1.msra.mxu0 0.0
        %4290 = vmatprep.subr.mxu0 0.0
        %4291 = vmatpush1.msra.mxu0 0.0
        %4292 = vmatprep.subr.mxu0 0.0
        %4293 = vmatpush1.msra.mxu0 0.0
        %4294 = vmatprep.subr.mxu0 0.0
        %4295 = vmatpush1.msra.mxu0 0.0
        %4296 = vmatprep.subr.mxu0 0.0
        %4297 = vmatpush1.msra.mxu0 0.0
        %4298 = vmatprep.subr.mxu0 0.0
        %4299 = vmatpush1.msra.mxu0 0.0
        %4300 = vmatprep.subr.mxu0 0.0
        %4301 = vmatpush1.msra.mxu0 0.0
        %4302 = vmatprep.subr.mxu0 0.0
        %4303 = vmatpush1.msra.mxu0 0.0
        %4304 = vmatprep.mubr.f32.mxu0 0.0
        %4305 = vmatmul.mubr.f32.gmra.mrb[0].mxu0 %v4217
        %v4306 = vpop.f32.mrb[0].mxu0
        %v4307 = vadd.f32 0.0, %v4306
        %v4308 = vpop.f32.mrb[0].mxu0
        %4309 = vmatprep.mubr.f32.mxu0 0.0
        %4310 = vmatmul.mubr.f32.gmra.mrb[0].mxu0 %v4220
        %v4311 = vpop.f32.mrb[0].mxu0
        %v4312 = vadd.f32 0.0, %v4311
        %v4313 = vpop.f32.mrb[0].mxu0
        %4314 = vmatprep.mubr.f32.mxu0 0.0
        %4315 = vmatmul.mubr.f32.gmra.mrb[0].mxu0 %v4223
        %v4316 = vpop.f32.mrb[0].mxu0
        %v4317 = vadd.f32 0.0, %v4316
        %v4318 = vpop.f32.mrb[0].mxu0
        %4319 = vmatprep.mubr.f32.mxu0 0.0
        %4320 = vmatmul.mubr.f32.gmra.mrb[0].mxu0 %v4226
        %v4321 = vpop.f32.mrb[0].mxu0
        %v4322 = vadd.f32 0.0, %v4321
        %v4323 = vpop.f32.mrb[0].mxu0
        %4324 = vmatprep.mubr.f32.mxu0 0.0
        %4325 = vmatmul.mubr.f32.gmra.mrb[0].mxu0 %v4229
        %v4326 = vpop.f32.mrb[0].mxu0
        %v4327 = vadd.f32 0.0, %v4326
        %v4328 = vpop.f32.mrb[0].mxu0
        %4329 = vmatprep.mubr.f32.mxu0 0.0
        %4330 = vmatmul.mubr.f32.gmra.mrb[0].mxu0 %v4232
        %v4331 = vpop.f32.mrb[0].mxu0
        %v4332 = vadd.f32 0.0, %v4331
        %v4333 = vpop.f32.mrb[0].mxu0
        %4334 = vmatprep.mubr.f32.mxu0 0.0
        %4335 = vmatmul.mubr.f32.gmra.mrb[0].mxu0 %v4235
        %v4336 = vpop.f32.mrb[0].mxu0
        %v4337 = vadd.f32 0.0, %v4336
        %v4338 = vpop.f32.mrb[0].mxu0
        %4339 = vmatprep.mubr.f32.mxu0 0.0
        %4340 = vmatmul.mubr.f32.gmra.mrb[0].mxu0 %v4238
        %v4341 = vpop.f32.mrb[0].mxu0
        %v4342 = vadd.f32 0.0, %v4341
        %v4343 = vpop.f32.mrb[0].mxu0
        %4344 = vdwg.mxu0
        %4345 = vrot.lane.b32.xlu0 %v3341, 96
        %v4346 = vpop.permute.xlu0 %4345
        %4347 = vrot.lane.b32.xlu0 %v3346, 96
        %v4348 = vpop.permute.xlu0 %4347
        %4349 = vrot.lane.b32.xlu0 %v3351, 96
        %v4350 = vpop.permute.xlu0 %4349
        %4351 = vrot.lane.b32.xlu0 %v3356, 96
        %v4352 = vpop.permute.xlu0 %4351
        %4353 = vrot.lane.b32.xlu0 %v3361, 96
        %v4354 = vpop.permute.xlu0 %4353
        %4355 = vrot.lane.b32.xlu0 %v3366, 96
        %v4356 = vpop.permute.xlu0 %4355
        %4357 = vrot.lane.b32.xlu0 %v3371, 96
        %v4358 = vpop.permute.xlu0 %4357
        %4359 = vrot.lane.b32.xlu0 %v3376, 96
        %v4360 = vpop.permute.xlu0 %4359
        %4361 = vrot.lane.b32.xlu0 %v3494, 96
        %v4362 = vpop.permute.xlu0 %4361
        %4363 = vrot.lane.b32.xlu0 %v3499, 96
        %v4364 = vpop.permute.xlu0 %4363
        %4365 = vrot.lane.b32.xlu0 %v3504, 96
        %v4366 = vpop.permute.xlu0 %4365
        %4367 = vrot.lane.b32.xlu0 %v3509, 96
        %v4368 = vpop.permute.xlu0 %4367
        %v4369 = vsel %vm1118, %v4346, 0
        %v4371 = vsel %vm1118, %v4348, 0
        %v4373 = vsel %vm1118, %v4350, 0
        %v4375 = vsel %vm1118, %v4352, 0
        %v4377 = vsel %vm1118, %v4354, 0
        %v4379 = vsel %vm1118, %v4356, 0
        %v4381 = vsel %vm1118, %v4358, 0
        %v4383 = vsel %vm1118, %v4360, 0
        %v4385 = vsel %vm1118, %v4362, 0
        %v4387 = vsel %vm1118, %v4364, 0
        %v4389 = vsel %vm1118, %v4366, 0
        %v4391 = vsel %vm1118, %v4368, 0
        %4393 = vmatprep.subr.mxu0 0.0
        %4394 = vmatpush1.xpose.msra.mxu0 %v4385
        %4395 = vmatprep.subr.mxu0 0.0
        %4396 = vmatpush1.xpose.msra.mxu0 %v4387
        %4397 = vmatprep.subr.mxu0 0.0
        %4398 = vmatpush1.xpose.msra.mxu0 %v4389
        %4399 = vmatprep.subr.mxu0 0.0
        %4400 = vmatpush1.xpose.msra.mxu0 %v4391
        %4401 = vmatprep.subr.mxu0 0.0
        %4402 = vmatpush1.xpose.msra.mxu0 0.0
        %4403 = vmatprep.subr.mxu0 0.0
        %4404 = vmatpush1.xpose.msra.mxu0 0.0
        %4405 = vmatprep.subr.mxu0 0.0
        %4406 = vmatpush1.xpose.msra.mxu0 0.0
        %4407 = vmatprep.subr.mxu0 0.0
        %4408 = vmatpush1.xpose.msra.mxu0 0.0
        %4409 = vmatprep.subr.mxu0 0.0
        %4410 = vmatpush1.xpose.msra.mxu0 0.0
        %4411 = vmatprep.subr.mxu0 0.0
        %4412 = vmatpush1.xpose.msra.mxu0 0.0
        %4413 = vmatprep.subr.mxu0 0.0
        %4414 = vmatpush1.xpose.msra.mxu0 0.0
        %4415 = vmatprep.subr.mxu0 0.0
        %4416 = vmatpush1.xpose.msra.mxu0 0.0
        %4417 = vmatprep.subr.mxu0 0.0
        %4418 = vmatpush1.xpose.msra.mxu0 0.0
        %4419 = vmatprep.subr.mxu0 0.0
        %4420 = vmatpush1.xpose.msra.mxu0 0.0
        %4421 = vmatprep.subr.mxu0 0.0
        %4422 = vmatpush1.xpose.msra.mxu0 0.0
        %4423 = vmatprep.subr.mxu0 0.0
        %4424 = vmatpush1.xpose.msra.mxu0 0.0
        %4425 = vmatprep.subr.mxu0 0.0
        %4426 = vmatpush1.xpose.msra.mxu0 0.0
        %4427 = vmatprep.subr.mxu0 0.0
        %4428 = vmatpush1.xpose.msra.mxu0 0.0
        %4429 = vmatprep.subr.mxu0 0.0
        %4430 = vmatpush1.xpose.msra.mxu0 0.0
        %4431 = vmatprep.subr.mxu0 0.0
        %4432 = vmatpush1.xpose.msra.mxu0 0.0
        %4433 = vmatprep.subr.mxu0 0.0
        %4434 = vmatpush1.xpose.msra.mxu0 0.0
        %4435 = vmatprep.subr.mxu0 0.0
        %4436 = vmatpush1.xpose.msra.mxu0 0.0
        %4437 = vmatprep.subr.mxu0 0.0
        %4438 = vmatpush1.xpose.msra.mxu0 0.0
        %4439 = vmatprep.subr.mxu0 0.0
        %4440 = vmatpush1.xpose.msra.mxu0 0.0
        %4441 = vmatprep.subr.mxu0 0.0
        %4442 = vmatpush1.xpose.msra.mxu0 0.0
        %4443 = vmatprep.subr.mxu0 0.0
        %4444 = vmatpush1.xpose.msra.mxu0 0.0
        %4445 = vmatprep.subr.mxu0 0.0
        %4446 = vmatpush1.xpose.msra.mxu0 0.0
        %4447 = vmatprep.subr.mxu0 0.0
        %4448 = vmatpush1.xpose.msra.mxu0 0.0
        %4449 = vmatprep.subr.mxu0 0.0
        %4450 = vmatpush1.xpose.msra.mxu0 0.0
        %4451 = vmatprep.subr.mxu0 0.0
        %4452 = vmatpush1.xpose.msra.mxu0 0.0
        %4453 = vmatprep.subr.mxu0 0.0
        %4454 = vmatpush1.xpose.msra.mxu0 0.0
        %4455 = vmatprep.subr.mxu0 0.0
        %4456 = vmatpush1.xpose.msra.mxu0 0.0
        %4457 = vmatprep.mubr.f32.mxu0 0.0
        %4458 = vmatmul.mubr.f32.gmra.mrb[0].mxu0 %v4369
        %v4459 = vpop.f32.mrb[0].mxu0
        %v4460 = vadd.f32 0.0, %v4459
        %v4461 = vpop.f32.mrb[0].mxu0
        %4462 = vmatprep.mubr.f32.mxu0 0.0
        %4463 = vmatmul.mubr.f32.gmra.mrb[0].mxu0 %v4371
        %v4464 = vpop.f32.mrb[0].mxu0
        %v4465 = vadd.f32 0.0, %v4464
        %v4466 = vpop.f32.mrb[0].mxu0
        %4467 = vmatprep.mubr.f32.mxu0 0.0
        %4468 = vmatmul.mubr.f32.gmra.mrb[0].mxu0 %v4373
        %v4469 = vpop.f32.mrb[0].mxu0
        %v4470 = vadd.f32 0.0, %v4469
        %v4471 = vpop.f32.mrb[0].mxu0
        %4472 = vmatprep.mubr.f32.mxu0 0.0
        %4473 = vmatmul.mubr.f32.gmra.mrb[0].mxu0 %v4375
        %v4474 = vpop.f32.mrb[0].mxu0
        %v4475 = vadd.f32 0.0, %v4474
        %v4476 = vpop.f32.mrb[0].mxu0
        %4477 = vmatprep.mubr.f32.mxu0 0.0
        %4478 = vmatmul.mubr.f32.gmra.mrb[0].mxu0 %v4377
        %v4479 = vpop.f32.mrb[0].mxu0
        %v4480 = vadd.f32 0.0, %v4479
        %v4481 = vpop.f32.mrb[0].mxu0
        %4482 = vmatprep.mubr.f32.mxu0 0.0
        %4483 = vmatmul.mubr.f32.gmra.mrb[0].mxu0 %v4379
        %v4484 = vpop.f32.mrb[0].mxu0
        %v4485 = vadd.f32 0.0, %v4484
        %v4486 = vpop.f32.mrb[0].mxu0
        %4487 = vmatprep.mubr.f32.mxu0 0.0
        %4488 = vmatmul.mubr.f32.gmra.mrb[0].mxu0 %v4381
        %v4489 = vpop.f32.mrb[0].mxu0
        %v4490 = vadd.f32 0.0, %v4489
        %v4491 = vpop.f32.mrb[0].mxu0
        %4492 = vmatprep.mubr.f32.mxu0 0.0
        %4493 = vmatmul.mubr.f32.gmra.mrb[0].mxu0 %v4383
        %v4494 = vpop.f32.mrb[0].mxu0
        %v4495 = vadd.f32 0.0, %v4494
        %v4496 = vpop.f32.mrb[0].mxu0
        %4497 = vdwg.mxu0
        %v4498 = vsel %vm2831, %v4460, -inf
        %4499 = vmax.xlane.f32.xlu0 %v4498
        %v4500 = vpop.xlane.xlu0 %4499
        %v4501 = vsel %vm2831, %v4465, -inf
        %4502 = vmax.xlane.f32.xlu0 %v4501
        %v4503 = vpop.xlane.xlu0 %4502
        %v4504 = vsel %vm2831, %v4470, -inf
        %4505 = vmax.xlane.f32.xlu0 %v4504
        %v4506 = vpop.xlane.xlu0 %4505
        %v4507 = vsel %vm2831, %v4475, -inf
        %4508 = vmax.xlane.f32.xlu0 %v4507
        %v4509 = vpop.xlane.xlu0 %4508
        %v4510 = vsel %vm2831, %v4480, -inf
        %4511 = vmax.xlane.f32.xlu0 %v4510
        %v4512 = vpop.xlane.xlu0 %4511
        %v4513 = vsel %vm2831, %v4485, -inf
        %4514 = vmax.xlane.f32.xlu0 %v4513
        %v4515 = vpop.xlane.xlu0 %4514
        %v4516 = vsel %vm2831, %v4490, -inf
        %4517 = vmax.xlane.f32.xlu0 %v4516
        %v4518 = vpop.xlane.xlu0 %4517
        %v4519 = vsel %vm2831, %v4495, -inf
        %4520 = vmax.xlane.f32.xlu0 %v4519
        %v4521 = vpop.xlane.xlu0 %4520
        %v4522 = vsub.f32 %v4460, %v4500
        %v4523 = vsub.f32 %v4465, %v4503
        %v4524 = vsub.f32 %v4470, %v4506
        %v4525 = vsub.f32 %v4475, %v4509
        %v4526 = vsub.f32 %v4480, %v4512
        %v4527 = vsub.f32 %v4485, %v4515
        %v4528 = vsub.f32 %v4490, %v4518
        %v4529 = vsub.f32 %v4495, %v4521
        %v4530 = vmul.f32 %v4522, 1.442695
        %v4531 = vpow.pop %v4530
        %v4532 = vmul.f32 %v4523, 1.442695
        %v4533 = vpow.pop %v4532
        %v4534 = vmul.f32 %v4524, 1.442695
        %v4535 = vpow.pop %v4534
        %v4536 = vmul.f32 %v4525, 1.442695
        %v4537 = vpow.pop %v4536
        %v4538 = vmul.f32 %v4526, 1.442695
        %v4539 = vpow.pop %v4538
        %v4540 = vmul.f32 %v4527, 1.442695
        %v4541 = vpow.pop %v4540
        %v4542 = vmul.f32 %v4528, 1.442695
        %v4543 = vpow.pop %v4542
        %v4544 = vmul.f32 %v4529, 1.442695
        %v4545 = vpow.pop %v4544
        %v4546 = vsel %vm2831, %v4531, 0.0
        %4547 = vadd.xlane.f32.xlu0 %v4546
        %v4548 = vpop.xlane.xlu0 %4547
        %v4549 = vsel %vm2831, %v4533, 0.0
        %4550 = vadd.xlane.f32.xlu0 %v4549
        %v4551 = vpop.xlane.xlu0 %4550
        %v4552 = vsel %vm2831, %v4535, 0.0
        %4553 = vadd.xlane.f32.xlu0 %v4552
        %v4554 = vpop.xlane.xlu0 %4553
        %v4555 = vsel %vm2831, %v4537, 0.0
        %4556 = vadd.xlane.f32.xlu0 %v4555
        %v4557 = vpop.xlane.xlu0 %4556
        %v4558 = vsel %vm2831, %v4539, 0.0
        %4559 = vadd.xlane.f32.xlu0 %v4558
        %v4560 = vpop.xlane.xlu0 %4559
        %v4561 = vsel %vm2831, %v4541, 0.0
        %4562 = vadd.xlane.f32.xlu0 %v4561
        %v4563 = vpop.xlane.xlu0 %4562
        %v4564 = vsel %vm2831, %v4543, 0.0
        %4565 = vadd.xlane.f32.xlu0 %v4564
        %v4566 = vpop.xlane.xlu0 %4565
        %v4567 = vsel %vm2831, %v4545, 0.0
        %4568 = vadd.xlane.f32.xlu0 %v4567
        %v4569 = vpop.xlane.xlu0 %4568
        %v4570 = vrcp.pop %v4548
        %v4571 = vmul.f32 %v4531, %v4570
        %v4572 = vrcp.pop %v4551
        %v4573 = vmul.f32 %v4533, %v4572
        %v4574 = vrcp.pop %v4554
        %v4575 = vmul.f32 %v4535, %v4574
        %v4576 = vrcp.pop %v4557
        %v4577 = vmul.f32 %v4537, %v4576
        %v4578 = vrcp.pop %v4560
        %v4579 = vmul.f32 %v4539, %v4578
        %v4580 = vrcp.pop %v4563
        %v4581 = vmul.f32 %v4541, %v4580
        %v4582 = vrcp.pop %v4566
        %v4583 = vmul.f32 %v4543, %v4582
        %v4584 = vrcp.pop %v4569
        %v4585 = vmul.f32 %v4545, %v4584
        %4586 = vrot.lane.b32.xlu0 %v3583, 96
        %v4587 = vpop.permute.xlu0 %4586
        %4588 = vrot.lane.b32.xlu0 %v3588, 96
        %v4589 = vpop.permute.xlu0 %4588
        %4590 = vrot.lane.b32.xlu0 %v3593, 96
        %v4591 = vpop.permute.xlu0 %4590
        %4592 = vrot.lane.b32.xlu0 %v3598, 96
        %v4593 = vpop.permute.xlu0 %4592
        %v4599 = vsel %vm2831, %v4571, 0
        %v4602 = vsel %vm2831, %v4573, 0
        %v4605 = vsel %vm2831, %v4575, 0
        %v4608 = vsel %vm2831, %v4577, 0
        %v4611 = vsel %vm2831, %v4579, 0
        %v4614 = vsel %vm2831, %v4581, 0
        %v4617 = vsel %vm2831, %v4583, 0
        %v4620 = vsel %vm2831, %v4585, 0
        %4622 = vmatprep.subr.mxu0 0.0
        %4623 = vmatpush1.msra.mxu0 %v4587
        %4624 = vmatprep.subr.mxu0 0.0
        %4625 = vmatpush1.msra.mxu0 %v4589
        %4626 = vmatprep.subr.mxu0 0.0
        %4627 = vmatpush1.msra.mxu0 %v4591
        %4628 = vmatprep.subr.mxu0 0.0
        %4629 = vmatpush1.msra.mxu0 %v4593
        %4630 = vmatprep.subr.mxu0 0.0
        %4631 = vmatpush1.msra.mxu0 0.0
        %4632 = vmatprep.subr.mxu0 0.0
        %4633 = vmatpush1.msra.mxu0 0.0
        %4634 = vmatprep.subr.mxu0 0.0
        %4635 = vmatpush1.msra.mxu0 0.0
        %4636 = vmatprep.subr.mxu0 0.0
        %4637 = vmatpush1.msra.mxu0 0.0
        %4638 = vmatprep.subr.mxu0 0.0
        %4639 = vmatpush1.msra.mxu0 0.0
        %4640 = vmatprep.subr.mxu0 0.0
        %4641 = vmatpush1.msra.mxu0 0.0
        %4642 = vmatprep.subr.mxu0 0.0
        %4643 = vmatpush1.msra.mxu0 0.0
        %4644 = vmatprep.subr.mxu0 0.0
        %4645 = vmatpush1.msra.mxu0 0.0
        %4646 = vmatprep.subr.mxu0 0.0
        %4647 = vmatpush1.msra.mxu0 0.0
        %4648 = vmatprep.subr.mxu0 0.0
        %4649 = vmatpush1.msra.mxu0 0.0
        %4650 = vmatprep.subr.mxu0 0.0
        %4651 = vmatpush1.msra.mxu0 0.0
        %4652 = vmatprep.subr.mxu0 0.0
        %4653 = vmatpush1.msra.mxu0 0.0
        %4654 = vmatprep.subr.mxu0 0.0
        %4655 = vmatpush1.msra.mxu0 0.0
        %4656 = vmatprep.subr.mxu0 0.0
        %4657 = vmatpush1.msra.mxu0 0.0
        %4658 = vmatprep.subr.mxu0 0.0
        %4659 = vmatpush1.msra.mxu0 0.0
        %4660 = vmatprep.subr.mxu0 0.0
        %4661 = vmatpush1.msra.mxu0 0.0
        %4662 = vmatprep.subr.mxu0 0.0
        %4663 = vmatpush1.msra.mxu0 0.0
        %4664 = vmatprep.subr.mxu0 0.0
        %4665 = vmatpush1.msra.mxu0 0.0
        %4666 = vmatprep.subr.mxu0 0.0
        %4667 = vmatpush1.msra.mxu0 0.0
        %4668 = vmatprep.subr.mxu0 0.0
        %4669 = vmatpush1.msra.mxu0 0.0
        %4670 = vmatprep.subr.mxu0 0.0
        %4671 = vmatpush1.msra.mxu0 0.0
        %4672 = vmatprep.subr.mxu0 0.0
        %4673 = vmatpush1.msra.mxu0 0.0
        %4674 = vmatprep.subr.mxu0 0.0
        %4675 = vmatpush1.msra.mxu0 0.0
        %4676 = vmatprep.subr.mxu0 0.0
        %4677 = vmatpush1.msra.mxu0 0.0
        %4678 = vmatprep.subr.mxu0 0.0
        %4679 = vmatpush1.msra.mxu0 0.0
        %4680 = vmatprep.subr.mxu0 0.0
        %4681 = vmatpush1.msra.mxu0 0.0
        %4682 = vmatprep.subr.mxu0 0.0
        %4683 = vmatpush1.msra.mxu0 0.0
        %4684 = vmatprep.subr.mxu0 0.0
        %4685 = vmatpush1.msra.mxu0 0.0
        %4686 = vmatprep.mubr.f32.mxu0 0.0
        %4687 = vmatmul.mubr.f32.gmra.mrb[0].mxu0 %v4599
        %v4688 = vpop.f32.mrb[0].mxu0
        %v4689 = vadd.f32 0.0, %v4688
        %v4690 = vpop.f32.mrb[0].mxu0
        %4691 = vmatprep.mubr.f32.mxu0 0.0
        %4692 = vmatmul.mubr.f32.gmra.mrb[0].mxu0 %v4602
        %v4693 = vpop.f32.mrb[0].mxu0
        %v4694 = vadd.f32 0.0, %v4693
        %v4695 = vpop.f32.mrb[0].mxu0
        %4696 = vmatprep.mubr.f32.mxu0 0.0
        %4697 = vmatmul.mubr.f32.gmra.mrb[0].mxu0 %v4605
        %v4698 = vpop.f32.mrb[0].mxu0
        %v4699 = vadd.f32 0.0, %v4698
        %v4700 = vpop.f32.mrb[0].mxu0
        %4701 = vmatprep.mubr.f32.mxu0 0.0
        %4702 = vmatmul.mubr.f32.gmra.mrb[0].mxu0 %v4608
        %v4703 = vpop.f32.mrb[0].mxu0
        %v4704 = vadd.f32 0.0, %v4703
        %v4705 = vpop.f32.mrb[0].mxu0
        %4706 = vmatprep.mubr.f32.mxu0 0.0
        %4707 = vmatmul.mubr.f32.gmra.mrb[0].mxu0 %v4611
        %v4708 = vpop.f32.mrb[0].mxu0
        %v4709 = vadd.f32 0.0, %v4708
        %v4710 = vpop.f32.mrb[0].mxu0
        %4711 = vmatprep.mubr.f32.mxu0 0.0
        %4712 = vmatmul.mubr.f32.gmra.mrb[0].mxu0 %v4614
        %v4713 = vpop.f32.mrb[0].mxu0
        %v4714 = vadd.f32 0.0, %v4713
        %v4715 = vpop.f32.mrb[0].mxu0
        %4716 = vmatprep.mubr.f32.mxu0 0.0
        %4717 = vmatmul.mubr.f32.gmra.mrb[0].mxu0 %v4617
        %v4718 = vpop.f32.mrb[0].mxu0
        %v4719 = vadd.f32 0.0, %v4718
        %v4720 = vpop.f32.mrb[0].mxu0
        %4721 = vmatprep.mubr.f32.mxu0 0.0
        %4722 = vmatmul.mubr.f32.gmra.mrb[0].mxu0 %v4620
        %v4723 = vpop.f32.mrb[0].mxu0
        %v4724 = vadd.f32 0.0, %v4723
        %v4725 = vpop.f32.mrb[0].mxu0
        %4726 = vdwg.mxu0
        %4727 = vrot.lane.b32.xlu0 %v3341, 80
        %v4728 = vpop.permute.xlu0 %4727
        %4729 = vrot.lane.b32.xlu0 %v3346, 80
        %v4730 = vpop.permute.xlu0 %4729
        %4731 = vrot.lane.b32.xlu0 %v3351, 80
        %v4732 = vpop.permute.xlu0 %4731
        %4733 = vrot.lane.b32.xlu0 %v3356, 80
        %v4734 = vpop.permute.xlu0 %4733
        %4735 = vrot.lane.b32.xlu0 %v3361, 80
        %v4736 = vpop.permute.xlu0 %4735
        %4737 = vrot.lane.b32.xlu0 %v3366, 80
        %v4738 = vpop.permute.xlu0 %4737
        %4739 = vrot.lane.b32.xlu0 %v3371, 80
        %v4740 = vpop.permute.xlu0 %4739
        %4741 = vrot.lane.b32.xlu0 %v3376, 80
        %v4742 = vpop.permute.xlu0 %4741
        %4743 = vrot.lane.b32.xlu0 %v3494, 80
        %v4744 = vpop.permute.xlu0 %4743
        %4745 = vrot.lane.b32.xlu0 %v3499, 80
        %v4746 = vpop.permute.xlu0 %4745
        %4747 = vrot.lane.b32.xlu0 %v3504, 80
        %v4748 = vpop.permute.xlu0 %4747
        %4749 = vrot.lane.b32.xlu0 %v3509, 80
        %v4750 = vpop.permute.xlu0 %4749
        %v4751 = vsel %vm1118, %v4728, 0
        %v4753 = vsel %vm1118, %v4730, 0
        %v4755 = vsel %vm1118, %v4732, 0
        %v4757 = vsel %vm1118, %v4734, 0
        %v4759 = vsel %vm1118, %v4736, 0
        %v4761 = vsel %vm1118, %v4738, 0
        %v4763 = vsel %vm1118, %v4740, 0
        %v4765 = vsel %vm1118, %v4742, 0
        %v4767 = vsel %vm1118, %v4744, 0
        %v4769 = vsel %vm1118, %v4746, 0
        %v4771 = vsel %vm1118, %v4748, 0
        %v4773 = vsel %vm1118, %v4750, 0
        %4775 = vmatprep.subr.mxu0 0.0
        %4776 = vmatpush1.xpose.msra.mxu0 %v4767
        %4777 = vmatprep.subr.mxu0 0.0
        %4778 = vmatpush1.xpose.msra.mxu0 %v4769
        %4779 = vmatprep.subr.mxu0 0.0
        %4780 = vmatpush1.xpose.msra.mxu0 %v4771
        %4781 = vmatprep.subr.mxu0 0.0
        %4782 = vmatpush1.xpose.msra.mxu0 %v4773
        %4783 = vmatprep.subr.mxu0 0.0
        %4784 = vmatpush1.xpose.msra.mxu0 0.0
        %4785 = vmatprep.subr.mxu0 0.0
        %4786 = vmatpush1.xpose.msra.mxu0 0.0
        %4787 = vmatprep.subr.mxu0 0.0
        %4788 = vmatpush1.xpose.msra.mxu0 0.0
        %4789 = vmatprep.subr.mxu0 0.0
        %4790 = vmatpush1.xpose.msra.mxu0 0.0
        %4791 = vmatprep.subr.mxu0 0.0
        %4792 = vmatpush1.xpose.msra.mxu0 0.0
        %4793 = vmatprep.subr.mxu0 0.0
        %4794 = vmatpush1.xpose.msra.mxu0 0.0
        %4795 = vmatprep.subr.mxu0 0.0
        %4796 = vmatpush1.xpose.msra.mxu0 0.0
        %4797 = vmatprep.subr.mxu0 0.0
        %4798 = vmatpush1.xpose.msra.mxu0 0.0
        %4799 = vmatprep.subr.mxu0 0.0
        %4800 = vmatpush1.xpose.msra.mxu0 0.0
        %4801 = vmatprep.subr.mxu0 0.0
        %4802 = vmatpush1.xpose.msra.mxu0 0.0
        %4803 = vmatprep.subr.mxu0 0.0
        %4804 = vmatpush1.xpose.msra.mxu0 0.0
        %4805 = vmatprep.subr.mxu0 0.0
        %4806 = vmatpush1.xpose.msra.mxu0 0.0
        %4807 = vmatprep.subr.mxu0 0.0
        %4808 = vmatpush1.xpose.msra.mxu0 0.0
        %4809 = vmatprep.subr.mxu0 0.0
        %4810 = vmatpush1.xpose.msra.mxu0 0.0
        %4811 = vmatprep.subr.mxu0 0.0
        %4812 = vmatpush1.xpose.msra.mxu0 0.0
        %4813 = vmatprep.subr.mxu0 0.0
        %4814 = vmatpush1.xpose.msra.mxu0 0.0
        %4815 = vmatprep.subr.mxu0 0.0
        %4816 = vmatpush1.xpose.msra.mxu0 0.0
        %4817 = vmatprep.subr.mxu0 0.0
        %4818 = vmatpush1.xpose.msra.mxu0 0.0
        %4819 = vmatprep.subr.mxu0 0.0
        %4820 = vmatpush1.xpose.msra.mxu0 0.0
        %4821 = vmatprep.subr.mxu0 0.0
        %4822 = vmatpush1.xpose.msra.mxu0 0.0
        %4823 = vmatprep.subr.mxu0 0.0
        %4824 = vmatpush1.xpose.msra.mxu0 0.0
        %4825 = vmatprep.subr.mxu0 0.0
        %4826 = vmatpush1.xpose.msra.mxu0 0.0
        %4827 = vmatprep.subr.mxu0 0.0
        %4828 = vmatpush1.xpose.msra.mxu0 0.0
        %4829 = vmatprep.subr.mxu0 0.0
        %4830 = vmatpush1.xpose.msra.mxu0 0.0
        %4831 = vmatprep.subr.mxu0 0.0
        %4832 = vmatpush1.xpose.msra.mxu0 0.0
        %4833 = vmatprep.subr.mxu0 0.0
        %4834 = vmatpush1.xpose.msra.mxu0 0.0
        %4835 = vmatprep.subr.mxu0 0.0
        %4836 = vmatpush1.xpose.msra.mxu0 0.0
        %4837 = vmatprep.subr.mxu0 0.0
        %4838 = vmatpush1.xpose.msra.mxu0 0.0
        %4839 = vmatprep.mubr.f32.mxu0 0.0
        %4840 = vmatmul.mubr.f32.gmra.mrb[0].mxu0 %v4751
        %v4841 = vpop.f32.mrb[0].mxu0
        %v4842 = vadd.f32 0.0, %v4841
        %v4843 = vpop.f32.mrb[0].mxu0
        %4844 = vmatprep.mubr.f32.mxu0 0.0
        %4845 = vmatmul.mubr.f32.gmra.mrb[0].mxu0 %v4753
        %v4846 = vpop.f32.mrb[0].mxu0
        %v4847 = vadd.f32 0.0, %v4846
        %v4848 = vpop.f32.mrb[0].mxu0
        %4849 = vmatprep.mubr.f32.mxu0 0.0
        %4850 = vmatmul.mubr.f32.gmra.mrb[0].mxu0 %v4755
        %v4851 = vpop.f32.mrb[0].mxu0
        %v4852 = vadd.f32 0.0, %v4851
        %v4853 = vpop.f32.mrb[0].mxu0
        %4854 = vmatprep.mubr.f32.mxu0 0.0
        %4855 = vmatmul.mubr.f32.gmra.mrb[0].mxu0 %v4757
        %v4856 = vpop.f32.mrb[0].mxu0
        %v4857 = vadd.f32 0.0, %v4856
        %v4858 = vpop.f32.mrb[0].mxu0
        %4859 = vmatprep.mubr.f32.mxu0 0.0
        %4860 = vmatmul.mubr.f32.gmra.mrb[0].mxu0 %v4759
        %v4861 = vpop.f32.mrb[0].mxu0
        %v4862 = vadd.f32 0.0, %v4861
        %v4863 = vpop.f32.mrb[0].mxu0
        %4864 = vmatprep.mubr.f32.mxu0 0.0
        %4865 = vmatmul.mubr.f32.gmra.mrb[0].mxu0 %v4761
        %v4866 = vpop.f32.mrb[0].mxu0
        %v4867 = vadd.f32 0.0, %v4866
        %v4868 = vpop.f32.mrb[0].mxu0
        %4869 = vmatprep.mubr.f32.mxu0 0.0
        %4870 = vmatmul.mubr.f32.gmra.mrb[0].mxu0 %v4763
        %v4871 = vpop.f32.mrb[0].mxu0
        %v4872 = vadd.f32 0.0, %v4871
        %v4873 = vpop.f32.mrb[0].mxu0
        %4874 = vmatprep.mubr.f32.mxu0 0.0
        %4875 = vmatmul.mubr.f32.gmra.mrb[0].mxu0 %v4765
        %v4876 = vpop.f32.mrb[0].mxu0
        %v4877 = vadd.f32 0.0, %v4876
        %v4878 = vpop.f32.mrb[0].mxu0
        %4879 = vdwg.mxu0
        %v4880 = vsel %vm2831, %v4842, -inf
        %4881 = vmax.xlane.f32.xlu0 %v4880
        %v4882 = vpop.xlane.xlu0 %4881
        %v4883 = vsel %vm2831, %v4847, -inf
        %4884 = vmax.xlane.f32.xlu0 %v4883
        %v4885 = vpop.xlane.xlu0 %4884
        %v4886 = vsel %vm2831, %v4852, -inf
        %4887 = vmax.xlane.f32.xlu0 %v4886
        %v4888 = vpop.xlane.xlu0 %4887
        %v4889 = vsel %vm2831, %v4857, -inf
        %4890 = vmax.xlane.f32.xlu0 %v4889
        %v4891 = vpop.xlane.xlu0 %4890
        %v4892 = vsel %vm2831, %v4862, -inf
        %4893 = vmax.xlane.f32.xlu0 %v4892
        %v4894 = vpop.xlane.xlu0 %4893
        %v4895 = vsel %vm2831, %v4867, -inf
        %4896 = vmax.xlane.f32.xlu0 %v4895
        %v4897 = vpop.xlane.xlu0 %4896
        %v4898 = vsel %vm2831, %v4872, -inf
        %4899 = vmax.xlane.f32.xlu0 %v4898
        %v4900 = vpop.xlane.xlu0 %4899
        %v4901 = vsel %vm2831, %v4877, -inf
        %4902 = vmax.xlane.f32.xlu0 %v4901
        %v4903 = vpop.xlane.xlu0 %4902
        %v4904 = vsub.f32 %v4842, %v4882
        %v4905 = vsub.f32 %v4847, %v4885
        %v4906 = vsub.f32 %v4852, %v4888
        %v4907 = vsub.f32 %v4857, %v4891
        %v4908 = vsub.f32 %v4862, %v4894
        %v4909 = vsub.f32 %v4867, %v4897
        %v4910 = vsub.f32 %v4872, %v4900
        %v4911 = vsub.f32 %v4877, %v4903
        %v4912 = vmul.f32 %v4904, 1.442695
        %v4913 = vpow.pop %v4912
        %v4914 = vmul.f32 %v4905, 1.442695
        %v4915 = vpow.pop %v4914
        %v4916 = vmul.f32 %v4906, 1.442695
        %v4917 = vpow.pop %v4916
        %v4918 = vmul.f32 %v4907, 1.442695
        %v4919 = vpow.pop %v4918
        %v4920 = vmul.f32 %v4908, 1.442695
        %v4921 = vpow.pop %v4920
        %v4922 = vmul.f32 %v4909, 1.442695
        %v4923 = vpow.pop %v4922
        %v4924 = vmul.f32 %v4910, 1.442695
        %v4925 = vpow.pop %v4924
        %v4926 = vmul.f32 %v4911, 1.442695
        %v4927 = vpow.pop %v4926
        %v4928 = vsel %vm2831, %v4913, 0.0
        %4929 = vadd.xlane.f32.xlu0 %v4928
        %v4930 = vpop.xlane.xlu0 %4929
        %v4931 = vsel %vm2831, %v4915, 0.0
        %4932 = vadd.xlane.f32.xlu0 %v4931
        %v4933 = vpop.xlane.xlu0 %4932
        %v4934 = vsel %vm2831, %v4917, 0.0
        %4935 = vadd.xlane.f32.xlu0 %v4934
        %v4936 = vpop.xlane.xlu0 %4935
        %v4937 = vsel %vm2831, %v4919, 0.0
        %4938 = vadd.xlane.f32.xlu0 %v4937
        %v4939 = vpop.xlane.xlu0 %4938
        %v4940 = vsel %vm2831, %v4921, 0.0
        %4941 = vadd.xlane.f32.xlu0 %v4940
        %v4942 = vpop.xlane.xlu0 %4941
        %v4943 = vsel %vm2831, %v4923, 0.0
        %4944 = vadd.xlane.f32.xlu0 %v4943
        %v4945 = vpop.xlane.xlu0 %4944
        %v4946 = vsel %vm2831, %v4925, 0.0
        %4947 = vadd.xlane.f32.xlu0 %v4946
        %v4948 = vpop.xlane.xlu0 %4947
        %v4949 = vsel %vm2831, %v4927, 0.0
        %4950 = vadd.xlane.f32.xlu0 %v4949
        %v4951 = vpop.xlane.xlu0 %4950
        %v4952 = vrcp.pop %v4930
        %v4953 = vmul.f32 %v4913, %v4952
        %v4954 = vrcp.pop %v4933
        %v4955 = vmul.f32 %v4915, %v4954
        %v4956 = vrcp.pop %v4936
        %v4957 = vmul.f32 %v4917, %v4956
        %v4958 = vrcp.pop %v4939
        %v4959 = vmul.f32 %v4919, %v4958
        %v4960 = vrcp.pop %v4942
        %v4961 = vmul.f32 %v4921, %v4960
        %v4962 = vrcp.pop %v4945
        %v4963 = vmul.f32 %v4923, %v4962
        %v4964 = vrcp.pop %v4948
        %v4965 = vmul.f32 %v4925, %v4964
        %v4966 = vrcp.pop %v4951
        %v4967 = vmul.f32 %v4927, %v4966
        %4968 = vrot.lane.b32.xlu0 %v3583, 80
        %v4969 = vpop.permute.xlu0 %4968
        %4970 = vrot.lane.b32.xlu0 %v3588, 80
        %v4971 = vpop.permute.xlu0 %4970
        %4972 = vrot.lane.b32.xlu0 %v3593, 80
        %v4973 = vpop.permute.xlu0 %4972
        %4974 = vrot.lane.b32.xlu0 %v3598, 80
        %v4975 = vpop.permute.xlu0 %4974
        %v4981 = vsel %vm2831, %v4953, 0
        %v4984 = vsel %vm2831, %v4955, 0
        %v4987 = vsel %vm2831, %v4957, 0
        %v4990 = vsel %vm2831, %v4959, 0
        %v4993 = vsel %vm2831, %v4961, 0
        %v4996 = vsel %vm2831, %v4963, 0
        %v4999 = vsel %vm2831, %v4965, 0
        %v5002 = vsel %vm2831, %v4967, 0
        %5004 = vmatprep.subr.mxu0 0.0
        %5005 = vmatpush1.msra.mxu0 %v4969
        %5006 = vmatprep.subr.mxu0 0.0
        %5007 = vmatpush1.msra.mxu0 %v4971
        %5008 = vmatprep.subr.mxu0 0.0
        %5009 = vmatpush1.msra.mxu0 %v4973
        %5010 = vmatprep.subr.mxu0 0.0
        %5011 = vmatpush1.msra.mxu0 %v4975
        %5012 = vmatprep.subr.mxu0 0.0
        %5013 = vmatpush1.msra.mxu0 0.0
        %5014 = vmatprep.subr.mxu0 0.0
        %5015 = vmatpush1.msra.mxu0 0.0
        %5016 = vmatprep.subr.mxu0 0.0
        %5017 = vmatpush1.msra.mxu0 0.0
        %5018 = vmatprep.subr.mxu0 0.0
        %5019 = vmatpush1.msra.mxu0 0.0
        %5020 = vmatprep.subr.mxu0 0.0
        %5021 = vmatpush1.msra.mxu0 0.0
        %5022 = vmatprep.subr.mxu0 0.0
        %5023 = vmatpush1.msra.mxu0 0.0
        %5024 = vmatprep.subr.mxu0 0.0
        %5025 = vmatpush1.msra.mxu0 0.0
        %5026 = vmatprep.subr.mxu0 0.0
        %5027 = vmatpush1.msra.mxu0 0.0
        %5028 = vmatprep.subr.mxu0 0.0
        %5029 = vmatpush1.msra.mxu0 0.0
        %5030 = vmatprep.subr.mxu0 0.0
        %5031 = vmatpush1.msra.mxu0 0.0
        %5032 = vmatprep.subr.mxu0 0.0
        %5033 = vmatpush1.msra.mxu0 0.0
        %5034 = vmatprep.subr.mxu0 0.0
        %5035 = vmatpush1.msra.mxu0 0.0
        %5036 = vmatprep.subr.mxu0 0.0
        %5037 = vmatpush1.msra.mxu0 0.0
        %5038 = vmatprep.subr.mxu0 0.0
        %5039 = vmatpush1.msra.mxu0 0.0
        %5040 = vmatprep.subr.mxu0 0.0
        %5041 = vmatpush1.msra.mxu0 0.0
        %5042 = vmatprep.subr.mxu0 0.0
        %5043 = vmatpush1.msra.mxu0 0.0
        %5044 = vmatprep.subr.mxu0 0.0
        %5045 = vmatpush1.msra.mxu0 0.0
        %5046 = vmatprep.subr.mxu0 0.0
        %5047 = vmatpush1.msra.mxu0 0.0
        %5048 = vmatprep.subr.mxu0 0.0
        %5049 = vmatpush1.msra.mxu0 0.0
        %5050 = vmatprep.subr.mxu0 0.0
        %5051 = vmatpush1.msra.mxu0 0.0
        %5052 = vmatprep.subr.mxu0 0.0
        %5053 = vmatpush1.msra.mxu0 0.0
        %5054 = vmatprep.subr.mxu0 0.0
        %5055 = vmatpush1.msra.mxu0 0.0
        %5056 = vmatprep.subr.mxu0 0.0
        %5057 = vmatpush1.msra.mxu0 0.0
        %5058 = vmatprep.subr.mxu0 0.0
        %5059 = vmatpush1.msra.mxu0 0.0
        %5060 = vmatprep.subr.mxu0 0.0
        %5061 = vmatpush1.msra.mxu0 0.0
        %5062 = vmatprep.subr.mxu0 0.0
        %5063 = vmatpush1.msra.mxu0 0.0
        %5064 = vmatprep.subr.mxu0 0.0
        %5065 = vmatpush1.msra.mxu0 0.0
        %5066 = vmatprep.subr.mxu0 0.0
        %5067 = vmatpush1.msra.mxu0 0.0
        %5068 = vmatprep.mubr.f32.mxu0 0.0
        %5069 = vmatmul.mubr.f32.gmra.mrb[0].mxu0 %v4981
        %v5070 = vpop.f32.mrb[0].mxu0
        %v5071 = vadd.f32 0.0, %v5070
        %v5072 = vpop.f32.mrb[0].mxu0
        %5073 = vmatprep.mubr.f32.mxu0 0.0
        %5074 = vmatmul.mubr.f32.gmra.mrb[0].mxu0 %v4984
        %v5075 = vpop.f32.mrb[0].mxu0
        %v5076 = vadd.f32 0.0, %v5075
        %v5077 = vpop.f32.mrb[0].mxu0
        %5078 = vmatprep.mubr.f32.mxu0 0.0
        %5079 = vmatmul.mubr.f32.gmra.mrb[0].mxu0 %v4987
        %v5080 = vpop.f32.mrb[0].mxu0
        %v5081 = vadd.f32 0.0, %v5080
        %v5082 = vpop.f32.mrb[0].mxu0
        %5083 = vmatprep.mubr.f32.mxu0 0.0
        %5084 = vmatmul.mubr.f32.gmra.mrb[0].mxu0 %v4990
        %v5085 = vpop.f32.mrb[0].mxu0
        %v5086 = vadd.f32 0.0, %v5085
        %v5087 = vpop.f32.mrb[0].mxu0
        %5088 = vmatprep.mubr.f32.mxu0 0.0
        %5089 = vmatmul.mubr.f32.gmra.mrb[0].mxu0 %v4993
        %v5090 = vpop.f32.mrb[0].mxu0
        %v5091 = vadd.f32 0.0, %v5090
        %v5092 = vpop.f32.mrb[0].mxu0
        %5093 = vmatprep.mubr.f32.mxu0 0.0
        %5094 = vmatmul.mubr.f32.gmra.mrb[0].mxu0 %v4996
        %v5095 = vpop.f32.mrb[0].mxu0
        %v5096 = vadd.f32 0.0, %v5095
        %v5097 = vpop.f32.mrb[0].mxu0
        %5098 = vmatprep.mubr.f32.mxu0 0.0
        %5099 = vmatmul.mubr.f32.gmra.mrb[0].mxu0 %v4999
        %v5100 = vpop.f32.mrb[0].mxu0
        %v5101 = vadd.f32 0.0, %v5100
        %v5102 = vpop.f32.mrb[0].mxu0
        %5103 = vmatprep.mubr.f32.mxu0 0.0
        %5104 = vmatmul.mubr.f32.gmra.mrb[0].mxu0 %v5002
        %v5105 = vpop.f32.mrb[0].mxu0
        %v5106 = vadd.f32 0.0, %v5105
        %v5107 = vpop.f32.mrb[0].mxu0
        %5108 = vdwg.mxu0
        %5117 = vrot.lane.b32.xlu0 %v4307, 16
        %v5118 = vpop.permute.xlu0 %5117
        %5119 = vrot.lane.b32.xlu0 %v4312, 16
        %v5120 = vpop.permute.xlu0 %5119
        %5121 = vrot.lane.b32.xlu0 %v4317, 16
        %v5122 = vpop.permute.xlu0 %5121
        %5123 = vrot.lane.b32.xlu0 %v4322, 16
        %v5124 = vpop.permute.xlu0 %5123
        %5125 = vrot.lane.b32.xlu0 %v4327, 16
        %v5126 = vpop.permute.xlu0 %5125
        %5127 = vrot.lane.b32.xlu0 %v4332, 16
        %v5128 = vpop.permute.xlu0 %5127
        %5129 = vrot.lane.b32.xlu0 %v4337, 16
        %v5130 = vpop.permute.xlu0 %5129
        %5131 = vrot.lane.b32.xlu0 %v4342, 16
        %v5132 = vpop.permute.xlu0 %5131
        %5149 = vrot.lane.b32.xlu0 %v4689, 32
        %v5150 = vpop.permute.xlu0 %5149
        %5151 = vrot.lane.b32.xlu0 %v4694, 32
        %v5152 = vpop.permute.xlu0 %5151
        %5153 = vrot.lane.b32.xlu0 %v4699, 32
        %v5154 = vpop.permute.xlu0 %5153
        %5155 = vrot.lane.b32.xlu0 %v4704, 32
        %v5156 = vpop.permute.xlu0 %5155
        %5157 = vrot.lane.b32.xlu0 %v4709, 32
        %v5158 = vpop.permute.xlu0 %5157
        %5159 = vrot.lane.b32.xlu0 %v4714, 32
        %v5160 = vpop.permute.xlu0 %5159
        %5161 = vrot.lane.b32.xlu0 %v4719, 32
        %v5162 = vpop.permute.xlu0 %5161
        %5163 = vrot.lane.b32.xlu0 %v4724, 32
        %v5164 = vpop.permute.xlu0 %5163
        %5181 = vrot.lane.b32.xlu0 %v5071, 48
        %v5182 = vpop.permute.xlu0 %5181
        %5183 = vrot.lane.b32.xlu0 %v5076, 48
        %v5184 = vpop.permute.xlu0 %5183
        %5185 = vrot.lane.b32.xlu0 %v5081, 48
        %v5186 = vpop.permute.xlu0 %5185
        %5187 = vrot.lane.b32.xlu0 %v5086, 48
        %v5188 = vpop.permute.xlu0 %5187
        %5189 = vrot.lane.b32.xlu0 %v5091, 48
        %v5190 = vpop.permute.xlu0 %5189
        %5191 = vrot.lane.b32.xlu0 %v5096, 48
        %v5192 = vpop.permute.xlu0 %5191
        %5193 = vrot.lane.b32.xlu0 %v5101, 48
        %v5194 = vpop.permute.xlu0 %5193
        %5195 = vrot.lane.b32.xlu0 %v5106, 48
        %v5196 = vpop.permute.xlu0 %5195
        %v5205 = vsel %vm1118, %v3921, %v5118
        %v5206 = vsel %vm1118, %v3926, %v5120
        %v5207 = vsel %vm1118, %v3931, %v5122
        %v5208 = vsel %vm1118, %v3936, %v5124
        %v5209 = vsel %vm1118, %v3941, %v5126
        %v5210 = vsel %vm1118, %v3946, %v5128
        %v5211 = vsel %vm1118, %v3951, %v5130
        %v5212 = vsel %vm1118, %v3956, %v5132
        %v5213 = vsel %vm2831, %v5205, %v5150
        %v5214 = vsel %vm2831, %v5206, %v5152
        %v5215 = vsel %vm2831, %v5207, %v5154
        %v5216 = vsel %vm2831, %v5208, %v5156
        %v5217 = vsel %vm2831, %v5209, %v5158
        %v5218 = vsel %vm2831, %v5210, %v5160
        %v5219 = vsel %vm2831, %v5211, %v5162
        %v5220 = vsel %vm2831, %v5212, %v5164
        %v5221 = vsel %vm2840, %v5213, %v5182
        %v5222 = vsel %vm2840, %v5214, %v5184
        %v5223 = vsel %vm2840, %v5215, %v5186
        %v5224 = vsel %vm2840, %v5216, %v5188
        %v5225 = vsel %vm2840, %v5217, %v5190
        %v5226 = vsel %vm2840, %v5218, %v5192
        %v5227 = vsel %vm2840, %v5219, %v5194
        %v5228 = vsel %vm2840, %v5220, %v5196
        %v5229 = vld [vmem:[#allocation11] sm:$0xff]
        %v5230 = vld [vmem:[#allocation11 + $0x8] sm:$0xff]
        %v5231 = vld [vmem:[#allocation11 + $0x10] sm:$0xff]
        %v5232 = vld [vmem:[#allocation11 + $0x18] sm:$0xff]
        %v5233 = vld [vmem:[#allocation11 + $0x20] sm:$0xff]
        %v5234 = vld [vmem:[#allocation11 + $0x28] sm:$0xff]
        %v5235 = vld [vmem:[#allocation11 + $0x30] sm:$0xff]
        %v5236 = vld [vmem:[#allocation11 + $0x38] sm:$0xff]
        %5237 = vset.pattern.permute.xlu0 1
        %5238 = vperm.xlu0 %5237, %v593
        %v5239 = vpop.permute.xlu0 %5238
        %5241 = vset.pattern.permute.xlu0 1
        %5242 = vperm.xlu0 %5241, %v594
        %v5243 = vpop.permute.xlu0 %5242
        %5245 = vset.pattern.permute.xlu0 1
        %5246 = vperm.xlu0 %5245, %v595
        %v5247 = vpop.permute.xlu0 %5246
        %5249 = vset.pattern.permute.xlu0 1
        %5250 = vperm.xlu0 %5249, %v596
        %v5251 = vpop.permute.xlu0 %5250
        %5253 = vset.pattern.permute.xlu0 1
        %5254 = vperm.xlu0 %5253, %v597
        %v5255 = vpop.permute.xlu0 %5254
        %5257 = vset.pattern.permute.xlu0 1
        %5258 = vperm.xlu0 %5257, %v598
        %v5259 = vpop.permute.xlu0 %5258
        %5261 = vset.pattern.permute.xlu0 1
        %5262 = vperm.xlu0 %5261, %v599
        %v5263 = vpop.permute.xlu0 %5262
        %5265 = vset.pattern.permute.xlu0 1
        %5266 = vperm.xlu0 %5265, %v600
        %v5267 = vpop.permute.xlu0 %5266
        %5269 = vxpose.xlu0.b32.start [1/16] %v5229, 128
        %5270 = vxpose.xlu0.b32.cont [2/16] %v5230, 128
        %5271 = vxpose.xlu0.b32.cont [3/16] %v5231, 128
        %5272 = vxpose.xlu0.b32.cont [4/16] %v5232, 128
        %5273 = vxpose.xlu0.b32.cont [5/16] %v5233, 128
        %5274 = vxpose.xlu0.b32.cont [6/16] %v5234, 128
        %5275 = vxpose.xlu0.b32.cont [7/16] %v5235, 128
        %5276 = vxpose.xlu0.b32.cont [8/16] %v5236, 128
        %5277 = vxpose.xlu0.b32.cont [9/16] 0.0, 128
        %5278 = vxpose.xlu0.b32.cont [10/16] 0.0, 128
        %5279 = vxpose.xlu0.b32.cont [11/16] 0.0, 128
        %5280 = vxpose.xlu0.b32.cont [12/16] 0.0, 128
        %5281 = vxpose.xlu0.b32.cont [13/16] 0.0, 128
        %5282 = vxpose.xlu0.b32.cont [14/16] 0.0, 128
        %5283 = vxpose.xlu0.b32.cont [15/16] 0.0, 128
        %5284 = vxpose.xlu0.b32.end [16/16] 0.0, 128
        %v5285 = vpop.trf.xlu0
        %v5286 = vpop.trf.xlu0
        %v5287 = vpop.trf.xlu0
        %v5288 = vpop.trf.xlu0
        %v5289 = vpop.trf.xlu0
        %v5290 = vpop.trf.xlu0
        %v5291 = vpop.trf.xlu0
        %v5292 = vpop.trf.xlu0
        %v5293 = vpop.trf.xlu0
        %v5294 = vpop.trf.xlu0
        %v5295 = vpop.trf.xlu0
        %v5296 = vpop.trf.xlu0
        %v5297 = vpop.trf.xlu0
        %v5298 = vpop.trf.xlu0
        %v5299 = vpop.trf.xlu0
        %v5300 = vpop.trf.xlu0
        %v5302 = vsel %vm601, %v5285, 0
        %v5305 = vsel %vm601, %v5286, 0
        %v5308 = vsel %vm601, %v5287, 0
        %v5311 = vsel %vm601, %v5288, 0
        %v5314 = vsel %vm601, %v5289, 0
        %v5317 = vsel %vm601, %v5290, 0
        %v5320 = vsel %vm601, %v5291, 0
        %v5323 = vsel %vm601, %v5292, 0
        %v5326 = vsel %vm601, %v5221, 0
        %v5329 = vsel %vm601, %v5222, 0
        %v5332 = vsel %vm601, %v5223, 0
        %v5335 = vsel %vm601, %v5224, 0
        %v5338 = vsel %vm601, %v5225, 0
        %v5341 = vsel %vm601, %v5226, 0
        %v5344 = vsel %vm601, %v5227, 0
        %v5347 = vsel %vm601, %v5228, 0
        %5349 = vmatprep.subr.mxu0 0.0
        %5350 = vmatpush1.xpose.msra.mxu0 %v5326
        %5351 = vmatprep.subr.mxu0 0.0
        %5352 = vmatpush1.xpose.msra.mxu0 %v5329
        %5353 = vmatprep.subr.mxu0 0.0
        %5354 = vmatpush1.xpose.msra.mxu0 %v5332
        %5355 = vmatprep.subr.mxu0 0.0
        %5356 = vmatpush1.xpose.msra.mxu0 %v5335
        %5357 = vmatprep.subr.mxu0 0.0
        %5358 = vmatpush1.xpose.msra.mxu0 %v5338
        %5359 = vmatprep.subr.mxu0 0.0
        %5360 = vmatpush1.xpose.msra.mxu0 %v5341
        %5361 = vmatprep.subr.mxu0 0.0
        %5362 = vmatpush1.xpose.msra.mxu0 %v5344
        %5363 = vmatprep.subr.mxu0 0.0
        %5364 = vmatpush1.xpose.msra.mxu0 %v5347
        %5365 = vmatprep.subr.mxu0 0.0
        %5366 = vmatpush1.xpose.msra.mxu0 0.0
        %5367 = vmatprep.subr.mxu0 0.0
        %5368 = vmatpush1.xpose.msra.mxu0 0.0
        %5369 = vmatprep.subr.mxu0 0.0
        %5370 = vmatpush1.xpose.msra.mxu0 0.0
        %5371 = vmatprep.subr.mxu0 0.0
        %5372 = vmatpush1.xpose.msra.mxu0 0.0
        %5373 = vmatprep.subr.mxu0 0.0
        %5374 = vmatpush1.xpose.msra.mxu0 0.0
        %5375 = vmatprep.subr.mxu0 0.0
        %5376 = vmatpush1.xpose.msra.mxu0 0.0
        %5377 = vmatprep.subr.mxu0 0.0
        %5378 = vmatpush1.xpose.msra.mxu0 0.0
        %5379 = vmatprep.subr.mxu0 0.0
        %5380 = vmatpush1.xpose.msra.mxu0 0.0
        %5381 = vmatprep.subr.mxu0 0.0
        %5382 = vmatpush1.xpose.msra.mxu0 0.0
        %5383 = vmatprep.subr.mxu0 0.0
        %5384 = vmatpush1.xpose.msra.mxu0 0.0
        %5385 = vmatprep.subr.mxu0 0.0
        %5386 = vmatpush1.xpose.msra.mxu0 0.0
        %5387 = vmatprep.subr.mxu0 0.0
        %5388 = vmatpush1.xpose.msra.mxu0 0.0
        %5389 = vmatprep.subr.mxu0 0.0
        %5390 = vmatpush1.xpose.msra.mxu0 0.0
        %5391 = vmatprep.subr.mxu0 0.0
        %5392 = vmatpush1.xpose.msra.mxu0 0.0
        %5393 = vmatprep.subr.mxu0 0.0
        %5394 = vmatpush1.xpose.msra.mxu0 0.0
        %5395 = vmatprep.subr.mxu0 0.0
        %5396 = vmatpush1.xpose.msra.mxu0 0.0
        %5397 = vmatprep.subr.mxu0 0.0
        %5398 = vmatpush1.xpose.msra.mxu0 0.0
        %5399 = vmatprep.subr.mxu0 0.0
        %5400 = vmatpush1.xpose.msra.mxu0 0.0
        %5401 = vmatprep.subr.mxu0 0.0
        %5402 = vmatpush1.xpose.msra.mxu0 0.0
        %5403 = vmatprep.subr.mxu0 0.0
        %5404 = vmatpush1.xpose.msra.mxu0 0.0
        %5405 = vmatprep.subr.mxu0 0.0
        %5406 = vmatpush1.xpose.msra.mxu0 0.0
        %5407 = vmatprep.subr.mxu0 0.0
        %5408 = vmatpush1.xpose.msra.mxu0 0.0
        %5409 = vmatprep.subr.mxu0 0.0
        %5410 = vmatpush1.xpose.msra.mxu0 0.0
        %5411 = vmatprep.subr.mxu0 0.0
        %5412 = vmatpush1.xpose.msra.mxu0 0.0
        %5413 = vmatprep.mubr.f32.mxu0 0.0
        %5414 = vmatmul.mubr.f32.gmra.mrb[0].mxu0 %v5302
        %v5415 = vpop.f32.mrb[0].mxu0
        %v5416 = vadd.f32 %v5239, %v5415
        %v5417 = vpop.f32.mrb[0].mxu0
        %5418 = vmatprep.mubr.f32.mxu0 0.0
        %5419 = vmatmul.mubr.f32.gmra.mrb[0].mxu0 %v5305
        %v5420 = vpop.f32.mrb[0].mxu0
        %v5421 = vadd.f32 %v5243, %v5420
        %v5422 = vpop.f32.mrb[0].mxu0
        %5423 = vmatprep.mubr.f32.mxu0 0.0
        %5424 = vmatmul.mubr.f32.gmra.mrb[0].mxu0 %v5308
        %v5425 = vpop.f32.mrb[0].mxu0
        %v5426 = vadd.f32 %v5247, %v5425
        %v5427 = vpop.f32.mrb[0].mxu0
        %5428 = vmatprep.mubr.f32.mxu0 0.0
        %5429 = vmatmul.mubr.f32.gmra.mrb[0].mxu0 %v5311
        %v5430 = vpop.f32.mrb[0].mxu0
        %v5431 = vadd.f32 %v5251, %v5430
        %v5432 = vpop.f32.mrb[0].mxu0
        %5433 = vmatprep.mubr.f32.mxu0 0.0
        %5434 = vmatmul.mubr.f32.gmra.mrb[0].mxu0 %v5314
        %v5435 = vpop.f32.mrb[0].mxu0
        %v5436 = vadd.f32 %v5255, %v5435
        %v5437 = vpop.f32.mrb[0].mxu0
        %5438 = vmatprep.mubr.f32.mxu0 0.0
        %5439 = vmatmul.mubr.f32.gmra.mrb[0].mxu0 %v5317
        %v5440 = vpop.f32.mrb[0].mxu0
        %v5441 = vadd.f32 %v5259, %v5440
        %v5442 = vpop.f32.mrb[0].mxu0
        %5443 = vmatprep.mubr.f32.mxu0 0.0
        %5444 = vmatmul.mubr.f32.gmra.mrb[0].mxu0 %v5320
        %v5445 = vpop.f32.mrb[0].mxu0
        %v5446 = vadd.f32 %v5263, %v5445
        %v5447 = vpop.f32.mrb[0].mxu0
        %5448 = vmatprep.mubr.f32.mxu0 0.0
        %5449 = vmatmul.mubr.f32.gmra.mrb[0].mxu0 %v5323
        %v5450 = vpop.f32.mrb[0].mxu0
        %v5451 = vadd.f32 %v5267, %v5450
        %v5452 = vpop.f32.mrb[0].mxu0
        %5453 = vdwg.mxu0
        %v5454 = vadd.f32 %v5416, %v3082
        %v5455 = vadd.f32 %v5421, %v3083
        %v5456 = vadd.f32 %v5426, %v3084
        %v5457 = vadd.f32 %v5431, %v3085
        %v5458 = vadd.f32 %v5436, %v3086
        %v5459 = vadd.f32 %v5441, %v3087
        %v5460 = vadd.f32 %v5446, %v3088
        %v5461 = vadd.f32 %v5451, %v3089
        %v5462 = vsel %vm601, %v5454, 0.0
        %5463 = vadd.xlane.f32.xlu0 %v5462
        %v5464 = vpop.xlane.xlu0 %5463
        %v5465 = vsel %vm601, %v5455, 0.0
        %5466 = vadd.xlane.f32.xlu0 %v5465
        %v5467 = vpop.xlane.xlu0 %5466
        %v5468 = vsel %vm601, %v5456, 0.0
        %5469 = vadd.xlane.f32.xlu0 %v5468
        %v5470 = vpop.xlane.xlu0 %5469
        %v5471 = vsel %vm601, %v5457, 0.0
        %5472 = vadd.xlane.f32.xlu0 %v5471
        %v5473 = vpop.xlane.xlu0 %5472
        %v5474 = vsel %vm601, %v5458, 0.0
        %5475 = vadd.xlane.f32.xlu0 %v5474
        %v5476 = vpop.xlane.xlu0 %5475
        %v5477 = vsel %vm601, %v5459, 0.0
        %5478 = vadd.xlane.f32.xlu0 %v5477
        %v5479 = vpop.xlane.xlu0 %5478
        %v5480 = vsel %vm601, %v5460, 0.0
        %5481 = vadd.xlane.f32.xlu0 %v5480
        %v5482 = vpop.xlane.xlu0 %5481
        %v5483 = vsel %vm601, %v5461, 0.0
        %5484 = vadd.xlane.f32.xlu0 %v5483
        %v5485 = vpop.xlane.xlu0 %5484
        %v5486 = vmul.f32 %v5464, %v626
        %v5487 = vmul.f32 %v5467, %v626
        %v5488 = vmul.f32 %v5470, %v626
        %v5489 = vmul.f32 %v5473, %v626
        %v5490 = vmul.f32 %v5476, %v626
        %v5491 = vmul.f32 %v5479, %v626
        %v5492 = vmul.f32 %v5482, %v626
        %v5493 = vmul.f32 %v5485, %v626
        %v5494 = vsub.f32 %v5454, %v5486
        %v5495 = vsub.f32 %v5455, %v5487
        %v5496 = vsub.f32 %v5456, %v5488
        %v5497 = vsub.f32 %v5457, %v5489
        %v5498 = vsub.f32 %v5458, %v5490
        %v5499 = vsub.f32 %v5459, %v5491
        %v5500 = vsub.f32 %v5460, %v5492
        %v5501 = vsub.f32 %v5461, %v5493
        %v5502 = vmul.f32 %v5494, %v5494
        %v5503 = vmul.f32 %v5495, %v5495
        %v5504 = vmul.f32 %v5496, %v5496
        %v5505 = vmul.f32 %v5497, %v5497
        %v5506 = vmul.f32 %v5498, %v5498
        %v5507 = vmul.f32 %v5499, %v5499
        %v5508 = vmul.f32 %v5500, %v5500
        %v5509 = vmul.f32 %v5501, %v5501
        %v5510 = vsel %vm601, %v5502, 0.0
        %5511 = vadd.xlane.f32.xlu0 %v5510
        %v5512 = vpop.xlane.xlu0 %5511
        %v5513 = vsel %vm601, %v5503, 0.0
        %5514 = vadd.xlane.f32.xlu0 %v5513
        %v5515 = vpop.xlane.xlu0 %5514
        %v5516 = vsel %vm601, %v5504, 0.0
        %5517 = vadd.xlane.f32.xlu0 %v5516
        %v5518 = vpop.xlane.xlu0 %5517
        %v5519 = vsel %vm601, %v5505, 0.0
        %5520 = vadd.xlane.f32.xlu0 %v5519
        %v5521 = vpop.xlane.xlu0 %5520
        %v5522 = vsel %vm601, %v5506, 0.0
        %5523 = vadd.xlane.f32.xlu0 %v5522
        %v5524 = vpop.xlane.xlu0 %5523
        %v5525 = vsel %vm601, %v5507, 0.0
        %5526 = vadd.xlane.f32.xlu0 %v5525
        %v5527 = vpop.xlane.xlu0 %5526
        %v5528 = vsel %vm601, %v5508, 0.0
        %5529 = vadd.xlane.f32.xlu0 %v5528
        %v5530 = vpop.xlane.xlu0 %5529
        %v5531 = vsel %vm601, %v5509, 0.0
        %5532 = vadd.xlane.f32.xlu0 %v5531
        %v5533 = vpop.xlane.xlu0 %5532
        %v5534 = vmul.f32 %v5512, %v626
        %v5535 = vmul.f32 %v5515, %v626
        %v5536 = vmul.f32 %v5518, %v626
        %v5537 = vmul.f32 %v5521, %v626
        %v5538 = vmul.f32 %v5524, %v626
        %v5539 = vmul.f32 %v5527, %v626
        %v5540 = vmul.f32 %v5530, %v626
        %v5541 = vmul.f32 %v5533, %v626
        %v5542 = vadd.f32 %v5534, 1e-05
        %v5543 = vadd.f32 %v5535, 1e-05
        %v5544 = vadd.f32 %v5536, 1e-05
        %v5545 = vadd.f32 %v5537, 1e-05
        %v5546 = vadd.f32 %v5538, 1e-05
        %v5547 = vadd.f32 %v5539, 1e-05
        %v5548 = vadd.f32 %v5540, 1e-05
        %v5549 = vadd.f32 %v5541, 1e-05
        %v5550 = vrsqrt.pop %v5542
        %v5551 = vrsqrt.pop %v5543
        %v5552 = vrsqrt.pop %v5544
        %v5553 = vrsqrt.pop %v5545
        %v5554 = vrsqrt.pop %v5546
        %v5555 = vrsqrt.pop %v5547
        %v5556 = vrsqrt.pop %v5548
        %v5557 = vrsqrt.pop %v5549
        %v5558 = vmul.f32 %v5494, %v5550
        %v5559 = vmul.f32 %v5495, %v5551
        %v5560 = vmul.f32 %v5496, %v5552
        %v5561 = vmul.f32 %v5497, %v5553
        %v5562 = vmul.f32 %v5498, %v5554
        %v5563 = vmul.f32 %v5499, %v5555
        %v5564 = vmul.f32 %v5500, %v5556
        %v5565 = vmul.f32 %v5501, %v5557
        %v5566 = vmul.f32 %v5558, %v588
        %v5567 = vmul.f32 %v5559, %v588
        %v5568 = vmul.f32 %v5560, %v588
        %v5569 = vmul.f32 %v5561, %v588
        %v5570 = vmul.f32 %v5562, %v588
        %v5571 = vmul.f32 %v5563, %v588
        %v5572 = vmul.f32 %v5564, %v588
        %v5573 = vmul.f32 %v5565, %v588
        %v5574 = vadd.f32 %v5566, %v589
        %v5575 = vadd.f32 %v5567, %v589
        %v5576 = vadd.f32 %v5568, %v589
        %v5577 = vadd.f32 %v5569, %v589
        %v5578 = vadd.f32 %v5570, %v589
        %v5579 = vadd.f32 %v5571, %v589
        %v5580 = vadd.f32 %v5572, %v589
        %v5581 = vadd.f32 %v5573, %v589
        %v5582 = vld [vmem:[%s12] sm:$0xff]
        %v5583 = vld [vmem:[%s12 + $0x8] sm:$0xff]
        %v5584 = vld [vmem:[%s12 + $0x10] sm:$0xff]
        %v5585 = vld [vmem:[%s12 + $0x18] sm:$0xff]
        %v5586 = vld [vmem:[%s12 + $0x20] sm:$0xff]
        %v5587 = vld [vmem:[%s12 + $0x28] sm:$0xff]
        %v5588 = vld [vmem:[%s12 + $0x30] sm:$0xff]
        %v5589 = vld [vmem:[%s12 + $0x38] sm:$0xff]
        %v5590 = vld [vmem:[%s12 + $0x40] sm:$0xff]
        %v5591 = vld [vmem:[%s12 + $0x48] sm:$0xff]
        %v5592 = vld [vmem:[%s12 + $0x50] sm:$0xff]
        %v5593 = vld [vmem:[%s12 + $0x58] sm:$0xff]
        %v5594 = vld [vmem:[%s12 + $0x60] sm:$0xff]
        %v5595 = vld [vmem:[%s12 + $0x68] sm:$0xff]
        %v5596 = vld [vmem:[%s12 + $0x70] sm:$0xff]
        %v5597 = vld [vmem:[%s12 + $0x78] sm:$0xff]
        %v5599 = vlaneseq
        %v5600 = vshrl.u32 %v5599, 7
        %v5601 = vsub.s32 0, %v5600
        %v5602 = vrot.slane %v592, %v5601
        %v5603 = vlaneseq
        %v5604 = vshrl.u32 %v5603, 7
        %v5605 = vsub.s32 1, %v5604
        %v5606 = vrot.slane %v592, %v5605
        %v5610 = vsel %vm601, %v5574, 0
        %v5613 = vsel %vm601, %v5575, 0
        %v5616 = vsel %vm601, %v5576, 0
        %v5619 = vsel %vm601, %v5577, 0
        %v5622 = vsel %vm601, %v5578, 0
        %v5625 = vsel %vm601, %v5579, 0
        %v5628 = vsel %vm601, %v5580, 0
        %v5631 = vsel %vm601, %v5581, 0
        %5633 = vmatprep.subr.mxu0 %v5583
        %5634 = vmatpush1.msra.mxu0 %v5582
        %5635 = vmatprep.subr.mxu0 %v5585
        %5636 = vmatpush1.msra.mxu0 %v5584
        %5637 = vmatprep.subr.mxu0 %v5587
        %5638 = vmatpush1.msra.mxu0 %v5586
        %5639 = vmatprep.subr.mxu0 %v5589
        %5640 = vmatpush1.msra.mxu0 %v5588
        %5641 = vmatprep.subr.mxu0 %v5591
        %5642 = vmatpush1.msra.mxu0 %v5590
        %5643 = vmatprep.subr.mxu0 %v5593
        %5644 = vmatpush1.msra.mxu0 %v5592
        %5645 = vmatprep.subr.mxu0 %v5595
        %5646 = vmatpush1.msra.mxu0 %v5594
        %5647 = vmatprep.subr.mxu0 %v5597
        %5648 = vmatpush1.msra.mxu0 %v5596
        %5649 = vmatprep.subr.mxu0 0.0
        %5650 = vmatpush1.msra.mxu0 0.0
        %5651 = vmatprep.subr.mxu0 0.0
        %5652 = vmatpush1.msra.mxu0 0.0
        %5653 = vmatprep.subr.mxu0 0.0
        %5654 = vmatpush1.msra.mxu0 0.0
        %5655 = vmatprep.subr.mxu0 0.0
        %5656 = vmatpush1.msra.mxu0 0.0
        %5657 = vmatprep.subr.mxu0 0.0
        %5658 = vmatpush1.msra.mxu0 0.0
        %5659 = vmatprep.subr.mxu0 0.0
        %5660 = vmatpush1.msra.mxu0 0.0
        %5661 = vmatprep.subr.mxu0 0.0
        %5662 = vmatpush1.msra.mxu0 0.0
        %5663 = vmatprep.subr.mxu0 0.0
        %5664 = vmatpush1.msra.mxu0 0.0
        %5665 = vmatprep.subr.mxu0 0.0
        %5666 = vmatpush1.msra.mxu0 0.0
        %5667 = vmatprep.subr.mxu0 0.0
        %5668 = vmatpush1.msra.mxu0 0.0
        %5669 = vmatprep.subr.mxu0 0.0
        %5670 = vmatpush1.msra.mxu0 0.0
        %5671 = vmatprep.subr.mxu0 0.0
        %5672 = vmatpush1.msra.mxu0 0.0
        %5673 = vmatprep.subr.mxu0 0.0
        %5674 = vmatpush1.msra.mxu0 0.0
        %5675 = vmatprep.subr.mxu0 0.0
        %5676 = vmatpush1.msra.mxu0 0.0
        %5677 = vmatprep.subr.mxu0 0.0
        %5678 = vmatpush1.msra.mxu0 0.0
        %5679 = vmatprep.subr.mxu0 0.0
        %5680 = vmatpush1.msra.mxu0 0.0
        %5681 = vmatprep.subr.mxu0 0.0
        %5682 = vmatpush1.msra.mxu0 0.0
        %5683 = vmatprep.subr.mxu0 0.0
        %5684 = vmatpush1.msra.mxu0 0.0
        %5685 = vmatprep.subr.mxu0 0.0
        %5686 = vmatpush1.msra.mxu0 0.0
        %5687 = vmatprep.subr.mxu0 0.0
        %5688 = vmatpush1.msra.mxu0 0.0
        %5689 = vmatprep.subr.mxu0 0.0
        %5690 = vmatpush1.msra.mxu0 0.0
        %5691 = vmatprep.subr.mxu0 0.0
        %5692 = vmatpush1.msra.mxu0 0.0
        %5693 = vmatprep.subr.mxu0 0.0
        %5694 = vmatpush1.msra.mxu0 0.0
        %5695 = vmatprep.subr.mxu0 0.0
        %5696 = vmatpush1.msra.mxu0 0.0
        %5697 = vmatprep.mubr.f32.mxu0 0.0
        %5698 = vmatmul.mubr.f32.gmra.mrb[0].mxu0 %v5610
        %v5699 = vpop.f32.mrb[0].mxu0
        %v5700 = vadd.f32 %v5602, %v5699
        %v5701 = vpop.f32.mrb[0].mxu0
        %v5702 = vadd.f32 %v5606, %v5701
        %5703 = vmatprep.mubr.f32.mxu0 0.0
        %5704 = vmatmul.mubr.f32.gmra.mrb[0].mxu0 %v5613
        %v5705 = vpop.f32.mrb[0].mxu0
        %v5706 = vadd.f32 %v5602, %v5705
        %v5707 = vpop.f32.mrb[0].mxu0
        %v5708 = vadd.f32 %v5606, %v5707
        %5709 = vmatprep.mubr.f32.mxu0 0.0
        %5710 = vmatmul.mubr.f32.gmra.mrb[0].mxu0 %v5616
        %v5711 = vpop.f32.mrb[0].mxu0
        %v5712 = vadd.f32 %v5602, %v5711
        %v5713 = vpop.f32.mrb[0].mxu0
        %v5714 = vadd.f32 %v5606, %v5713
        %5715 = vmatprep.mubr.f32.mxu0 0.0
        %5716 = vmatmul.mubr.f32.gmra.mrb[0].mxu0 %v5619
        %v5717 = vpop.f32.mrb[0].mxu0
        %v5718 = vadd.f32 %v5602, %v5717
        %v5719 = vpop.f32.mrb[0].mxu0
        %v5720 = vadd.f32 %v5606, %v5719
        %5721 = vmatprep.mubr.f32.mxu0 0.0
        %5722 = vmatmul.mubr.f32.gmra.mrb[0].mxu0 %v5622
        %v5723 = vpop.f32.mrb[0].mxu0
        %v5724 = vadd.f32 %v5602, %v5723
        %v5725 = vpop.f32.mrb[0].mxu0
        %v5726 = vadd.f32 %v5606, %v5725
        %5727 = vmatprep.mubr.f32.mxu0 0.0
        %5728 = vmatmul.mubr.f32.gmra.mrb[0].mxu0 %v5625
        %v5729 = vpop.f32.mrb[0].mxu0
        %v5730 = vadd.f32 %v5602, %v5729
        %v5731 = vpop.f32.mrb[0].mxu0
        %v5732 = vadd.f32 %v5606, %v5731
        %5733 = vmatprep.mubr.f32.mxu0 0.0
        %5734 = vmatmul.mubr.f32.gmra.mrb[0].mxu0 %v5628
        %v5735 = vpop.f32.mrb[0].mxu0
        %v5736 = vadd.f32 %v5602, %v5735
        %v5737 = vpop.f32.mrb[0].mxu0
        %v5738 = vadd.f32 %v5606, %v5737
        %5739 = vmatprep.mubr.f32.mxu0 0.0
        %5740 = vmatmul.mubr.f32.gmra.mrb[0].mxu0 %v5631
        %v5741 = vpop.f32.mrb[0].mxu0
        %v5742 = vadd.f32 %v5602, %v5741
        %v5743 = vpop.f32.mrb[0].mxu0
        %v5744 = vadd.f32 %v5606, %v5743
        %5745 = vdwg.mxu0
        %v5746 = vmul.f32 %v5700, 0.5
        %v5747 = vmul.f32 %v5702, 0.5
        %v5748 = vmul.f32 %v5706, 0.5
        %v5749 = vmul.f32 %v5708, 0.5
        %v5750 = vmul.f32 %v5712, 0.5
        %v5751 = vmul.f32 %v5714, 0.5
        %v5752 = vmul.f32 %v5718, 0.5
        %v5753 = vmul.f32 %v5720, 0.5
        %v5754 = vmul.f32 %v5724, 0.5
        %v5755 = vmul.f32 %v5726, 0.5
        %v5756 = vmul.f32 %v5730, 0.5
        %v5757 = vmul.f32 %v5732, 0.5
        %v5758 = vmul.f32 %v5736, 0.5
        %v5759 = vmul.f32 %v5738, 0.5
        %v5760 = vmul.f32 %v5742, 0.5
        %v5761 = vmul.f32 %v5744, 0.5
        %v5762 = vmul.f32 %v5700, 0.044715
        %v5763 = vmul.f32 %v5702, 0.044715
        %v5764 = vmul.f32 %v5706, 0.044715
        %v5765 = vmul.f32 %v5708, 0.044715
        %v5766 = vmul.f32 %v5712, 0.044715
        %v5767 = vmul.f32 %v5714, 0.044715
        %v5768 = vmul.f32 %v5718, 0.044715
        %v5769 = vmul.f32 %v5720, 0.044715
        %v5770 = vmul.f32 %v5724, 0.044715
        %v5771 = vmul.f32 %v5726, 0.044715
        %v5772 = vmul.f32 %v5730, 0.044715
        %v5773 = vmul.f32 %v5732, 0.044715
        %v5774 = vmul.f32 %v5736, 0.044715
        %v5775 = vmul.f32 %v5738, 0.044715
        %v5776 = vmul.f32 %v5742, 0.044715
        %v5777 = vmul.f32 %v5744, 0.044715
        %v5778 = vmul.f32 %v5762, %v5700
        %v5779 = vmul.f32 %v5763, %v5702
        %v5780 = vmul.f32 %v5764, %v5706
        %v5781 = vmul.f32 %v5765, %v5708
        %v5782 = vmul.f32 %v5766, %v5712
        %v5783 = vmul.f32 %v5767, %v5714
        %v5784 = vmul.f32 %v5768, %v5718
        %v5785 = vmul.f32 %v5769, %v5720
        %v5786 = vmul.f32 %v5770, %v5724
        %v5787 = vmul.f32 %v5771, %v5726
        %v5788 = vmul.f32 %v5772, %v5730
        %v5789 = vmul.f32 %v5773, %v5732
        %v5790 = vmul.f32 %v5774, %v5736
        %v5791 = vmul.f32 %v5775, %v5738
        %v5792 = vmul.f32 %v5776, %v5742
        %v5793 = vmul.f32 %v5777, %v5744
        %v5794 = vmul.f32 %v5778, %v5700
        %v5795 = vmul.f32 %v5779, %v5702
        %v5796 = vmul.f32 %v5780, %v5706
        %v5797 = vmul.f32 %v5781, %v5708
        %v5798 = vmul.f32 %v5782, %v5712
        %v5799 = vmul.f32 %v5783, %v5714
        %v5800 = vmul.f32 %v5784, %v5718
        %v5801 = vmul.f32 %v5785, %v5720
        %v5802 = vmul.f32 %v5786, %v5724
        %v5803 = vmul.f32 %v5787, %v5726
        %v5804 = vmul.f32 %v5788, %v5730
        %v5805 = vmul.f32 %v5789, %v5732
        %v5806 = vmul.f32 %v5790, %v5736
        %v5807 = vmul.f32 %v5791, %v5738
        %v5808 = vmul.f32 %v5792, %v5742
        %v5809 = vmul.f32 %v5793, %v5744
        %v5810 = vadd.f32 %v5700, %v5794
        %v5811 = vadd.f32 %v5702, %v5795
        %v5812 = vadd.f32 %v5706, %v5796
        %v5813 = vadd.f32 %v5708, %v5797
        %v5814 = vadd.f32 %v5712, %v5798
        %v5815 = vadd.f32 %v5714, %v5799
        %v5816 = vadd.f32 %v5718, %v5800
        %v5817 = vadd.f32 %v5720, %v5801
        %v5818 = vadd.f32 %v5724, %v5802
        %v5819 = vadd.f32 %v5726, %v5803
        %v5820 = vadd.f32 %v5730, %v5804
        %v5821 = vadd.f32 %v5732, %v5805
        %v5822 = vadd.f32 %v5736, %v5806
        %v5823 = vadd.f32 %v5738, %v5807
        %v5824 = vadd.f32 %v5742, %v5808
        %v5825 = vadd.f32 %v5744, %v5809
        %v5826 = vmul.f32 %v5810, 0.7978846
        %v5827 = vmul.f32 %v5811, 0.7978846
        %v5828 = vmul.f32 %v5812, 0.7978846
        %v5829 = vmul.f32 %v5813, 0.7978846
        %v5830 = vmul.f32 %v5814, 0.7978846
        %v5831 = vmul.f32 %v5815, 0.7978846
        %v5832 = vmul.f32 %v5816, 0.7978846
        %v5833 = vmul.f32 %v5817, 0.7978846
        %v5834 = vmul.f32 %v5818, 0.7978846
        %v5835 = vmul.f32 %v5819, 0.7978846
        %v5836 = vmul.f32 %v5820, 0.7978846
        %v5837 = vmul.f32 %v5821, 0.7978846
        %v5838 = vmul.f32 %v5822, 0.7978846
        %v5839 = vmul.f32 %v5823, 0.7978846
        %v5840 = vmul.f32 %v5824, 0.7978846
        %v5841 = vmul.f32 %v5825, 0.7978846
        %v5842 = vtanh.pop %v5826
        %v5843 = vtanh.pop %v5827
        %v5844 = vtanh.pop %v5828
        %v5845 = vtanh.pop %v5829
        %v5846 = vtanh.pop %v5830
        %v5847 = vtanh.pop %v5831
        %v5848 = vtanh.pop %v5832
        %v5849 = vtanh.pop %v5833
        %v5850 = vtanh.pop %v5834
        %v5851 = vtanh.pop %v5835
        %v5852 = vtanh.pop %v5836
        %v5853 = vtanh.pop %v5837
        %v5854 = vtanh.pop %v5838
        %v5855 = vtanh.pop %v5839
        %v5856 = vtanh.pop %v5840
        %v5857 = vtanh.pop %v5841
        %v5858 = vadd.f32 %v5842, 1.0
        %v5859 = vadd.f32 %v5843, 1.0
        %v5860 = vadd.f32 %v5844, 1.0
        %v5861 = vadd.f32 %v5845, 1.0
        %v5862 = vadd.f32 %v5846, 1.0
        %v5863 = vadd.f32 %v5847, 1.0
        %v5864 = vadd.f32 %v5848, 1.0
        %v5865 = vadd.f32 %v5849, 1.0
        %v5866 = vadd.f32 %v5850, 1.0
        %v5867 = vadd.f32 %v5851, 1.0
        %v5868 = vadd.f32 %v5852, 1.0
        %v5869 = vadd.f32 %v5853, 1.0
        %v5870 = vadd.f32 %v5854, 1.0
        %v5871 = vadd.f32 %v5855, 1.0
        %v5872 = vadd.f32 %v5856, 1.0
        %v5873 = vadd.f32 %v5857, 1.0
        %v5874 = vmul.f32 %v5746, %v5858
        %v5875 = vmul.f32 %v5747, %v5859
        %v5876 = vmul.f32 %v5748, %v5860
        %v5877 = vmul.f32 %v5749, %v5861
        %v5878 = vmul.f32 %v5750, %v5862
        %v5879 = vmul.f32 %v5751, %v5863
        %v5880 = vmul.f32 %v5752, %v5864
        %v5881 = vmul.f32 %v5753, %v5865
        %v5882 = vmul.f32 %v5754, %v5866
        %v5883 = vmul.f32 %v5755, %v5867
        %v5884 = vmul.f32 %v5756, %v5868
        %v5885 = vmul.f32 %v5757, %v5869
        %v5886 = vmul.f32 %v5758, %v5870
        %v5887 = vmul.f32 %v5759, %v5871
        %v5888 = vmul.f32 %v5760, %v5872
        %v5889 = vmul.f32 %v5761, %v5873
        %v5890 = vld [vmem:[%s13] sm:$0xff]
        %v5891 = vld [vmem:[%s13 + $0x8] sm:$0xff]
        %v5892 = vld [vmem:[%s13 + $0x10] sm:$0xff]
        %v5893 = vld [vmem:[%s13 + $0x18] sm:$0xff]
        %v5894 = vld [vmem:[%s13 + $0x20] sm:$0xff]
        %v5895 = vld [vmem:[%s13 + $0x28] sm:$0xff]
        %v5896 = vld [vmem:[%s13 + $0x30] sm:$0xff]
        %v5897 = vld [vmem:[%s13 + $0x38] sm:$0xff]
        %v5898 = vld [vmem:[%s13 + $0x40] sm:$0xff]
        %v5899 = vld [vmem:[%s13 + $0x48] sm:$0xff]
        %v5900 = vld [vmem:[%s13 + $0x50] sm:$0xff]
        %v5901 = vld [vmem:[%s13 + $0x58] sm:$0xff]
        %v5902 = vld [vmem:[%s13 + $0x60] sm:$0xff]
        %v5903 = vld [vmem:[%s13 + $0x68] sm:$0xff]
        %v5904 = vld [vmem:[%s13 + $0x70] sm:$0xff]
        %v5905 = vld [vmem:[%s13 + $0x78] sm:$0xff]
        %v5906 = vld [vmem:[%s13 + $0x80] sm:$0xff]
        %v5907 = vld [vmem:[%s13 + $0x88] sm:$0xff]
        %v5908 = vld [vmem:[%s13 + $0x90] sm:$0xff]
        %v5909 = vld [vmem:[%s13 + $0x98] sm:$0xff]
        %v5910 = vld [vmem:[%s13 + $0xa0] sm:$0xff]
        %v5911 = vld [vmem:[%s13 + $0xa8] sm:$0xff]
        %v5912 = vld [vmem:[%s13 + $0xb0] sm:$0xff]
        %v5913 = vld [vmem:[%s13 + $0xb8] sm:$0xff]
        %v5914 = vld [vmem:[%s13 + $0xc0] sm:$0xff]
        %v5915 = vld [vmem:[%s13 + $0xc8] sm:$0xff]
        %v5916 = vld [vmem:[%s13 + $0xd0] sm:$0xff]
        %v5917 = vld [vmem:[%s13 + $0xd8] sm:$0xff]
        %v5918 = vld [vmem:[%s13 + $0xe0] sm:$0xff]
        %v5919 = vld [vmem:[%s13 + $0xe8] sm:$0xff]
        %v5920 = vld [vmem:[%s13 + $0xf0] sm:$0xff]
        %v5921 = vld [vmem:[%s13 + $0xf8] sm:$0xff]
        %5922 = vmatprep.subr.mxu0 0.0
        %5923 = vmatpush1.msra.mxu0 %v5890
        %5924 = vmatprep.subr.mxu0 0.0
        %5925 = vmatpush1.msra.mxu0 %v5891
        %5926 = vmatprep.subr.mxu0 0.0
        %5927 = vmatpush1.msra.mxu0 %v5892
        %5928 = vmatprep.subr.mxu0 0.0
        %5929 = vmatpush1.msra.mxu0 %v5893
        %5930 = vmatprep.subr.mxu0 0.0
        %5931 = vmatpush1.msra.mxu0 %v5894
        %5932 = vmatprep.subr.mxu0 0.0
        %5933 = vmatpush1.msra.mxu0 %v5895
        %5934 = vmatprep.subr.mxu0 0.0
        %5935 = vmatpush1.msra.mxu0 %v5896
        %5936 = vmatprep.subr.mxu0 0.0
        %5937 = vmatpush1.msra.mxu0 %v5897
        %5938 = vmatprep.subr.mxu0 0.0
        %5939 = vmatpush1.msra.mxu0 %v5898
        %5940 = vmatprep.subr.mxu0 0.0
        %5941 = vmatpush1.msra.mxu0 %v5899
        %5942 = vmatprep.subr.mxu0 0.0
        %5943 = vmatpush1.msra.mxu0 %v5900
        %5944 = vmatprep.subr.mxu0 0.0
        %5945 = vmatpush1.msra.mxu0 %v5901
        %5946 = vmatprep.subr.mxu0 0.0
        %5947 = vmatpush1.msra.mxu0 %v5902
        %5948 = vmatprep.subr.mxu0 0.0
        %5949 = vmatpush1.msra.mxu0 %v5903
        %5950 = vmatprep.subr.mxu0 0.0
        %5951 = vmatpush1.msra.mxu0 %v5904
        %5952 = vmatprep.subr.mxu0 0.0
        %5953 = vmatpush1.msra.mxu0 %v5905
        %5954 = vmatprep.subr.mxu0 0.0
        %5955 = vmatpush1.msra.mxu0 %v5906
        %5956 = vmatprep.subr.mxu0 0.0
        %5957 = vmatpush1.msra.mxu0 %v5907
        %5958 = vmatprep.subr.mxu0 0.0
        %5959 = vmatpush1.msra.mxu0 %v5908
        %5960 = vmatprep.subr.mxu0 0.0
        %5961 = vmatpush1.msra.mxu0 %v5909
        %5962 = vmatprep.subr.mxu0 0.0
        %5963 = vmatpush1.msra.mxu0 %v5910
        %5964 = vmatprep.subr.mxu0 0.0
        %5965 = vmatpush1.msra.mxu0 %v5911
        %5966 = vmatprep.subr.mxu0 0.0
        %5967 = vmatpush1.msra.mxu0 %v5912
        %5968 = vmatprep.subr.mxu0 0.0
        %5969 = vmatpush1.msra.mxu0 %v5913
        %5970 = vmatprep.subr.mxu0 0.0
        %5971 = vmatpush1.msra.mxu0 %v5914
        %5972 = vmatprep.subr.mxu0 0.0
        %5973 = vmatpush1.msra.mxu0 %v5915
        %5974 = vmatprep.subr.mxu0 0.0
        %5975 = vmatpush1.msra.mxu0 %v5916
        %5976 = vmatprep.subr.mxu0 0.0
        %5977 = vmatpush1.msra.mxu0 %v5917
        %5978 = vmatprep.subr.mxu0 0.0
        %5979 = vmatpush1.msra.mxu0 %v5918
        %5980 = vmatprep.subr.mxu0 0.0
        %5981 = vmatpush1.msra.mxu0 %v5919
        %5982 = vmatprep.subr.mxu0 0.0
        %5983 = vmatpush1.msra.mxu0 %v5920
        %5984 = vmatprep.subr.mxu0 0.0
        %5985 = vmatpush1.msra.mxu0 %v5921
        %5986 = vmatprep.mubr.f32.mxu0 %v5875
        %5987 = vmatmul.mubr.f32.gmra.mrb[0].mxu0 %v5874
        %v5988 = vpop.f32.mrb[0].mxu0
        %v5989 = vadd.f32 %v590, %v5988
        %v5990 = vpop.f32.mrb[0].mxu0
        %5991 = vmatprep.mubr.f32.mxu0 %v5877
        %5992 = vmatmul.mubr.f32.gmra.mrb[0].mxu0 %v5876
        %v5993 = vpop.f32.mrb[0].mxu0
        %v5994 = vadd.f32 %v590, %v5993
        %v5995 = vpop.f32.mrb[0].mxu0
        %5996 = vmatprep.mubr.f32.mxu0 %v5879
        %5997 = vmatmul.mubr.f32.gmra.mrb[0].mxu0 %v5878
        %v5998 = vpop.f32.mrb[0].mxu0
        %v5999 = vadd.f32 %v590, %v5998
        %v6000 = vpop.f32.mrb[0].mxu0
        %6001 = vmatprep.mubr.f32.mxu0 %v5881
        %6002 = vmatmul.mubr.f32.gmra.mrb[0].mxu0 %v5880
        %v6003 = vpop.f32.mrb[0].mxu0
        %v6004 = vadd.f32 %v590, %v6003
        %v6005 = vpop.f32.mrb[0].mxu0
        %6006 = vmatprep.mubr.f32.mxu0 %v5883
        %6007 = vmatmul.mubr.f32.gmra.mrb[0].mxu0 %v5882
        %v6008 = vpop.f32.mrb[0].mxu0
        %v6009 = vadd.f32 %v590, %v6008
        %v6010 = vpop.f32.mrb[0].mxu0
        %6011 = vmatprep.mubr.f32.mxu0 %v5885
        %6012 = vmatmul.mubr.f32.gmra.mrb[0].mxu0 %v5884
        %v6013 = vpop.f32.mrb[0].mxu0
        %v6014 = vadd.f32 %v590, %v6013
        %v6015 = vpop.f32.mrb[0].mxu0
        %6016 = vmatprep.mubr.f32.mxu0 %v5887
        %6017 = vmatmul.mubr.f32.gmra.mrb[0].mxu0 %v5886
        %v6018 = vpop.f32.mrb[0].mxu0
        %v6019 = vadd.f32 %v590, %v6018
        %v6020 = vpop.f32.mrb[0].mxu0
        %6021 = vmatprep.mubr.f32.mxu0 %v5889
        %6022 = vmatmul.mubr.f32.gmra.mrb[0].mxu0 %v5888
        %v6023 = vpop.f32.mrb[0].mxu0
        %v6024 = vadd.f32 %v590, %v6023
        %v6025 = vpop.f32.mrb[0].mxu0
        %6026 = vdwg.mxu0
        %v6027 = vadd.f32 %v5989, %v5454
        %v6028 = vadd.f32 %v5994, %v5455
        %v6029 = vadd.f32 %v5999, %v5456
        %v6030 = vadd.f32 %v6004, %v5457
        %v6031 = vadd.f32 %v6009, %v5458
        %v6032 = vadd.f32 %v6014, %v5459
        %v6033 = vadd.f32 %v6019, %v5460
        %v6034 = vadd.f32 %v6024, %v5461
        %6035 = vst.msk [vmem:[%s561] sm:$0xff] %vm601, %v6027
        %6036 = vst.msk [vmem:[%s561 + $0x8] sm:$0xff] %vm601, %v6028
        %6037 = vst.msk [vmem:[%s561 + $0x10] sm:$0xff] %vm601, %v6029
        %6038 = vst.msk [vmem:[%s561 + $0x18] sm:$0xff] %vm601, %v6030
        %6039 = vst.msk [vmem:[%s561 + $0x20] sm:$0xff] %vm601, %v6031
        %6040 = vst.msk [vmem:[%s561 + $0x28] sm:$0xff] %vm601, %v6032
        %6041 = vst.msk [vmem:[%s561 + $0x30] sm:$0xff] %vm601, %v6033
        %6042 = vst.msk [vmem:[%s561 + $0x38] sm:$0xff] %vm601, %v6034
        %s6043 = sand.u32 %s344, 1
        %s6044 = scalar_lea.sflag [#allocation4], %s6043
        %s6045 = sand.u32 %s344, 1
        %s6046 = smul.addr %s6045, 64
        %s6047 = scalar_lea.vmem [#allocation13], %s6046
        // Predicated region
        $region101: #{basic_transformer_block.1} parent=75 // pred_check
          %p6048 = pneg %p354
        $region102: #{basic_transformer_block.1} parent=75 // pred_check_branch
          %6050 = sbr.rel (%p6048) target = $region104
        $region103: #{basic_transformer_block.1} parent=75 // pred_region
          %s6052 = ssub.s32 1024, 1024
          %6053 = vsyncadd %s6044, %s6052
          %s6054 = smul.addr %s32, 8
          %s6055 = smul.addr %s6054, 128
          %s6056 = scalar_lea.hbm %s14, %s6055
          %s6057 = sshll.u32 %s6047, 4
          %s6058 = int_to_ptr.vmem [resolvable:$true] %s6057
          %6063 = dma.vmem_to_hbm [thread:$0]  %s6058, 1024, %s6056, %s6044, 128, 128, 8
        $region104: #{basic_transformer_block.1} parent=75 // pred_fallthru
          _
      $region76: #{basic_transformer_block.1} parent=5 // pred_fallthru
        _
      %p6064 = scmp.le.s32.totalorder 2, %s27
      // Predicated region
      $region105: #{basic_transformer_block.1} parent=5 // pred_check
        %p6065 = pneg %p6064
      $region106: #{basic_transformer_block.1} parent=5 // pred_check_branch
        %6067 = sbr.rel (%p6065) target = $region108
      $region107: #{basic_transformer_block.1} parent=5 // pred_region
        %s6068 = ssub.s32 %s27, 2
        // Predicated region
        $region109: #{basic_transformer_block.1} parent=107 // pred_check
          %p6069 = pneg %p360
        $region110: #{basic_transformer_block.1} parent=107 // pred_check_branch
          %6071 = sbr.rel (%p6069) target = $region112
        $region111: #{basic_transformer_block.1} parent=107 // pred_region
          %s6072 = sand.u32 %s345, 1
          %s6073 = scalar_lea.sflag [#allocation4], %s6072
          %s6074 = sand.u32 %s345, 1
          %s6075 = smul.addr %s6074, 64
          %s6076 = scalar_lea.vmem [#allocation13], %s6075
          %6077 = dma.done %s6073, 1024
        $region112: #{basic_transformer_block.1} parent=107 // pred_fallthru
          _
      $region108: #{basic_transformer_block.1} parent=5 // pred_fallthru
        _
    $region6: #{basic_transformer_block.1} parent=1 // loop_footer
      %s31 = sadd.s32 1, %s27
    $region7: #{basic_transformer_block.1} parent=1 // loop_footer_branch
      %26 = sbr.rel target = $region3
    $region8: #{basic_transformer_block.1} parent=1 // loop_exit
      _
    %6078 = vsyncpa [#allocation3], 1
    %s6079 = scalar_lea.sflag [#allocation3], 1
    %6080 = vsyncpa %s6079, 1
    %6081 = vsyncpa [#allocation6], 1
    %6082 = vsyncpa [#allocation9], 1
    %6083 = vsyncpa [#allocation12], 1
    %6084 = vsyncpa [#allocation4], 1
    %s6085 = scalar_lea.sflag [#allocation4], 1
    %6086 = vsyncpa %s6085, 1

</llo_original>
